<compile_context>
chip_gen: v5e
topology: v5e:2x2
jax: 0.10.0
libtpu: 0.0.40
codegen_flags: <defaults>
</compile_context>

<pallas_src>
import jax
import jax.numpy as jnp
from jax.experimental import pallas as pl
from jax.experimental.pallas import tpu as pltpu

VMEM_SPEC = pl.BlockSpec(memory_space=pltpu.MemorySpace.VMEM)


def _round_up(v, m):
    return ((v + m - 1) // m) * m


# ------------------------------ Pallas kernel ------------------------------ #

def _fused_net_kernel(x_ref, ef_ref, src_ref, dstc_ref, dstr_ref, pool_ref,
                      we_a_ref,
                      w1_ref, b1_ref, w2_ref, b2_ref, w3_ref, b3_ref,
                      wh1_ref, wh2_ref, wh3_ref, bh_ref, o_ref):
    """Fused 3-layer GATConv + global mean pool + Linear head (single call)."""
    E_pad = ef_ref.shape[0]
    N_pad = x_ref.shape[0]

    # One-hot gather/scatter selectors built in-register from O(E) int32 indices
    # (no dense (E,N) HBM traffic).  Exact 0/1 values -> bf16 MXU is lossless.
    lane_ids = jax.lax.broadcasted_iota(jnp.int32, (E_pad, N_pad), 1)
    S_bf = (src_ref[...] == lane_ids).astype(jnp.bfloat16)        # (E, N) src gather
    D_bf = (dstc_ref[...] == lane_ids).astype(jnp.bfloat16)       # (E, N) dst gather
    sub_ids = jax.lax.broadcasted_iota(jnp.int32, (N_pad, E_pad), 0)
    DT_bf = (dstr_ref[...] == sub_ids).astype(jnp.bfloat16)       # (N, E) dst scatter

    x = x_ref[...]                                                 # (N, C_in)
    # All three layers' edge-attention logits in one tiny matmul.
    alpha_edge_all = jnp.dot(ef_ref[...], we_a_ref[...],
                             preferred_element_type=jnp.float32)   # (E, 3)

    layer_refs = ((w1_ref, b1_ref, wh1_ref),
                  (w2_ref, b2_ref, wh2_ref),
                  (w3_ref, b3_ref, wh3_ref))
    head_acc = jnp.zeros((N_pad, 1), jnp.float32)

    for layer, (w_ref, b_ref, wh_ref) in enumerate(layer_refs):
        w_aug = w_ref[...]                    # (C_in, C+2) = [w | w@a_src.T | w@a_dst.T]
        C = w_aug.shape[1] - 2

        # One pass gives transformed features + both per-node attention scalars.
        xaug = jnp.dot(x, w_aug, preferred_element_type=jnp.float32)      # (N, C+2)
        alpha_dst_n = xaug[:, C + 1:C + 2]                                 # (N, 1)

        # Gather source side: features AND source attention in one MXU pass.
        gx_aug = jnp.dot(S_bf, xaug[:, :C + 1].astype(jnp.bfloat16),
                         preferred_element_type=jnp.float32)               # (E, C+1)
        gx = gx_aug[:, :C]                                                 # (E, C)
        alpha_src_e = gx_aug[:, C:C + 1]                                   # (E, 1)
        alpha_dst_e = jnp.dot(D_bf, alpha_dst_n.astype(jnp.bfloat16),
                              preferred_element_type=jnp.float32)          # (E, 1)

        alpha = alpha_src_e + alpha_dst_e + alpha_edge_all[:, layer:layer + 1]
        alpha = jnp.where(alpha > 0, alpha, 0.2 * alpha)                   # leaky_relu(0.2)

        # Segment softmax via GLOBAL shift (per-group shift invariance); clamp
        # so a group far below the global max cannot underflow denom to 0.
        m = jnp.max(alpha, axis=0, keepdims=True)                          # (1, 1)
        ex = jnp.exp(jnp.maximum(alpha - m, -60.0))                        # (E, 1)

        # Aggregate messages with denom fused in as an extra RHS column.
        rhs = jnp.concatenate([ex * gx, ex], axis=1).astype(jnp.bfloat16)  # (E, C+1)
        agg_aug = jnp.dot(DT_bf, rhs, preferred_element_type=jnp.float32)  # (N, C+1)
        denom = agg_aug[:, C:C + 1]                                        # (N, 1)
        inv = pl.reciprocal(denom, approx=True)
        inv = jnp.where(denom > 0, inv, 0.0)        # isolated / padded node guard
        x = agg_aug[:, :C] * inv + b_ref[...]                              # (N, C)

        # cat([x1,x2,x3]) @ W_l3 == x1@W1 + x2@W2 + x3@W3   (head folded in)
        head_acc = head_acc + jnp.dot(x, wh_ref[...],
                                      preferred_element_type=jnp.float32)  # (N, 1)

    # Global mean pool: pool rows carry 1/|graph| weights (0 on padded nodes).
    o_ref[...] = (jnp.dot(pool_ref[...], head_acc,
                          preferred_element_type=jnp.float32) + bh_ref[...])


def fused_net_call(x_enc, ef_aug, src_aug, dst_aug, pool, params):
    N_pad, C_in = x_enc.shape
    E_pad, edge_dim = ef_aug.shape
    G = pool.shape[0]

    # Pack per-layer params: fold attention vectors into the weight matmuls.
    w_augs, biases, we_a_cols = [], [], []
    for name in ("conv1", "conv2", "conv3"):
        p = params[name]
        w_augs.append(jnp.concatenate(
            [p["w"], p["w"] @ p["att_src"].T, p["w"] @ p["att_dst"].T], axis=1))
        biases.append(p["bias"].reshape(1, -1))
        we_a_cols.append(p["w_edge"] @ p["att_edge"].T)
    we_a_cat = jnp.concatenate(we_a_cols, axis=1)                  # (edge_dim, 3)

    wl3 = params["l3"]["w"]
    H = wl3.shape[0] // 3
    C = w_augs[0].shape[1] - 2

    inputs = [x_enc, ef_aug,
              src_aug.astype(jnp.int32).reshape(E_pad, 1),
              dst_aug.astype(jnp.int32).reshape(E_pad, 1),
              dst_aug.astype(jnp.int32).reshape(1, E_pad),
              pool, we_a_cat,
              w_augs[0], biases[0], w_augs[1], biases[1], w_augs[2], biases[2],
              wl3[0:H], wl3[H:2 * H], wl3[2 * H:3 * H],
              params["l3"]["b"].reshape(1, 1)]

    # Advisory cost estimate (lets XLA overlap the encoder prologue).
    def _flops_layer(cin):
        return (2 * N_pad * cin * (C + 2)            # x @ w_aug
                + 2 * E_pad * N_pad * (C + 1)        # S gather
                + 2 * E_pad * N_pad                  # D gather
                + 2 * N_pad * E_pad * (C + 1)        # DT scatter (+denom)
                + 2 * N_pad * C)                     # head fold
    flops = (_flops_layer(C_in) + 2 * _flops_layer(C)
             + 2 * E_pad * edge_dim * 3 + 2 * G * N_pad)
    in_bytes = int(sum(int(a.size) * a.dtype.itemsize for a in inputs))
    cost = pl.CostEstimate(flops=int(flops),
                           transcendentals=int(3 * (E_pad + N_pad)),
                           bytes_accessed=in_bytes + G * 4)

    # VMEM footprint: 3 bf16 (E,N) selectors + iota temps + per-layer temps + IO.
    sel_bytes = 3 * E_pad * N_pad * 2 + 2 * E_pad * N_pad * 4
    tmp_bytes = 6 * E_pad * (C + 2) * 4 + 4 * N_pad * (C + 2) * 4
    vmem_limit = int(min(max(2 * (sel_bytes + tmp_bytes + 2 * in_bytes) + (4 << 20),
                             32 << 20), 96 << 20))

    return pl.pallas_call(
        _fused_net_kernel,
        out_shape=jax.ShapeDtypeStruct((G, 1), jnp.float32),
        in_specs=[VMEM_SPEC] * len(inputs),
        out_specs=VMEM_SPEC,
        compiler_params=pltpu.CompilerParams(vmem_limit_bytes=vmem_limit),
        cost_estimate=cost,
    )(*inputs)


# ------------------------------- JAX glue ---------------------------------- #

def net_forward(params, x_raw, src, dst, ef_raw, batch, num_graphs):
    N = x_raw.shape[0]
    E = src.shape[0]

    # Encoders: far below kernel-launch cost -> plain XLA.
    x = x_raw @ params["node_enc"]["w"] + params["node_enc"]["b"]
    ef = ef_raw @ params["edge_enc"]["w"] + params["edge_enc"]["b"]

    # PyG GATConv(add_self_loops=True, fill_value='mean'): self-loop edge_attr
    # is the mean of encoded incoming edge_attr per destination node (0 if none).
    cnt = jax.ops.segment_sum(jnp.ones((E,), jnp.float32), dst, num_segments=N)
    loop_attr = (jax.ops.segment_sum(ef, dst, num_segments=N)
                 / jnp.maximum(cnt, 1.0)[:, None])
    loop_idx = jnp.arange(N, dtype=src.dtype)
    src_aug = jnp.concatenate([src, loop_idx])
    dst_aug = jnp.concatenate([dst, loop_idx])
    ef_aug = jnp.concatenate([ef, loop_attr], axis=0)
    E_aug = E + N

    # Pad nodes AND edges to multiples of 128 (N is the lane dim of the
    # selectors / gather contraction dim); one spare "sink" node absorbs padded
    # edges so they never perturb a real node's softmax.
    N_pad = _round_up(N + 1, 128)
    E_pad = _round_up(E_aug, 128)
    sink = jnp.full((E_pad - E_aug,), N_pad - 1, src_aug.dtype)
    src_p = jnp.concatenate([src_aug, sink])
    dst_p = jnp.concatenate([dst_aug, sink])
    ef_p = jnp.pad(ef_aug, ((0, E_pad - E_aug), (0, 0)))
    x_p = jnp.pad(x, ((0, N_pad - N), (0, 0)))

    # Global mean pool as a (G, N_pad) matmul with 1/count weights
    # (zero weight on padded nodes).
    onehot = jax.nn.one_hot(batch, num_graphs, dtype=jnp.float32).T       # (G, N)
    pool = onehot / jnp.maximum(jnp.sum(onehot, axis=1, keepdims=True), 1.0)
    pool = jnp.pad(pool, ((0, 0), (0, N_pad - N)))

    return fused_net_call(x_p, ef_p, src_p, dst_p, pool, params)          # (G, 1)


def init_params(key, f_node, f_edge, node_dim=16, edge_dim=2, hidden=32):
    ks = iter(jax.random.split(key, 32))

    def lin(ki, din, dout):
        return {"w": 0.1 * jax.random.normal(ki, (din, dout), jnp.float32),
                "b": jnp.zeros((dout,), jnp.float32)}

    def gat(ki, din, dout, edim):
        k1, k2, k3, k4, k5 = jax.random.split(ki, 5)
        return {"w": 0.1 * jax.random.normal(k1, (din, dout), jnp.float32),
                "w_edge": 0.1 * jax.random.normal(k2, (edim, dout), jnp.float32),
                "att_src": 0.1 * jax.random.normal(k3, (1, dout), jnp.float32),
                "att_dst": 0.1 * jax.random.normal(k4, (1, dout), jnp.float32),
                "att_edge": 0.1 * jax.random.normal(k5, (1, dout), jnp.float32),
                "bias": jnp.zeros((dout,), jnp.float32)}

    return {"node_enc": lin(next(ks), f_node, node_dim),
            "edge_enc": lin(next(ks), f_edge, edge_dim),
            "conv1": gat(next(ks), node_dim, hidden, edge_dim),
            "conv2": gat(next(ks), hidden, hidden, edge_dim),
            "conv3": gat(next(ks), hidden, hidden, edge_dim),
            "l3": lin(next(ks), 3 * hidden, 1)}


# Pure-JAX reference (same semantics) used only to sanity-check the kernel.
def reference_forward(params, x_raw, src, dst, ef_raw, batch, num_graphs):
    N = x_raw.shape[0]
    E = src.shape[0]
    x = x_raw @ params["node_enc"]["w"] + params["node_enc"]["b"]
    ef = ef_raw @ params["edge_enc"]["w"] + params["edge_enc"]["b"]
    cnt = jax.ops.segment_sum(jnp.ones((E,), jnp.float32), dst, num_segments=N)
    loop_attr = (jax.ops.segment_sum(ef, dst, num_segments=N)
                 / jnp.maximum(cnt, 1.0)[:, None])
    s = jnp.concatenate([src, jnp.arange(N, dtype=src.dtype)])
    d = jnp.concatenate([dst, jnp.arange(N, dtype=src.dtype)])
    ea = jnp.concatenate([ef, loop_attr], axis=0)

    def gat(xin, p):
        xl = xin @ p["w"]
        el = ea @ p["w_edge"]
        a = (jnp.sum(xl * p["att_src"], -1)[s]
             + jnp.sum(xl * p["att_dst"], -1)[d]
             + jnp.sum(el * p["att_edge"], -1))
        a = jnp.where(a > 0, a, 0.2 * a)
        m = jax.ops.segment_max(a, d, num_segments=N)
        ex = jnp.exp(a - m[d])
        den = jax.ops.segment_sum(ex, d, num_segments=N)
        w_e = ex / den[d]
        return jax.ops.segment_sum(xl[s] * w_e[:, None], d, num_segments=N) + p["bias"]

    x1 = gat(x, params["conv1"])
    x2 = gat(x1, params["conv2"])
    x3 = gat(x2, params["conv3"])
    xc = jnp.concatenate([x1, x2, x3], axis=1)
    csum = jax.ops.segment_sum(xc, batch, num_segments=num_graphs)
    cn = jax.ops.segment_sum(jnp.ones((N,), jnp.float32), batch,
                             num_segments=num_graphs)
    pooled = csum / jnp.maximum(cn, 1.0)[:, None]
    return pooled @ params["l3"]["w"] + params["l3"]["b"]


# --------------------------------- main ------------------------------------ #

if __name__ == "__main__":
    key = jax.random.PRNGKey(0)
    N, E, G = 10, 20, 2            # nodes, edges, graphs in the batch
    F_NODE, F_EDGE = 7, 4          # raw node / edge feature dims (pre-encoder)

    k_x, k_e, k_src, k_off, k_p = jax.random.split(key, 5)
    x_raw = jax.random.normal(k_x, (N, F_NODE), jnp.float32)
    ef_raw = jax.random.normal(k_e, (E, F_EDGE), jnp.float32)
    src = jax.random.randint(k_src, (E,), 0, N, dtype=jnp.int32)
    off = jax.random.randint(k_off, (E,), 1, N, dtype=jnp.int32)
    dst = (src + off) % N          # no self-loops in the raw graph
    batch = jnp.concatenate([jnp.zeros((N // 2,), jnp.int32),
                             jnp.ones((N - N // 2,), jnp.int32)])

    params = init_params(k_p, F_NODE, F_EDGE)
    out = net_forward(params, x_raw, src, dst, ef_raw, batch, G)
    jax.block_until_ready(out)

    assert out.shape == (G, 1) and out.dtype == jnp.float32
    assert bool(jnp.all(jnp.isfinite(out)))
    ref = reference_forward(params, x_raw, src, dst, ef_raw, batch, G)
    assert bool(jnp.allclose(out, ref, rtol=1e-1, atol=2e-2)), (out, ref)
    print("KERNEL_OK")
</pallas_src>

<mosaic_0001>
module attributes {stable_mosaic.version = 11 : i64} {
  func.func @_fused_net_kernel(%arg0: memref<128x16xf32, #tpu.memory_space<vmem>>, %arg1: memref<128x2xf32, #tpu.memory_space<vmem>>, %arg2: memref<128x1xi32, #tpu.memory_space<vmem>>, %arg3: memref<128x1xi32, #tpu.memory_space<vmem>>, %arg4: memref<1x128xi32, #tpu.memory_space<vmem>>, %arg5: memref<2x128xf32, #tpu.memory_space<vmem>>, %arg6: memref<2x3xf32, #tpu.memory_space<vmem>>, %arg7: memref<16x34xf32, #tpu.memory_space<vmem>>, %arg8: memref<1x32xf32, #tpu.memory_space<vmem>>, %arg9: memref<32x34xf32, #tpu.memory_space<vmem>>, %arg10: memref<1x32xf32, #tpu.memory_space<vmem>>, %arg11: memref<32x34xf32, #tpu.memory_space<vmem>>, %arg12: memref<1x32xf32, #tpu.memory_space<vmem>>, %arg13: memref<32x1xf32, #tpu.memory_space<vmem>>, %arg14: memref<32x1xf32, #tpu.memory_space<vmem>>, %arg15: memref<32x1xf32, #tpu.memory_space<vmem>>, %arg16: memref<1x1xf32, #tpu.memory_space<vmem>>, %arg17: memref<2x1xf32, #tpu.memory_space<vmem>>) attributes {dimension_semantics = [], scalar_prefetch = 0 : i64, scratch_operands = 0 : i64, tpu.core_type = #tpu.core_type<tc>} {
    %0 = tpu.iota {dimensions = array<i32: 1>} : vector<128x128xi32>
    %c0 = arith.constant 0 : index
    %c0_0 = arith.constant 0 : index
    %1 = vector.load %arg2[%c0, %c0_0] : memref<128x1xi32, #tpu.memory_space<vmem>>, vector<128x1xi32>
    %2 = vector.broadcast %1 : vector<128x1xi32> to vector<128x128xi32>
    %3 = arith.cmpi eq, %2, %0 : vector<128x128xi32>
    %4 = arith.extui %3 : vector<128x128xi1> to vector<128x128xi32>
    %5 = arith.sitofp %4 : vector<128x128xi32> to vector<128x128xf32>
    %6 = arith.truncf %5 : vector<128x128xf32> to vector<128x128xbf16>
    %c0_1 = arith.constant 0 : index
    %c0_2 = arith.constant 0 : index
    %7 = vector.load %arg3[%c0_1, %c0_2] : memref<128x1xi32, #tpu.memory_space<vmem>>, vector<128x1xi32>
    %8 = vector.broadcast %7 : vector<128x1xi32> to vector<128x128xi32>
    %9 = arith.cmpi eq, %8, %0 : vector<128x128xi32>
    %10 = arith.extui %9 : vector<128x128xi1> to vector<128x128xi32>
    %11 = arith.sitofp %10 : vector<128x128xi32> to vector<128x128xf32>
    %12 = arith.truncf %11 : vector<128x128xf32> to vector<128x128xbf16>
    %13 = tpu.iota {dimensions = array<i32: 0>} : vector<128x128xi32>
    %c0_3 = arith.constant 0 : index
    %c0_4 = arith.constant 0 : index
    %14 = vector.load %arg4[%c0_3, %c0_4] : memref<1x128xi32, #tpu.memory_space<vmem>>, vector<1x128xi32>
    %15 = vector.broadcast %14 : vector<1x128xi32> to vector<128x128xi32>
    %16 = arith.cmpi eq, %15, %13 : vector<128x128xi32>
    %17 = arith.extui %16 : vector<128x128xi1> to vector<128x128xi32>
    %18 = arith.sitofp %17 : vector<128x128xi32> to vector<128x128xf32>
    %19 = arith.truncf %18 : vector<128x128xf32> to vector<128x128xbf16>
    %c0_5 = arith.constant 0 : index
    %c0_6 = arith.constant 0 : index
    %20 = vector.load %arg0[%c0_5, %c0_6] : memref<128x16xf32, #tpu.memory_space<vmem>>, vector<128x16xf32>
    %c0_7 = arith.constant 0 : index
    %c0_8 = arith.constant 0 : index
    %21 = vector.load %arg1[%c0_7, %c0_8] : memref<128x2xf32, #tpu.memory_space<vmem>>, vector<128x2xf32>
    %c0_9 = arith.constant 0 : index
    %c0_10 = arith.constant 0 : index
    %22 = vector.load %arg6[%c0_9, %c0_10] : memref<2x3xf32, #tpu.memory_space<vmem>>, vector<2x3xf32>
    %cst = arith.constant dense<0.000000e+00> : vector<128x3xf32>
    %23 = tpu.matmul %21, %22, %cst {dimension_numbers = #tpu.dot_dimension_numbers<[1], [0], [0], [1], [0, 0, 1, 1], [], []>} : vector<128x2xf32>, vector<2x3xf32>, vector<128x3xf32> -> vector<128x3xf32>
    %cst_11 = arith.constant 0.000000e+00 : f32
    %24 = vector.broadcast %cst_11 : f32 to vector<128x1xf32>
    %c0_12 = arith.constant 0 : index
    %c0_13 = arith.constant 0 : index
    %25 = vector.load %arg7[%c0_12, %c0_13] : memref<16x34xf32, #tpu.memory_space<vmem>>, vector<16x34xf32>
    %cst_14 = arith.constant dense<0.000000e+00> : vector<128x34xf32>
    %26 = tpu.matmul %20, %25, %cst_14 {dimension_numbers = #tpu.dot_dimension_numbers<[1], [0], [0], [1], [0, 0, 1, 1], [], []>} : vector<128x16xf32>, vector<16x34xf32>, vector<128x34xf32> -> vector<128x34xf32>
    %27 = vector.extract_strided_slice %26 {offsets = [0, 33], sizes = [128, 1], strides = [1, 1]} : vector<128x34xf32> to vector<128x1xf32>
    %28 = vector.extract_strided_slice %26 {offsets = [0, 0], sizes = [128, 33], strides = [1, 1]} : vector<128x34xf32> to vector<128x33xf32>
    %29 = arith.truncf %28 : vector<128x33xf32> to vector<128x33xbf16>
    %cst_15 = arith.constant dense<0.000000e+00> : vector<128x33xf32>
    %30 = tpu.matmul %6, %29, %cst_15 {dimension_numbers = #tpu.dot_dimension_numbers<[1], [0], [0], [1], [0, 0, 1, 1], [], []>} : vector<128x128xbf16>, vector<128x33xbf16>, vector<128x33xf32> -> vector<128x33xf32>
    %31 = vector.extract_strided_slice %30 {offsets = [0, 0], sizes = [128, 32], strides = [1, 1]} : vector<128x33xf32> to vector<128x32xf32>
    %32 = vector.extract_strided_slice %30 {offsets = [0, 32], sizes = [128, 1], strides = [1, 1]} : vector<128x33xf32> to vector<128x1xf32>
    %33 = arith.truncf %27 : vector<128x1xf32> to vector<128x1xbf16>
    %cst_16 = arith.constant dense<0.000000e+00> : vector<128x1xf32>
    %34 = tpu.matmul %12, %33, %cst_16 {dimension_numbers = #tpu.dot_dimension_numbers<[1], [0], [0], [1], [0, 0, 1, 1], [], []>} : vector<128x128xbf16>, vector<128x1xbf16>, vector<128x1xf32> -> vector<128x1xf32>
    %35 = arith.addf %32, %34 : vector<128x1xf32>
    %36 = vector.extract_strided_slice %23 {offsets = [0, 0], sizes = [128, 1], strides = [1, 1]} : vector<128x3xf32> to vector<128x1xf32>
    %37 = arith.addf %35, %36 : vector<128x1xf32>
    %cst_17 = arith.constant 0.000000e+00 : f32
    %38 = vector.broadcast %cst_17 : f32 to vector<128x1xf32>
    %39 = arith.cmpf ogt, %37, %38 : vector<128x1xf32>
    %cst_18 = arith.constant 2.000000e-01 : f32
    %40 = vector.broadcast %cst_18 : f32 to vector<128x1xf32>
    %41 = arith.mulf %40, %37 : vector<128x1xf32>
    %42 = arith.select %39, %37, %41 : vector<128x1xi1>, vector<128x1xf32>
    %cst_19 = arith.constant dense<0xFF800000> : vector<1xf32>
    %43 = vector.multi_reduction <maximumf>, %42, %cst_19 [0] : vector<128x1xf32> to vector<1xf32>
    %44 = vector.shape_cast %43 : vector<1xf32> to vector<1x1xf32>
    %45 = vector.broadcast %44 : vector<1x1xf32> to vector<128x1xf32>
    %46 = arith.subf %42, %45 : vector<128x1xf32>
    %cst_20 = arith.constant -6.000000e+01 : f32
    %47 = vector.broadcast %cst_20 : f32 to vector<128x1xf32>
    %48 = arith.maximumf %46, %47 : vector<128x1xf32>
    %49 = math.exp %48 : vector<128x1xf32>
    %50 = vector.broadcast %49 : vector<128x1xf32> to vector<128x32xf32>
    %51 = arith.mulf %50, %31 : vector<128x32xf32>
    %52 = tpu.concatenate %51, %49 in 1 : vector<128x32xf32>, vector<128x1xf32> -> vector<128x33xf32>
    %53 = arith.truncf %52 : vector<128x33xf32> to vector<128x33xbf16>
    %cst_21 = arith.constant dense<0.000000e+00> : vector<128x33xf32>
    %54 = tpu.matmul %19, %53, %cst_21 {dimension_numbers = #tpu.dot_dimension_numbers<[1], [0], [0], [1], [0, 0, 1, 1], [], []>} : vector<128x128xbf16>, vector<128x33xbf16>, vector<128x33xf32> -> vector<128x33xf32>
    %55 = vector.extract_strided_slice %54 {offsets = [0, 32], sizes = [128, 1], strides = [1, 1]} : vector<128x33xf32> to vector<128x1xf32>
    %56 = tpu.reciprocal %55 {approx = true} : vector<128x1xf32> -> vector<128x1xf32>
    %cst_22 = arith.constant 0.000000e+00 : f32
    %57 = vector.broadcast %cst_22 : f32 to vector<128x1xf32>
    %58 = arith.cmpf ogt, %55, %57 : vector<128x1xf32>
    %cst_23 = arith.constant 0.000000e+00 : f32
    %59 = vector.broadcast %cst_23 : f32 to vector<128x1xf32>
    %60 = arith.select %58, %56, %59 : vector<128x1xi1>, vector<128x1xf32>
    %61 = vector.extract_strided_slice %54 {offsets = [0, 0], sizes = [128, 32], strides = [1, 1]} : vector<128x33xf32> to vector<128x32xf32>
    %62 = vector.broadcast %60 : vector<128x1xf32> to vector<128x32xf32>
    %63 = arith.mulf %61, %62 : vector<128x32xf32>
    %c0_24 = arith.constant 0 : index
    %c0_25 = arith.constant 0 : index
    %64 = vector.load %arg8[%c0_24, %c0_25] : memref<1x32xf32, #tpu.memory_space<vmem>>, vector<1x32xf32>
    %65 = vector.broadcast %64 : vector<1x32xf32> to vector<128x32xf32>
    %66 = arith.addf %63, %65 : vector<128x32xf32>
    %c0_26 = arith.constant 0 : index
    %c0_27 = arith.constant 0 : index
    %67 = vector.load %arg13[%c0_26, %c0_27] : memref<32x1xf32, #tpu.memory_space<vmem>>, vector<32x1xf32>
    %cst_28 = arith.constant dense<0.000000e+00> : vector<128x1xf32>
    %68 = tpu.matmul %66, %67, %cst_28 {dimension_numbers = #tpu.dot_dimension_numbers<[1], [0], [0], [1], [0, 0, 1, 1], [], []>} : vector<128x32xf32>, vector<32x1xf32>, vector<128x1xf32> -> vector<128x1xf32>
    %69 = arith.addf %24, %68 : vector<128x1xf32>
    %c0_29 = arith.constant 0 : index
    %c0_30 = arith.constant 0 : index
    %70 = vector.load %arg9[%c0_29, %c0_30] : memref<32x34xf32, #tpu.memory_space<vmem>>, vector<32x34xf32>
    %cst_31 = arith.constant dense<0.000000e+00> : vector<128x34xf32>
    %71 = tpu.matmul %66, %70, %cst_31 {dimension_numbers = #tpu.dot_dimension_numbers<[1], [0], [0], [1], [0, 0, 1, 1], [], []>} : vector<128x32xf32>, vector<32x34xf32>, vector<128x34xf32> -> vector<128x34xf32>
    %72 = vector.extract_strided_slice %71 {offsets = [0, 33], sizes = [128, 1], strides = [1, 1]} : vector<128x34xf32> to vector<128x1xf32>
    %73 = vector.extract_strided_slice %71 {offsets = [0, 0], sizes = [128, 33], strides = [1, 1]} : vector<128x34xf32> to vector<128x33xf32>
    %74 = arith.truncf %73 : vector<128x33xf32> to vector<128x33xbf16>
    %cst_32 = arith.constant dense<0.000000e+00> : vector<128x33xf32>
    %75 = tpu.matmul %6, %74, %cst_32 {dimension_numbers = #tpu.dot_dimension_numbers<[1], [0], [0], [1], [0, 0, 1, 1], [], []>} : vector<128x128xbf16>, vector<128x33xbf16>, vector<128x33xf32> -> vector<128x33xf32>
    %76 = vector.extract_strided_slice %75 {offsets = [0, 0], sizes = [128, 32], strides = [1, 1]} : vector<128x33xf32> to vector<128x32xf32>
    %77 = vector.extract_strided_slice %75 {offsets = [0, 32], sizes = [128, 1], strides = [1, 1]} : vector<128x33xf32> to vector<128x1xf32>
    %78 = arith.truncf %72 : vector<128x1xf32> to vector<128x1xbf16>
    %cst_33 = arith.constant dense<0.000000e+00> : vector<128x1xf32>
    %79 = tpu.matmul %12, %78, %cst_33 {dimension_numbers = #tpu.dot_dimension_numbers<[1], [0], [0], [1], [0, 0, 1, 1], [], []>} : vector<128x128xbf16>, vector<128x1xbf16>, vector<128x1xf32> -> vector<128x1xf32>
    %80 = arith.addf %77, %79 : vector<128x1xf32>
    %81 = vector.extract_strided_slice %23 {offsets = [0, 1], sizes = [128, 1], strides = [1, 1]} : vector<128x3xf32> to vector<128x1xf32>
    %82 = arith.addf %80, %81 : vector<128x1xf32>
    %cst_34 = arith.constant 0.000000e+00 : f32
    %83 = vector.broadcast %cst_34 : f32 to vector<128x1xf32>
    %84 = arith.cmpf ogt, %82, %83 : vector<128x1xf32>
    %cst_35 = arith.constant 2.000000e-01 : f32
    %85 = vector.broadcast %cst_35 : f32 to vector<128x1xf32>
    %86 = arith.mulf %85, %82 : vector<128x1xf32>
    %87 = arith.select %84, %82, %86 : vector<128x1xi1>, vector<128x1xf32>
    %cst_36 = arith.constant dense<0xFF800000> : vector<1xf32>
    %88 = vector.multi_reduction <maximumf>, %87, %cst_36 [0] : vector<128x1xf32> to vector<1xf32>
    %89 = vector.shape_cast %88 : vector<1xf32> to vector<1x1xf32>
    %90 = vector.broadcast %89 : vector<1x1xf32> to vector<128x1xf32>
    %91 = arith.subf %87, %90 : vector<128x1xf32>
    %cst_37 = arith.constant -6.000000e+01 : f32
    %92 = vector.broadcast %cst_37 : f32 to vector<128x1xf32>
    %93 = arith.maximumf %91, %92 : vector<128x1xf32>
    %94 = math.exp %93 : vector<128x1xf32>
    %95 = vector.broadcast %94 : vector<128x1xf32> to vector<128x32xf32>
    %96 = arith.mulf %95, %76 : vector<128x32xf32>
    %97 = tpu.concatenate %96, %94 in 1 : vector<128x32xf32>, vector<128x1xf32> -> vector<128x33xf32>
    %98 = arith.truncf %97 : vector<128x33xf32> to vector<128x33xbf16>
    %cst_38 = arith.constant dense<0.000000e+00> : vector<128x33xf32>
    %99 = tpu.matmul %19, %98, %cst_38 {dimension_numbers = #tpu.dot_dimension_numbers<[1], [0], [0], [1], [0, 0, 1, 1], [], []>} : vector<128x128xbf16>, vector<128x33xbf16>, vector<128x33xf32> -> vector<128x33xf32>
    %100 = vector.extract_strided_slice %99 {offsets = [0, 32], sizes = [128, 1], strides = [1, 1]} : vector<128x33xf32> to vector<128x1xf32>
    %101 = tpu.reciprocal %100 {approx = true} : vector<128x1xf32> -> vector<128x1xf32>
    %cst_39 = arith.constant 0.000000e+00 : f32
    %102 = vector.broadcast %cst_39 : f32 to vector<128x1xf32>
    %103 = arith.cmpf ogt, %100, %102 : vector<128x1xf32>
    %cst_40 = arith.constant 0.000000e+00 : f32
    %104 = vector.broadcast %cst_40 : f32 to vector<128x1xf32>
    %105 = arith.select %103, %101, %104 : vector<128x1xi1>, vector<128x1xf32>
    %106 = vector.extract_strided_slice %99 {offsets = [0, 0], sizes = [128, 32], strides = [1, 1]} : vector<128x33xf32> to vector<128x32xf32>
    %107 = vector.broadcast %105 : vector<128x1xf32> to vector<128x32xf32>
    %108 = arith.mulf %106, %107 : vector<128x32xf32>
    %c0_41 = arith.constant 0 : index
    %c0_42 = arith.constant 0 : index
    %109 = vector.load %arg10[%c0_41, %c0_42] : memref<1x32xf32, #tpu.memory_space<vmem>>, vector<1x32xf32>
    %110 = vector.broadcast %109 : vector<1x32xf32> to vector<128x32xf32>
    %111 = arith.addf %108, %110 : vector<128x32xf32>
    %c0_43 = arith.constant 0 : index
    %c0_44 = arith.constant 0 : index
    %112 = vector.load %arg14[%c0_43, %c0_44] : memref<32x1xf32, #tpu.memory_space<vmem>>, vector<32x1xf32>
    %cst_45 = arith.constant dense<0.000000e+00> : vector<128x1xf32>
    %113 = tpu.matmul %111, %112, %cst_45 {dimension_numbers = #tpu.dot_dimension_numbers<[1], [0], [0], [1], [0, 0, 1, 1], [], []>} : vector<128x32xf32>, vector<32x1xf32>, vector<128x1xf32> -> vector<128x1xf32>
    %114 = arith.addf %69, %113 : vector<128x1xf32>
    %c0_46 = arith.constant 0 : index
    %c0_47 = arith.constant 0 : index
    %115 = vector.load %arg11[%c0_46, %c0_47] : memref<32x34xf32, #tpu.memory_space<vmem>>, vector<32x34xf32>
    %cst_48 = arith.constant dense<0.000000e+00> : vector<128x34xf32>
    %116 = tpu.matmul %111, %115, %cst_48 {dimension_numbers = #tpu.dot_dimension_numbers<[1], [0], [0], [1], [0, 0, 1, 1], [], []>} : vector<128x32xf32>, vector<32x34xf32>, vector<128x34xf32> -> vector<128x34xf32>
    %117 = vector.extract_strided_slice %116 {offsets = [0, 33], sizes = [128, 1], strides = [1, 1]} : vector<128x34xf32> to vector<128x1xf32>
    %118 = vector.extract_strided_slice %116 {offsets = [0, 0], sizes = [128, 33], strides = [1, 1]} : vector<128x34xf32> to vector<128x33xf32>
    %119 = arith.truncf %118 : vector<128x33xf32> to vector<128x33xbf16>
    %cst_49 = arith.constant dense<0.000000e+00> : vector<128x33xf32>
    %120 = tpu.matmul %6, %119, %cst_49 {dimension_numbers = #tpu.dot_dimension_numbers<[1], [0], [0], [1], [0, 0, 1, 1], [], []>} : vector<128x128xbf16>, vector<128x33xbf16>, vector<128x33xf32> -> vector<128x33xf32>
    %121 = vector.extract_strided_slice %120 {offsets = [0, 0], sizes = [128, 32], strides = [1, 1]} : vector<128x33xf32> to vector<128x32xf32>
    %122 = vector.extract_strided_slice %120 {offsets = [0, 32], sizes = [128, 1], strides = [1, 1]} : vector<128x33xf32> to vector<128x1xf32>
    %123 = arith.truncf %117 : vector<128x1xf32> to vector<128x1xbf16>
    %cst_50 = arith.constant dense<0.000000e+00> : vector<128x1xf32>
    %124 = tpu.matmul %12, %123, %cst_50 {dimension_numbers = #tpu.dot_dimension_numbers<[1], [0], [0], [1], [0, 0, 1, 1], [], []>} : vector<128x128xbf16>, vector<128x1xbf16>, vector<128x1xf32> -> vector<128x1xf32>
    %125 = arith.addf %122, %124 : vector<128x1xf32>
    %126 = vector.extract_strided_slice %23 {offsets = [0, 2], sizes = [128, 1], strides = [1, 1]} : vector<128x3xf32> to vector<128x1xf32>
    %127 = arith.addf %125, %126 : vector<128x1xf32>
    %cst_51 = arith.constant 0.000000e+00 : f32
    %128 = vector.broadcast %cst_51 : f32 to vector<128x1xf32>
    %129 = arith.cmpf ogt, %127, %128 : vector<128x1xf32>
    %cst_52 = arith.constant 2.000000e-01 : f32
    %130 = vector.broadcast %cst_52 : f32 to vector<128x1xf32>
    %131 = arith.mulf %130, %127 : vector<128x1xf32>
    %132 = arith.select %129, %127, %131 : vector<128x1xi1>, vector<128x1xf32>
    %cst_53 = arith.constant dense<0xFF800000> : vector<1xf32>
    %133 = vector.multi_reduction <maximumf>, %132, %cst_53 [0] : vector<128x1xf32> to vector<1xf32>
    %134 = vector.shape_cast %133 : vector<1xf32> to vector<1x1xf32>
    %135 = vector.broadcast %134 : vector<1x1xf32> to vector<128x1xf32>
    %136 = arith.subf %132, %135 : vector<128x1xf32>
    %cst_54 = arith.constant -6.000000e+01 : f32
    %137 = vector.broadcast %cst_54 : f32 to vector<128x1xf32>
    %138 = arith.maximumf %136, %137 : vector<128x1xf32>
    %139 = math.exp %138 : vector<128x1xf32>
    %140 = vector.broadcast %139 : vector<128x1xf32> to vector<128x32xf32>
    %141 = arith.mulf %140, %121 : vector<128x32xf32>
    %142 = tpu.concatenate %141, %139 in 1 : vector<128x32xf32>, vector<128x1xf32> -> vector<128x33xf32>
    %143 = arith.truncf %142 : vector<128x33xf32> to vector<128x33xbf16>
    %cst_55 = arith.constant dense<0.000000e+00> : vector<128x33xf32>
    %144 = tpu.matmul %19, %143, %cst_55 {dimension_numbers = #tpu.dot_dimension_numbers<[1], [0], [0], [1], [0, 0, 1, 1], [], []>} : vector<128x128xbf16>, vector<128x33xbf16>, vector<128x33xf32> -> vector<128x33xf32>
    %145 = vector.extract_strided_slice %144 {offsets = [0, 32], sizes = [128, 1], strides = [1, 1]} : vector<128x33xf32> to vector<128x1xf32>
    %146 = tpu.reciprocal %145 {approx = true} : vector<128x1xf32> -> vector<128x1xf32>
    %cst_56 = arith.constant 0.000000e+00 : f32
    %147 = vector.broadcast %cst_56 : f32 to vector<128x1xf32>
    %148 = arith.cmpf ogt, %145, %147 : vector<128x1xf32>
    %cst_57 = arith.constant 0.000000e+00 : f32
    %149 = vector.broadcast %cst_57 : f32 to vector<128x1xf32>
    %150 = arith.select %148, %146, %149 : vector<128x1xi1>, vector<128x1xf32>
    %151 = vector.extract_strided_slice %144 {offsets = [0, 0], sizes = [128, 32], strides = [1, 1]} : vector<128x33xf32> to vector<128x32xf32>
    %152 = vector.broadcast %150 : vector<128x1xf32> to vector<128x32xf32>
    %153 = arith.mulf %151, %152 : vector<128x32xf32>
    %c0_58 = arith.constant 0 : index
    %c0_59 = arith.constant 0 : index
    %154 = vector.load %arg12[%c0_58, %c0_59] : memref<1x32xf32, #tpu.memory_space<vmem>>, vector<1x32xf32>
    %155 = vector.broadcast %154 : vector<1x32xf32> to vector<128x32xf32>
    %156 = arith.addf %153, %155 : vector<128x32xf32>
    %c0_60 = arith.constant 0 : index
    %c0_61 = arith.constant 0 : index
    %157 = vector.load %arg15[%c0_60, %c0_61] : memref<32x1xf32, #tpu.memory_space<vmem>>, vector<32x1xf32>
    %cst_62 = arith.constant dense<0.000000e+00> : vector<128x1xf32>
    %158 = tpu.matmul %156, %157, %cst_62 {dimension_numbers = #tpu.dot_dimension_numbers<[1], [0], [0], [1], [0, 0, 1, 1], [], []>} : vector<128x32xf32>, vector<32x1xf32>, vector<128x1xf32> -> vector<128x1xf32>
    %159 = arith.addf %114, %158 : vector<128x1xf32>
    %c0_63 = arith.constant 0 : index
    %c0_64 = arith.constant 0 : index
    %160 = vector.load %arg5[%c0_63, %c0_64] : memref<2x128xf32, #tpu.memory_space<vmem>>, vector<2x128xf32>
    %cst_65 = arith.constant dense<0.000000e+00> : vector<2x1xf32>
    %161 = tpu.matmul %160, %159, %cst_65 {dimension_numbers = #tpu.dot_dimension_numbers<[1], [0], [0], [1], [0, 0, 1, 1], [], []>} : vector<2x128xf32>, vector<128x1xf32>, vector<2x1xf32> -> vector<2x1xf32>
    %c0_66 = arith.constant 0 : index
    %c0_67 = arith.constant 0 : index
    %162 = vector.load %arg16[%c0_66, %c0_67] : memref<1x1xf32, #tpu.memory_space<vmem>>, vector<1x1xf32>
    %163 = vector.broadcast %162 : vector<1x1xf32> to vector<2x1xf32>
    %164 = arith.addf %161, %163 : vector<2x1xf32>
    %c0_68 = arith.constant 0 : index
    %c0_69 = arith.constant 0 : index
    %165 = vector.load %arg17[%c0_68, %c0_69] : memref<2x1xf32, #tpu.memory_space<vmem>>, vector<2x1xf32>
    tpu.vector_store %arg17[%c0_68, %c0_69], %164 {strides = array<i32>} : memref<2x1xf32, #tpu.memory_space<vmem>>, vector<2x1xf32>,
    return
  }
}

</mosaic_0001>

<llo_original>
// kernel: tpu_custom_call.1
$region0: #{tpu_custom_call.1}
  #allocation0 [shape = 'u32[]', space=smem, size = 0x4, offset = 0x4, fixed_abs, tag = 'smem constant byte address 0x4 - core index']
  #allocation1 [shape = 'u32[72,128]{1,0:T(1,128)}', space=vmem, size = 0x9000, scoped, tag = 'internal scratch']
  #allocation2 [shape = 'f32[1,1]{1,0:T(1,128)S(1)}', space=vmem, size = 0x200, scoped, tag = 'scoped memory for tpu_custom_call.1']
  %s0 = inlined_call_operand.vmem [shape: f32[128,16], index: 0, kind: input, shape index: {}]
  %s1 = inlined_call_operand.vmem [shape: f32[128,2], index: 1, kind: input, shape index: {}]
  %s2 = inlined_call_operand.vmem [shape: s32[128,1], index: 2, kind: input, shape index: {}]
  %s3 = inlined_call_operand.vmem [shape: s32[128,1], index: 3, kind: input, shape index: {}]
  %s4 = inlined_call_operand.vmem [shape: s32[1,128], index: 4, kind: input, shape index: {}]
  %s5 = inlined_call_operand.vmem [shape: f32[2,128], index: 5, kind: input, shape index: {}]
  %s6 = inlined_call_operand.vmem [shape: f32[2,3], index: 6, kind: input, shape index: {}]
  %s7 = inlined_call_operand.vmem [shape: f32[16,34], index: 7, kind: input, shape index: {}]
  %s8 = inlined_call_operand.vmem [shape: f32[1,32], index: 8, kind: input, shape index: {}]
  %s9 = inlined_call_operand.vmem [shape: f32[32,34], index: 9, kind: input, shape index: {}]
  %s10 = inlined_call_operand.vmem [shape: f32[1,32], index: 10, kind: input, shape index: {}]
  %s11 = inlined_call_operand.vmem [shape: f32[32,34], index: 11, kind: input, shape index: {}]
  %s12 = inlined_call_operand.vmem [shape: f32[1,32], index: 12, kind: input, shape index: {}]
  %s13 = inlined_call_operand.vmem [shape: f32[32,1], index: 13, kind: input, shape index: {}]
  %s14 = inlined_call_operand.vmem [shape: f32[32,1], index: 14, kind: input, shape index: {}]
  %s15 = inlined_call_operand.vmem [shape: f32[32,1], index: 15, kind: input, shape index: {}]
  %s16 = inlined_call_operand.<no memory space> [shape: f32[1,1], index: 16, kind: input, shape index: {}]
  %s17 = inlined_call_operand.vmem [shape: f32[2,1], index: 17, kind: output, shape index: {}]
  %s18 = sld [smem:[#allocation0]]
  $region78: #{tpu_custom_call.1} parent=0
    _
  %s20 = ssub.s32 1, %s18
  %s21 = scalar_select 0, %s20, %s18
  %v22 = vstv %s16
  %23 = vst [vmem:[#allocation2] sm:$0x1] %v22
  // Predicated region
  $region2: #{tpu_custom_call.1} parent=0 // pred_check
    _
  $region3: #{tpu_custom_call.1} parent=0 // pred_check_branch
    %25 = sbr.rel (0) target = $region5
  $region4: #{tpu_custom_call.1} parent=0 // pred_region
    _
  $region5: #{tpu_custom_call.1} parent=0 // pred_fallthru
    _
  // Predicated region
  $region6: #{tpu_custom_call.1} parent=0 // pred_check
    _
  $region7: #{tpu_custom_call.1} parent=0 // pred_check_branch
    %27 = sbr.rel (0) target = $region9
  $region8: #{tpu_custom_call.1} parent=0 // pred_region
    _
  $region9: #{tpu_custom_call.1} parent=0 // pred_fallthru
    _
  // Predicated region
  $region10: #{tpu_custom_call.1} parent=0 // pred_check
    _
  $region11: #{tpu_custom_call.1} parent=0 // pred_check_branch
    %29 = sbr.rel (0) target = $region13
  $region12: #{tpu_custom_call.1} parent=0 // pred_region
    _
  $region13: #{tpu_custom_call.1} parent=0 // pred_fallthru
    _
  // Predicated region
  $region14: #{tpu_custom_call.1} parent=0 // pred_check
    _
  $region15: #{tpu_custom_call.1} parent=0 // pred_check_branch
    %31 = sbr.rel (0) target = $region17
  $region16: #{tpu_custom_call.1} parent=0 // pred_region
    _
  $region17: #{tpu_custom_call.1} parent=0 // pred_fallthru
    _
  // Predicated region
  $region18: #{tpu_custom_call.1} parent=0 // pred_check
    _
  $region19: #{tpu_custom_call.1} parent=0 // pred_check_branch
    %33 = sbr.rel (0) target = $region21
  $region20: #{tpu_custom_call.1} parent=0 // pred_region
    _
  $region21: #{tpu_custom_call.1} parent=0 // pred_fallthru
    _
  // Predicated region
  $region22: #{tpu_custom_call.1} parent=0 // pred_check
    _
  $region23: #{tpu_custom_call.1} parent=0 // pred_check_branch
    %35 = sbr.rel (0) target = $region25
  $region24: #{tpu_custom_call.1} parent=0 // pred_region
    _
  $region25: #{tpu_custom_call.1} parent=0 // pred_fallthru
    _
  // Predicated region
  $region26: #{tpu_custom_call.1} parent=0 // pred_check
    _
  $region27: #{tpu_custom_call.1} parent=0 // pred_check_branch
    %37 = sbr.rel (0) target = $region29
  $region28: #{tpu_custom_call.1} parent=0 // pred_region
    _
  $region29: #{tpu_custom_call.1} parent=0 // pred_fallthru
    _
  // Predicated region
  $region30: #{tpu_custom_call.1} parent=0 // pred_check
    _
  $region31: #{tpu_custom_call.1} parent=0 // pred_check_branch
    %39 = sbr.rel (0) target = $region33
  $region32: #{tpu_custom_call.1} parent=0 // pred_region
    _
  $region33: #{tpu_custom_call.1} parent=0 // pred_fallthru
    _
  // Predicated region
  $region34: #{tpu_custom_call.1} parent=0 // pred_check
    _
  $region35: #{tpu_custom_call.1} parent=0 // pred_check_branch
    %41 = sbr.rel (0) target = $region37
  $region36: #{tpu_custom_call.1} parent=0 // pred_region
    _
  $region37: #{tpu_custom_call.1} parent=0 // pred_fallthru
    _
  // Predicated region
  $region38: #{tpu_custom_call.1} parent=0 // pred_check
    _
  $region39: #{tpu_custom_call.1} parent=0 // pred_check_branch
    %43 = sbr.rel (0) target = $region41
  $region40: #{tpu_custom_call.1} parent=0 // pred_region
    _
  $region41: #{tpu_custom_call.1} parent=0 // pred_fallthru
    _
  // Predicated region
  $region42: #{tpu_custom_call.1} parent=0 // pred_check
    _
  $region43: #{tpu_custom_call.1} parent=0 // pred_check_branch
    %45 = sbr.rel (0) target = $region45
  $region44: #{tpu_custom_call.1} parent=0 // pred_region
    _
  $region45: #{tpu_custom_call.1} parent=0 // pred_fallthru
    _
  // Predicated region
  $region46: #{tpu_custom_call.1} parent=0 // pred_check
    _
  $region47: #{tpu_custom_call.1} parent=0 // pred_check_branch
    %47 = sbr.rel (0) target = $region49
  $region48: #{tpu_custom_call.1} parent=0 // pred_region
    _
  $region49: #{tpu_custom_call.1} parent=0 // pred_fallthru
    _
  // Predicated region
  $region50: #{tpu_custom_call.1} parent=0 // pred_check
    _
  $region51: #{tpu_custom_call.1} parent=0 // pred_check_branch
    %49 = sbr.rel (0) target = $region53
  $region52: #{tpu_custom_call.1} parent=0 // pred_region
    _
  $region53: #{tpu_custom_call.1} parent=0 // pred_fallthru
    _
  // Predicated region
  $region54: #{tpu_custom_call.1} parent=0 // pred_check
    _
  $region55: #{tpu_custom_call.1} parent=0 // pred_check_branch
    %51 = sbr.rel (0) target = $region57
  $region56: #{tpu_custom_call.1} parent=0 // pred_region
    _
  $region57: #{tpu_custom_call.1} parent=0 // pred_fallthru
    _
  // Predicated region
  $region58: #{tpu_custom_call.1} parent=0 // pred_check
    _
  $region59: #{tpu_custom_call.1} parent=0 // pred_check_branch
    %53 = sbr.rel (0) target = $region61
  $region60: #{tpu_custom_call.1} parent=0 // pred_region
    _
  $region61: #{tpu_custom_call.1} parent=0 // pred_fallthru
    _
  // Predicated region
  $region62: #{tpu_custom_call.1} parent=0 // pred_check
    _
  $region63: #{tpu_custom_call.1} parent=0 // pred_check_branch
    %55 = sbr.rel (0) target = $region65
  $region64: #{tpu_custom_call.1} parent=0 // pred_region
    _
  $region65: #{tpu_custom_call.1} parent=0 // pred_fallthru
    _
  // Predicated region
  $region66: #{tpu_custom_call.1} parent=0 // pred_check
    _
  $region67: #{tpu_custom_call.1} parent=0 // pred_check_branch
    %57 = sbr.rel (0) target = $region69
  $region68: #{tpu_custom_call.1} parent=0 // pred_region
    _
  $region69: #{tpu_custom_call.1} parent=0 // pred_fallthru
    _
  %v58 = vlaneseq
  %v59 = vand.u32 %v58, 127
  %v60 = vld [vmem:[%s2] sm:$0xff]
  %v61 = vld [vmem:[%s2 + $0x8] sm:$0xff]
  %v62 = vld [vmem:[%s2 + $0x10] sm:$0xff]
  %v63 = vld [vmem:[%s2 + $0x18] sm:$0xff]
  %v64 = vld [vmem:[%s2 + $0x20] sm:$0xff]
  %v65 = vld [vmem:[%s2 + $0x28] sm:$0xff]
  %v66 = vld [vmem:[%s2 + $0x30] sm:$0xff]
  %v67 = vld [vmem:[%s2 + $0x38] sm:$0xff]
  %v68 = vld [vmem:[%s2 + $0x40] sm:$0xff]
  %v69 = vld [vmem:[%s2 + $0x48] sm:$0xff]
  %v70 = vld [vmem:[%s2 + $0x50] sm:$0xff]
  %v71 = vld [vmem:[%s2 + $0x58] sm:$0xff]
  %v72 = vld [vmem:[%s2 + $0x60] sm:$0xff]
  %v73 = vld [vmem:[%s2 + $0x68] sm:$0xff]
  %v74 = vld [vmem:[%s2 + $0x70] sm:$0xff]
  %v75 = vld [vmem:[%s2 + $0x78] sm:$0xff]
  %76 = vset.pattern.permute.xlu0 0
  %77 = vperm.xlu0 %76, %v60
  %v78 = vpop.permute.xlu0 %77
  %79 = vset.pattern.permute.xlu0 0
  %80 = vperm.xlu0 %79, %v61
  %v81 = vpop.permute.xlu0 %80
  %82 = vset.pattern.permute.xlu0 0
  %83 = vperm.xlu0 %82, %v62
  %v84 = vpop.permute.xlu0 %83
  %85 = vset.pattern.permute.xlu0 0
  %86 = vperm.xlu0 %85, %v63
  %v87 = vpop.permute.xlu0 %86
  %88 = vset.pattern.permute.xlu0 0
  %89 = vperm.xlu0 %88, %v64
  %v90 = vpop.permute.xlu0 %89
  %91 = vset.pattern.permute.xlu0 0
  %92 = vperm.xlu0 %91, %v65
  %v93 = vpop.permute.xlu0 %92
  %94 = vset.pattern.permute.xlu0 0
  %95 = vperm.xlu0 %94, %v66
  %v96 = vpop.permute.xlu0 %95
  %97 = vset.pattern.permute.xlu0 0
  %98 = vperm.xlu0 %97, %v67
  %v99 = vpop.permute.xlu0 %98
  %100 = vset.pattern.permute.xlu0 0
  %101 = vperm.xlu0 %100, %v68
  %v102 = vpop.permute.xlu0 %101
  %103 = vset.pattern.permute.xlu0 0
  %104 = vperm.xlu0 %103, %v69
  %v105 = vpop.permute.xlu0 %104
  %106 = vset.pattern.permute.xlu0 0
  %107 = vperm.xlu0 %106, %v70
  %v108 = vpop.permute.xlu0 %107
  %109 = vset.pattern.permute.xlu0 0
  %110 = vperm.xlu0 %109, %v71
  %v111 = vpop.permute.xlu0 %110
  %112 = vset.pattern.permute.xlu0 0
  %113 = vperm.xlu0 %112, %v72
  %v114 = vpop.permute.xlu0 %113
  %115 = vset.pattern.permute.xlu0 0
  %116 = vperm.xlu0 %115, %v73
  %v117 = vpop.permute.xlu0 %116
  %118 = vset.pattern.permute.xlu0 0
  %119 = vperm.xlu0 %118, %v74
  %v120 = vpop.permute.xlu0 %119
  %121 = vset.pattern.permute.xlu0 0
  %122 = vperm.xlu0 %121, %v75
  %v123 = vpop.permute.xlu0 %122
  %vm124 = vcmp.eq.s32.totalorder %v78, %v59
  %vm125 = vcmp.eq.s32.totalorder %v81, %v59
  %vm126 = vcmp.eq.s32.totalorder %v84, %v59
  %vm127 = vcmp.eq.s32.totalorder %v87, %v59
  %vm128 = vcmp.eq.s32.totalorder %v90, %v59
  %vm129 = vcmp.eq.s32.totalorder %v93, %v59
  %vm130 = vcmp.eq.s32.totalorder %v96, %v59
  %vm131 = vcmp.eq.s32.totalorder %v99, %v59
  %vm132 = vcmp.eq.s32.totalorder %v102, %v59
  %vm133 = vcmp.eq.s32.totalorder %v105, %v59
  %vm134 = vcmp.eq.s32.totalorder %v108, %v59
  %vm135 = vcmp.eq.s32.totalorder %v111, %v59
  %vm136 = vcmp.eq.s32.totalorder %v114, %v59
  %vm137 = vcmp.eq.s32.totalorder %v117, %v59
  %vm138 = vcmp.eq.s32.totalorder %v120, %v59
  %vm139 = vcmp.eq.s32.totalorder %v123, %v59
  %v140 = vsel %vm124, 1, 0
  %v141 = vsel %vm125, 1, 0
  %v142 = vsel %vm126, 1, 0
  %v143 = vsel %vm127, 1, 0
  %v144 = vsel %vm128, 1, 0
  %v145 = vsel %vm129, 1, 0
  %v146 = vsel %vm130, 1, 0
  %v147 = vsel %vm131, 1, 0
  %v148 = vsel %vm132, 1, 0
  %v149 = vsel %vm133, 1, 0
  %v150 = vsel %vm134, 1, 0
  %v151 = vsel %vm135, 1, 0
  %v152 = vsel %vm136, 1, 0
  %v153 = vsel %vm137, 1, 0
  %v154 = vsel %vm138, 1, 0
  %v155 = vsel %vm139, 1, 0
  %v156 = vcvt.s32.f32 %v140
  %v157 = vcvt.s32.f32 %v141
  %v158 = vcvt.s32.f32 %v142
  %v159 = vcvt.s32.f32 %v143
  %v160 = vcvt.s32.f32 %v144
  %v161 = vcvt.s32.f32 %v145
  %v162 = vcvt.s32.f32 %v146
  %v163 = vcvt.s32.f32 %v147
  %v164 = vcvt.s32.f32 %v148
  %v165 = vcvt.s32.f32 %v149
  %v166 = vcvt.s32.f32 %v150
  %v167 = vcvt.s32.f32 %v151
  %v168 = vcvt.s32.f32 %v152
  %v169 = vcvt.s32.f32 %v153
  %v170 = vcvt.s32.f32 %v154
  %v171 = vcvt.s32.f32 %v155
  %v172 = vpack.c.bf16 %v157, %v156
  %v173 = vpack.c.bf16 %v159, %v158
  %v174 = vpack.c.bf16 %v161, %v160
  %v175 = vpack.c.bf16 %v163, %v162
  %v176 = vpack.c.bf16 %v165, %v164
  %v177 = vpack.c.bf16 %v167, %v166
  %v178 = vpack.c.bf16 %v169, %v168
  %v179 = vpack.c.bf16 %v171, %v170
  %v180 = vld [vmem:[%s3] sm:$0xff]
  %v181 = vld [vmem:[%s3 + $0x8] sm:$0xff]
  %v182 = vld [vmem:[%s3 + $0x10] sm:$0xff]
  %v183 = vld [vmem:[%s3 + $0x18] sm:$0xff]
  %v184 = vld [vmem:[%s3 + $0x20] sm:$0xff]
  %v185 = vld [vmem:[%s3 + $0x28] sm:$0xff]
  %v186 = vld [vmem:[%s3 + $0x30] sm:$0xff]
  %v187 = vld [vmem:[%s3 + $0x38] sm:$0xff]
  %v188 = vld [vmem:[%s3 + $0x40] sm:$0xff]
  %v189 = vld [vmem:[%s3 + $0x48] sm:$0xff]
  %v190 = vld [vmem:[%s3 + $0x50] sm:$0xff]
  %v191 = vld [vmem:[%s3 + $0x58] sm:$0xff]
  %v192 = vld [vmem:[%s3 + $0x60] sm:$0xff]
  %v193 = vld [vmem:[%s3 + $0x68] sm:$0xff]
  %v194 = vld [vmem:[%s3 + $0x70] sm:$0xff]
  %v195 = vld [vmem:[%s3 + $0x78] sm:$0xff]
  %196 = vset.pattern.permute.xlu0 0
  %197 = vperm.xlu0 %196, %v180
  %v198 = vpop.permute.xlu0 %197
  %199 = vset.pattern.permute.xlu0 0
  %200 = vperm.xlu0 %199, %v181
  %v201 = vpop.permute.xlu0 %200
  %202 = vset.pattern.permute.xlu0 0
  %203 = vperm.xlu0 %202, %v182
  %v204 = vpop.permute.xlu0 %203
  %205 = vset.pattern.permute.xlu0 0
  %206 = vperm.xlu0 %205, %v183
  %v207 = vpop.permute.xlu0 %206
  %208 = vset.pattern.permute.xlu0 0
  %209 = vperm.xlu0 %208, %v184
  %v210 = vpop.permute.xlu0 %209
  %211 = vset.pattern.permute.xlu0 0
  %212 = vperm.xlu0 %211, %v185
  %v213 = vpop.permute.xlu0 %212
  %214 = vset.pattern.permute.xlu0 0
  %215 = vperm.xlu0 %214, %v186
  %v216 = vpop.permute.xlu0 %215
  %217 = vset.pattern.permute.xlu0 0
  %218 = vperm.xlu0 %217, %v187
  %v219 = vpop.permute.xlu0 %218
  %220 = vset.pattern.permute.xlu0 0
  %221 = vperm.xlu0 %220, %v188
  %v222 = vpop.permute.xlu0 %221
  %223 = vset.pattern.permute.xlu0 0
  %224 = vperm.xlu0 %223, %v189
  %v225 = vpop.permute.xlu0 %224
  %226 = vset.pattern.permute.xlu0 0
  %227 = vperm.xlu0 %226, %v190
  %v228 = vpop.permute.xlu0 %227
  %229 = vset.pattern.permute.xlu0 0
  %230 = vperm.xlu0 %229, %v191
  %v231 = vpop.permute.xlu0 %230
  %232 = vset.pattern.permute.xlu0 0
  %233 = vperm.xlu0 %232, %v192
  %v234 = vpop.permute.xlu0 %233
  %235 = vset.pattern.permute.xlu0 0
  %236 = vperm.xlu0 %235, %v193
  %v237 = vpop.permute.xlu0 %236
  %238 = vset.pattern.permute.xlu0 0
  %239 = vperm.xlu0 %238, %v194
  %v240 = vpop.permute.xlu0 %239
  %241 = vset.pattern.permute.xlu0 0
  %242 = vperm.xlu0 %241, %v195
  %v243 = vpop.permute.xlu0 %242
  %vm244 = vcmp.eq.s32.totalorder %v198, %v59
  %vm245 = vcmp.eq.s32.totalorder %v201, %v59
  %vm246 = vcmp.eq.s32.totalorder %v204, %v59
  %vm247 = vcmp.eq.s32.totalorder %v207, %v59
  %vm248 = vcmp.eq.s32.totalorder %v210, %v59
  %vm249 = vcmp.eq.s32.totalorder %v213, %v59
  %vm250 = vcmp.eq.s32.totalorder %v216, %v59
  %vm251 = vcmp.eq.s32.totalorder %v219, %v59
  %vm252 = vcmp.eq.s32.totalorder %v222, %v59
  %vm253 = vcmp.eq.s32.totalorder %v225, %v59
  %vm254 = vcmp.eq.s32.totalorder %v228, %v59
  %vm255 = vcmp.eq.s32.totalorder %v231, %v59
  %vm256 = vcmp.eq.s32.totalorder %v234, %v59
  %vm257 = vcmp.eq.s32.totalorder %v237, %v59
  %vm258 = vcmp.eq.s32.totalorder %v240, %v59
  %vm259 = vcmp.eq.s32.totalorder %v243, %v59
  %v260 = vsel %vm244, 1, 0
  %v261 = vsel %vm245, 1, 0
  %v262 = vsel %vm246, 1, 0
  %v263 = vsel %vm247, 1, 0
  %v264 = vsel %vm248, 1, 0
  %v265 = vsel %vm249, 1, 0
  %v266 = vsel %vm250, 1, 0
  %v267 = vsel %vm251, 1, 0
  %v268 = vsel %vm252, 1, 0
  %v269 = vsel %vm253, 1, 0
  %v270 = vsel %vm254, 1, 0
  %v271 = vsel %vm255, 1, 0
  %v272 = vsel %vm256, 1, 0
  %v273 = vsel %vm257, 1, 0
  %v274 = vsel %vm258, 1, 0
  %v275 = vsel %vm259, 1, 0
  %v276 = vcvt.s32.f32 %v260
  %v277 = vcvt.s32.f32 %v261
  %v278 = vcvt.s32.f32 %v262
  %v279 = vcvt.s32.f32 %v263
  %v280 = vcvt.s32.f32 %v264
  %v281 = vcvt.s32.f32 %v265
  %v282 = vcvt.s32.f32 %v266
  %v283 = vcvt.s32.f32 %v267
  %v284 = vcvt.s32.f32 %v268
  %v285 = vcvt.s32.f32 %v269
  %v286 = vcvt.s32.f32 %v270
  %v287 = vcvt.s32.f32 %v271
  %v288 = vcvt.s32.f32 %v272
  %v289 = vcvt.s32.f32 %v273
  %v290 = vcvt.s32.f32 %v274
  %v291 = vcvt.s32.f32 %v275
  %v292 = vpack.c.bf16 %v277, %v276
  %v293 = vpack.c.bf16 %v279, %v278
  %v294 = vpack.c.bf16 %v281, %v280
  %v295 = vpack.c.bf16 %v283, %v282
  %v296 = vpack.c.bf16 %v285, %v284
  %v297 = vpack.c.bf16 %v287, %v286
  %v298 = vpack.c.bf16 %v289, %v288
  %v299 = vpack.c.bf16 %v291, %v290
  %v300 = vlaneseq
  %v301 = vshrl.u32 %v300, 7
  %v302 = vadd.s32 %v301, 8
  %v303 = vadd.s32 %v301, 16
  %v304 = vadd.s32 %v301, 24
  %v305 = vadd.s32 %v301, 32
  %v306 = vadd.s32 %v301, 40
  %v307 = vadd.s32 %v301, 48
  %v308 = vadd.s32 %v301, 56
  %v309 = vadd.s32 %v301, 64
  %v310 = vadd.s32 %v301, 72
  %v311 = vadd.s32 %v301, 80
  %v312 = vadd.s32 %v301, 88
  %v313 = vadd.s32 %v301, 96
  %v314 = vadd.s32 %v301, 104
  %v315 = vadd.s32 %v301, 112
  %v316 = vadd.s32 %v301, 120
  %v317 = vld [vmem:[%s4] sm:$0x1]
  %v318 = vperm.slane %v317, 0
  %vm319 = vcmp.eq.s32.totalorder %v318, %v301
  %vm320 = vcmp.eq.s32.totalorder %v318, %v302
  %vm321 = vcmp.eq.s32.totalorder %v318, %v303
  %vm322 = vcmp.eq.s32.totalorder %v318, %v304
  %vm323 = vcmp.eq.s32.totalorder %v318, %v305
  %vm324 = vcmp.eq.s32.totalorder %v318, %v306
  %vm325 = vcmp.eq.s32.totalorder %v318, %v307
  %vm326 = vcmp.eq.s32.totalorder %v318, %v308
  %vm327 = vcmp.eq.s32.totalorder %v318, %v309
  %vm328 = vcmp.eq.s32.totalorder %v318, %v310
  %vm329 = vcmp.eq.s32.totalorder %v318, %v311
  %vm330 = vcmp.eq.s32.totalorder %v318, %v312
  %vm331 = vcmp.eq.s32.totalorder %v318, %v313
  %vm332 = vcmp.eq.s32.totalorder %v318, %v314
  %vm333 = vcmp.eq.s32.totalorder %v318, %v315
  %vm334 = vcmp.eq.s32.totalorder %v318, %v316
  %v335 = vsel %vm319, 1, 0
  %v336 = vsel %vm320, 1, 0
  %v337 = vsel %vm321, 1, 0
  %v338 = vsel %vm322, 1, 0
  %v339 = vsel %vm323, 1, 0
  %v340 = vsel %vm324, 1, 0
  %v341 = vsel %vm325, 1, 0
  %v342 = vsel %vm326, 1, 0
  %v343 = vsel %vm327, 1, 0
  %v344 = vsel %vm328, 1, 0
  %v345 = vsel %vm329, 1, 0
  %v346 = vsel %vm330, 1, 0
  %v347 = vsel %vm331, 1, 0
  %v348 = vsel %vm332, 1, 0
  %v349 = vsel %vm333, 1, 0
  %v350 = vsel %vm334, 1, 0
  %v351 = vcvt.s32.f32 %v335
  %v352 = vcvt.s32.f32 %v336
  %v353 = vcvt.s32.f32 %v337
  %v354 = vcvt.s32.f32 %v338
  %v355 = vcvt.s32.f32 %v339
  %v356 = vcvt.s32.f32 %v340
  %v357 = vcvt.s32.f32 %v341
  %v358 = vcvt.s32.f32 %v342
  %v359 = vcvt.s32.f32 %v343
  %v360 = vcvt.s32.f32 %v344
  %v361 = vcvt.s32.f32 %v345
  %v362 = vcvt.s32.f32 %v346
  %v363 = vcvt.s32.f32 %v347
  %v364 = vcvt.s32.f32 %v348
  %v365 = vcvt.s32.f32 %v349
  %v366 = vcvt.s32.f32 %v350
  %v367 = vpack.c.bf16 %v352, %v351
  %v368 = vpack.c.bf16 %v354, %v353
  %v369 = vpack.c.bf16 %v356, %v355
  %v370 = vpack.c.bf16 %v358, %v357
  %v371 = vpack.c.bf16 %v360, %v359
  %v372 = vpack.c.bf16 %v362, %v361
  %v373 = vpack.c.bf16 %v364, %v363
  %v374 = vpack.c.bf16 %v366, %v365
  %v375 = vld [vmem:[%s0] sm:$0xff]
  %v376 = vld [vmem:[%s0 + $0x8] sm:$0xff]
  %v377 = vld [vmem:[%s0 + $0x10] sm:$0xff]
  %v378 = vld [vmem:[%s0 + $0x18] sm:$0xff]
  %v379 = vld [vmem:[%s0 + $0x20] sm:$0xff]
  %v380 = vld [vmem:[%s0 + $0x28] sm:$0xff]
  %v381 = vld [vmem:[%s0 + $0x30] sm:$0xff]
  %v382 = vld [vmem:[%s0 + $0x38] sm:$0xff]
  %v383 = vld [vmem:[%s0 + $0x40] sm:$0xff]
  %v384 = vld [vmem:[%s0 + $0x48] sm:$0xff]
  %v385 = vld [vmem:[%s0 + $0x50] sm:$0xff]
  %v386 = vld [vmem:[%s0 + $0x58] sm:$0xff]
  %v387 = vld [vmem:[%s0 + $0x60] sm:$0xff]
  %v388 = vld [vmem:[%s0 + $0x68] sm:$0xff]
  %v389 = vld [vmem:[%s0 + $0x70] sm:$0xff]
  %v390 = vld [vmem:[%s0 + $0x78] sm:$0xff]
  %v391 = vld [vmem:[%s1] sm:$0xff]
  %v392 = vld [vmem:[%s1 + $0x8] sm:$0xff]
  %v393 = vld [vmem:[%s1 + $0x10] sm:$0xff]
  %v394 = vld [vmem:[%s1 + $0x18] sm:$0xff]
  %v395 = vld [vmem:[%s1 + $0x20] sm:$0xff]
  %v396 = vld [vmem:[%s1 + $0x28] sm:$0xff]
  %v397 = vld [vmem:[%s1 + $0x30] sm:$0xff]
  %v398 = vld [vmem:[%s1 + $0x38] sm:$0xff]
  %v399 = vld [vmem:[%s1 + $0x40] sm:$0xff]
  %v400 = vld [vmem:[%s1 + $0x48] sm:$0xff]
  %v401 = vld [vmem:[%s1 + $0x50] sm:$0xff]
  %v402 = vld [vmem:[%s1 + $0x58] sm:$0xff]
  %v403 = vld [vmem:[%s1 + $0x60] sm:$0xff]
  %v404 = vld [vmem:[%s1 + $0x68] sm:$0xff]
  %v405 = vld [vmem:[%s1 + $0x70] sm:$0xff]
  %v406 = vld [vmem:[%s1 + $0x78] sm:$0xff]
  %v407 = vld [vmem:[%s6] sm:$0x3]
  %vm408 = vcmask 15360
  %v410 = vsel %vm408, %v391, 0
  %v413 = vsel %vm408, %v392, 0
  %v416 = vsel %vm408, %v393, 0
  %v419 = vsel %vm408, %v394, 0
  %v422 = vsel %vm408, %v395, 0
  %v425 = vsel %vm408, %v396, 0
  %v428 = vsel %vm408, %v397, 0
  %v431 = vsel %vm408, %v398, 0
  %v434 = vsel %vm408, %v399, 0
  %v437 = vsel %vm408, %v400, 0
  %v440 = vsel %vm408, %v401, 0
  %v443 = vsel %vm408, %v402, 0
  %v446 = vsel %vm408, %v403, 0
  %v449 = vsel %vm408, %v404, 0
  %v452 = vsel %vm408, %v405, 0
  %v455 = vsel %vm408, %v406, 0
  %vm457 = vcmask 1041408
  %v459 = vsel %vm457, %v407, 0
  %461 = vmatpush.msra.mxu0 0.0
  %462 = vmatpush.msra.mxu0 0.0
  %463 = vmatpush.msra.mxu0 0.0
  %464 = vmatpush.msra.mxu0 0.0
  %465 = vmatpush.msra.mxu0 0.0
  %466 = vmatpush.msra.mxu0 0.0
  %467 = vmatpush.msra.mxu0 0.0
  %468 = vmatpush.msra.mxu0 0.0
  %469 = vmatpush.msra.mxu0 0.0
  %470 = vmatpush.msra.mxu0 0.0
  %471 = vmatpush.msra.mxu0 0.0
  %472 = vmatpush.msra.mxu0 0.0
  %473 = vmatpush.msra.mxu0 0.0
  %474 = vmatpush.msra.mxu0 0.0
  %475 = vmatpush.msra.mxu0 0.0
  %476 = vmatpush.msra.mxu0 %v459
  %477 = vmatmul.f32.gmra.mxu0 %v410
  %v478 = vpop.f32.mrf.mxu0
  %v479 = vadd.f32 0.0, %v478
  %480 = vmatmul.f32.gmra.mxu0 %v413
  %v481 = vpop.f32.mrf.mxu0
  %v482 = vadd.f32 0.0, %v481
  %483 = vmatmul.f32.gmra.mxu0 %v416
  %v484 = vpop.f32.mrf.mxu0
  %v485 = vadd.f32 0.0, %v484
  %486 = vmatmul.f32.gmra.mxu0 %v419
  %v487 = vpop.f32.mrf.mxu0
  %v488 = vadd.f32 0.0, %v487
  %489 = vmatmul.f32.gmra.mxu0 %v422
  %v490 = vpop.f32.mrf.mxu0
  %v491 = vadd.f32 0.0, %v490
  %492 = vmatmul.f32.gmra.mxu0 %v425
  %v493 = vpop.f32.mrf.mxu0
  %v494 = vadd.f32 0.0, %v493
  %495 = vmatmul.f32.gmra.mxu0 %v428
  %v496 = vpop.f32.mrf.mxu0
  %v497 = vadd.f32 0.0, %v496
  %498 = vmatmul.f32.gmra.mxu0 %v431
  %v499 = vpop.f32.mrf.mxu0
  %v500 = vadd.f32 0.0, %v499
  %501 = vmatmul.f32.gmra.mxu0 %v434
  %v502 = vpop.f32.mrf.mxu0
  %v503 = vadd.f32 0.0, %v502
  %504 = vmatmul.f32.gmra.mxu0 %v437
  %v505 = vpop.f32.mrf.mxu0
  %v506 = vadd.f32 0.0, %v505
  %507 = vmatmul.f32.gmra.mxu0 %v440
  %v508 = vpop.f32.mrf.mxu0
  %v509 = vadd.f32 0.0, %v508
  %510 = vmatmul.f32.gmra.mxu0 %v443
  %v511 = vpop.f32.mrf.mxu0
  %v512 = vadd.f32 0.0, %v511
  %513 = vmatmul.f32.gmra.mxu0 %v446
  %v514 = vpop.f32.mrf.mxu0
  %v515 = vadd.f32 0.0, %v514
  %516 = vmatmul.f32.gmra.mxu0 %v449
  %v517 = vpop.f32.mrf.mxu0
  %v518 = vadd.f32 0.0, %v517
  %519 = vmatmul.f32.gmra.mxu0 %v452
  %v520 = vpop.f32.mrf.mxu0
  %v521 = vadd.f32 0.0, %v520
  %522 = vmatmul.f32.gmra.mxu0 %v455
  %v523 = vpop.f32.mrf.mxu0
  %v524 = vadd.f32 0.0, %v523
  %525 = vdwg.mxu0
  %v526 = vld [vmem:[%s7] sm:$0xff]
  %v527 = vld [vmem:[%s7 + $0x8] sm:$0xff]
  %vm528 = vcmask 130048
  %v530 = vsel %vm528, %v375, 0
  %v533 = vsel %vm528, %v376, 0
  %v536 = vsel %vm528, %v377, 0
  %v539 = vsel %vm528, %v378, 0
  %v542 = vsel %vm528, %v379, 0
  %v545 = vsel %vm528, %v380, 0
  %v548 = vsel %vm528, %v381, 0
  %v551 = vsel %vm528, %v382, 0
  %v554 = vsel %vm528, %v383, 0
  %v557 = vsel %vm528, %v384, 0
  %v560 = vsel %vm528, %v385, 0
  %v563 = vsel %vm528, %v386, 0
  %v566 = vsel %vm528, %v387, 0
  %v569 = vsel %vm528, %v388, 0
  %v572 = vsel %vm528, %v389, 0
  %v575 = vsel %vm528, %v390, 0
  %577 = vmatpush.msra.mxu0 0.0
  %578 = vmatpush.msra.mxu0 0.0
  %579 = vmatpush.msra.mxu0 0.0
  %580 = vmatpush.msra.mxu0 0.0
  %581 = vmatpush.msra.mxu0 0.0
  %582 = vmatpush.msra.mxu0 0.0
  %583 = vmatpush.msra.mxu0 0.0
  %584 = vmatpush.msra.mxu0 0.0
  %585 = vmatpush.msra.mxu0 0.0
  %586 = vmatpush.msra.mxu0 0.0
  %587 = vmatpush.msra.mxu0 0.0
  %588 = vmatpush.msra.mxu0 0.0
  %589 = vmatpush.msra.mxu0 0.0
  %590 = vmatpush.msra.mxu0 0.0
  %591 = vmatpush.msra.mxu0 %v527
  %592 = vmatpush.msra.mxu0 %v526
  %593 = vmatmul.f32.gmra.mxu0 %v530
  %v594 = vpop.f32.mrf.mxu0
  %v595 = vadd.f32 0.0, %v594
  %596 = vmatmul.f32.gmra.mxu0 %v533
  %v597 = vpop.f32.mrf.mxu0
  %v598 = vadd.f32 0.0, %v597
  %599 = vmatmul.f32.gmra.mxu0 %v536
  %v600 = vpop.f32.mrf.mxu0
  %v601 = vadd.f32 0.0, %v600
  %602 = vmatmul.f32.gmra.mxu0 %v539
  %v603 = vpop.f32.mrf.mxu0
  %v604 = vadd.f32 0.0, %v603
  %605 = vmatmul.f32.gmra.mxu0 %v542
  %v606 = vpop.f32.mrf.mxu0
  %v607 = vadd.f32 0.0, %v606
  %608 = vmatmul.f32.gmra.mxu0 %v545
  %v609 = vpop.f32.mrf.mxu0
  %v610 = vadd.f32 0.0, %v609
  %611 = vmatmul.f32.gmra.mxu0 %v548
  %v612 = vpop.f32.mrf.mxu0
  %v613 = vadd.f32 0.0, %v612
  %614 = vmatmul.f32.gmra.mxu0 %v551
  %v615 = vpop.f32.mrf.mxu0
  %v616 = vadd.f32 0.0, %v615
  %617 = vmatmul.f32.gmra.mxu0 %v554
  %v618 = vpop.f32.mrf.mxu0
  %v619 = vadd.f32 0.0, %v618
  %620 = vmatmul.f32.gmra.mxu0 %v557
  %v621 = vpop.f32.mrf.mxu0
  %v622 = vadd.f32 0.0, %v621
  %623 = vmatmul.f32.gmra.mxu0 %v560
  %v624 = vpop.f32.mrf.mxu0
  %v625 = vadd.f32 0.0, %v624
  %626 = vmatmul.f32.gmra.mxu0 %v563
  %v627 = vpop.f32.mrf.mxu0
  %v628 = vadd.f32 0.0, %v627
  %629 = vmatmul.f32.gmra.mxu0 %v566
  %v630 = vpop.f32.mrf.mxu0
  %v631 = vadd.f32 0.0, %v630
  %632 = vmatmul.f32.gmra.mxu0 %v569
  %v633 = vpop.f32.mrf.mxu0
  %v634 = vadd.f32 0.0, %v633
  %635 = vmatmul.f32.gmra.mxu0 %v572
  %v636 = vpop.f32.mrf.mxu0
  %v637 = vadd.f32 0.0, %v636
  %638 = vmatmul.f32.gmra.mxu0 %v575
  %v639 = vpop.f32.mrf.mxu0
  %v640 = vadd.f32 0.0, %v639
  %641 = vdwg.mxu0
  %v642 = vpack.c.bf16 %v598, %v595
  %v643 = vpack.c.bf16 %v604, %v601
  %v644 = vpack.c.bf16 %v610, %v607
  %v645 = vpack.c.bf16 %v616, %v613
  %v646 = vpack.c.bf16 %v622, %v619
  %v647 = vpack.c.bf16 %v628, %v625
  %v648 = vpack.c.bf16 %v634, %v631
  %v649 = vpack.c.bf16 %v640, %v637
  %650 = vmatpush.bf16.msra.mxu0 %v649
  %651 = vmatpush.bf16.msra.mxu0 %v648
  %652 = vmatpush.bf16.msra.mxu0 %v647
  %653 = vmatpush.bf16.msra.mxu0 %v646
  %654 = vmatpush.bf16.msra.mxu0 %v645
  %655 = vmatpush.bf16.msra.mxu0 %v644
  %656 = vmatpush.bf16.msra.mxu0 %v643
  %657 = vmatpush.bf16.msra.mxu0 %v642
  %658 = vmatmul.bf16.gmra.mxu0 %v172
  %v659 = vpop.f32.mrf.mxu0
  %v660 = vadd.f32 0.0, %v659
  %v661 = vpop.f32.mrf.mxu0
  %v662 = vadd.f32 0.0, %v661
  %663 = vmatmul.bf16.gmra.mxu0 %v173
  %v664 = vpop.f32.mrf.mxu0
  %v665 = vadd.f32 0.0, %v664
  %v666 = vpop.f32.mrf.mxu0
  %v667 = vadd.f32 0.0, %v666
  %668 = vmatmul.bf16.gmra.mxu0 %v174
  %v669 = vpop.f32.mrf.mxu0
  %v670 = vadd.f32 0.0, %v669
  %v671 = vpop.f32.mrf.mxu0
  %v672 = vadd.f32 0.0, %v671
  %673 = vmatmul.bf16.gmra.mxu0 %v175
  %v674 = vpop.f32.mrf.mxu0
  %v675 = vadd.f32 0.0, %v674
  %v676 = vpop.f32.mrf.mxu0
  %v677 = vadd.f32 0.0, %v676
  %678 = vmatmul.bf16.gmra.mxu0 %v176
  %v679 = vpop.f32.mrf.mxu0
  %v680 = vadd.f32 0.0, %v679
  %v681 = vpop.f32.mrf.mxu0
  %v682 = vadd.f32 0.0, %v681
  %683 = vmatmul.bf16.gmra.mxu0 %v177
  %v684 = vpop.f32.mrf.mxu0
  %v685 = vadd.f32 0.0, %v684
  %v686 = vpop.f32.mrf.mxu0
  %v687 = vadd.f32 0.0, %v686
  %688 = vmatmul.bf16.gmra.mxu0 %v178
  %v689 = vpop.f32.mrf.mxu0
  %v690 = vadd.f32 0.0, %v689
  %v691 = vpop.f32.mrf.mxu0
  %v692 = vadd.f32 0.0, %v691
  %693 = vmatmul.bf16.gmra.mxu0 %v179
  %v694 = vpop.f32.mrf.mxu0
  %v695 = vadd.f32 0.0, %v694
  %v696 = vpop.f32.mrf.mxu0
  %v697 = vadd.f32 0.0, %v696
  %698 = vdwg.mxu0
  %707 = vrot.lane.b32.xlu0 %v642, 95
  %v708 = vpop.permute.xlu0 %707
  %709 = vrot.lane.b32.xlu0 %v643, 95
  %v710 = vpop.permute.xlu0 %709
  %711 = vrot.lane.b32.xlu0 %v644, 95
  %v712 = vpop.permute.xlu0 %711
  %713 = vrot.lane.b32.xlu0 %v645, 95
  %v714 = vpop.permute.xlu0 %713
  %715 = vrot.lane.b32.xlu0 %v646, 95
  %v716 = vpop.permute.xlu0 %715
  %717 = vrot.lane.b32.xlu0 %v647, 95
  %v718 = vpop.permute.xlu0 %717
  %719 = vrot.lane.b32.xlu0 %v648, 95
  %v720 = vpop.permute.xlu0 %719
  %721 = vrot.lane.b32.xlu0 %v649, 95
  %v722 = vpop.permute.xlu0 %721
  %731 = vmatpush.bf16.msra.mxu0 %v722
  %732 = vmatpush.bf16.msra.mxu0 %v720
  %733 = vmatpush.bf16.msra.mxu0 %v718
  %734 = vmatpush.bf16.msra.mxu0 %v716
  %735 = vmatpush.bf16.msra.mxu0 %v714
  %736 = vmatpush.bf16.msra.mxu0 %v712
  %737 = vmatpush.bf16.msra.mxu0 %v710
  %738 = vmatpush.bf16.msra.mxu0 %v708
  %739 = vmatmul.bf16.gmra.mxu0 %v292
  %v740 = vpop.f32.mrf.mxu0
  %v741 = vadd.f32 0.0, %v740
  %v742 = vpop.f32.mrf.mxu0
  %v743 = vadd.f32 0.0, %v742
  %744 = vmatmul.bf16.gmra.mxu0 %v293
  %v745 = vpop.f32.mrf.mxu0
  %v746 = vadd.f32 0.0, %v745
  %v747 = vpop.f32.mrf.mxu0
  %v748 = vadd.f32 0.0, %v747
  %749 = vmatmul.bf16.gmra.mxu0 %v294
  %v750 = vpop.f32.mrf.mxu0
  %v751 = vadd.f32 0.0, %v750
  %v752 = vpop.f32.mrf.mxu0
  %v753 = vadd.f32 0.0, %v752
  %754 = vmatmul.bf16.gmra.mxu0 %v295
  %v755 = vpop.f32.mrf.mxu0
  %v756 = vadd.f32 0.0, %v755
  %v757 = vpop.f32.mrf.mxu0
  %v758 = vadd.f32 0.0, %v757
  %759 = vmatmul.bf16.gmra.mxu0 %v296
  %v760 = vpop.f32.mrf.mxu0
  %v761 = vadd.f32 0.0, %v760
  %v762 = vpop.f32.mrf.mxu0
  %v763 = vadd.f32 0.0, %v762
  %764 = vmatmul.bf16.gmra.mxu0 %v297
  %v765 = vpop.f32.mrf.mxu0
  %v766 = vadd.f32 0.0, %v765
  %v767 = vpop.f32.mrf.mxu0
  %v768 = vadd.f32 0.0, %v767
  %769 = vmatmul.bf16.gmra.mxu0 %v298
  %v770 = vpop.f32.mrf.mxu0
  %v771 = vadd.f32 0.0, %v770
  %v772 = vpop.f32.mrf.mxu0
  %v773 = vadd.f32 0.0, %v772
  %774 = vmatmul.bf16.gmra.mxu0 %v299
  %v775 = vpop.f32.mrf.mxu0
  %v776 = vadd.f32 0.0, %v775
  %v777 = vpop.f32.mrf.mxu0
  %v778 = vadd.f32 0.0, %v777
  %779 = vdwg.mxu0
  %796 = vrot.lane.b32.xlu0 %v741, 32
  %v797 = vpop.permute.xlu0 %796
  %798 = vrot.lane.b32.xlu0 %v743, 32
  %v799 = vpop.permute.xlu0 %798
  %800 = vrot.lane.b32.xlu0 %v746, 32
  %v801 = vpop.permute.xlu0 %800
  %802 = vrot.lane.b32.xlu0 %v748, 32
  %v803 = vpop.permute.xlu0 %802
  %804 = vrot.lane.b32.xlu0 %v751, 32
  %v805 = vpop.permute.xlu0 %804
  %806 = vrot.lane.b32.xlu0 %v753, 32
  %v807 = vpop.permute.xlu0 %806
  %808 = vrot.lane.b32.xlu0 %v756, 32
  %v809 = vpop.permute.xlu0 %808
  %810 = vrot.lane.b32.xlu0 %v758, 32
  %v811 = vpop.permute.xlu0 %810
  %812 = vrot.lane.b32.xlu0 %v761, 32
  %v813 = vpop.permute.xlu0 %812
  %814 = vrot.lane.b32.xlu0 %v763, 32
  %v815 = vpop.permute.xlu0 %814
  %816 = vrot.lane.b32.xlu0 %v766, 32
  %v817 = vpop.permute.xlu0 %816
  %818 = vrot.lane.b32.xlu0 %v768, 32
  %v819 = vpop.permute.xlu0 %818
  %820 = vrot.lane.b32.xlu0 %v771, 32
  %v821 = vpop.permute.xlu0 %820
  %822 = vrot.lane.b32.xlu0 %v773, 32
  %v823 = vpop.permute.xlu0 %822
  %824 = vrot.lane.b32.xlu0 %v776, 32
  %v825 = vpop.permute.xlu0 %824
  %826 = vrot.lane.b32.xlu0 %v778, 32
  %v827 = vpop.permute.xlu0 %826
  %v844 = vadd.f32 %v660, %v797
  %v845 = vadd.f32 %v662, %v799
  %v846 = vadd.f32 %v665, %v801
  %v847 = vadd.f32 %v667, %v803
  %v848 = vadd.f32 %v670, %v805
  %v849 = vadd.f32 %v672, %v807
  %v850 = vadd.f32 %v675, %v809
  %v851 = vadd.f32 %v677, %v811
  %v852 = vadd.f32 %v680, %v813
  %v853 = vadd.f32 %v682, %v815
  %v854 = vadd.f32 %v685, %v817
  %v855 = vadd.f32 %v687, %v819
  %v856 = vadd.f32 %v690, %v821
  %v857 = vadd.f32 %v692, %v823
  %v858 = vadd.f32 %v695, %v825
  %v859 = vadd.f32 %v697, %v827
  %876 = vrot.lane.b32.xlu0 %v479, 32
  %v877 = vpop.permute.xlu0 %876
  %878 = vrot.lane.b32.xlu0 %v482, 32
  %v879 = vpop.permute.xlu0 %878
  %880 = vrot.lane.b32.xlu0 %v485, 32
  %v881 = vpop.permute.xlu0 %880
  %882 = vrot.lane.b32.xlu0 %v488, 32
  %v883 = vpop.permute.xlu0 %882
  %884 = vrot.lane.b32.xlu0 %v491, 32
  %v885 = vpop.permute.xlu0 %884
  %886 = vrot.lane.b32.xlu0 %v494, 32
  %v887 = vpop.permute.xlu0 %886
  %888 = vrot.lane.b32.xlu0 %v497, 32
  %v889 = vpop.permute.xlu0 %888
  %890 = vrot.lane.b32.xlu0 %v500, 32
  %v891 = vpop.permute.xlu0 %890
  %892 = vrot.lane.b32.xlu0 %v503, 32
  %v893 = vpop.permute.xlu0 %892
  %894 = vrot.lane.b32.xlu0 %v506, 32
  %v895 = vpop.permute.xlu0 %894
  %896 = vrot.lane.b32.xlu0 %v509, 32
  %v897 = vpop.permute.xlu0 %896
  %898 = vrot.lane.b32.xlu0 %v512, 32
  %v899 = vpop.permute.xlu0 %898
  %900 = vrot.lane.b32.xlu0 %v515, 32
  %v901 = vpop.permute.xlu0 %900
  %902 = vrot.lane.b32.xlu0 %v518, 32
  %v903 = vpop.permute.xlu0 %902
  %904 = vrot.lane.b32.xlu0 %v521, 32
  %v905 = vpop.permute.xlu0 %904
  %906 = vrot.lane.b32.xlu0 %v524, 32
  %v907 = vpop.permute.xlu0 %906
  %v924 = vadd.f32 %v844, %v877
  %v925 = vadd.f32 %v845, %v879
  %v926 = vadd.f32 %v846, %v881
  %v927 = vadd.f32 %v847, %v883
  %v928 = vadd.f32 %v848, %v885
  %v929 = vadd.f32 %v849, %v887
  %v930 = vadd.f32 %v850, %v889
  %v931 = vadd.f32 %v851, %v891
  %v932 = vadd.f32 %v852, %v893
  %v933 = vadd.f32 %v853, %v895
  %v934 = vadd.f32 %v854, %v897
  %v935 = vadd.f32 %v855, %v899
  %v936 = vadd.f32 %v856, %v901
  %v937 = vadd.f32 %v857, %v903
  %v938 = vadd.f32 %v858, %v905
  %v939 = vadd.f32 %v859, %v907
  %vm940 = vcmp.gt.f32.partialorder %v924, 0.0
  %vm941 = vcmp.gt.f32.partialorder %v925, 0.0
  %vm942 = vcmp.gt.f32.partialorder %v926, 0.0
  %vm943 = vcmp.gt.f32.partialorder %v927, 0.0
  %vm944 = vcmp.gt.f32.partialorder %v928, 0.0
  %vm945 = vcmp.gt.f32.partialorder %v929, 0.0
  %vm946 = vcmp.gt.f32.partialorder %v930, 0.0
  %vm947 = vcmp.gt.f32.partialorder %v931, 0.0
  %vm948 = vcmp.gt.f32.partialorder %v932, 0.0
  %vm949 = vcmp.gt.f32.partialorder %v933, 0.0
  %vm950 = vcmp.gt.f32.partialorder %v934, 0.0
  %vm951 = vcmp.gt.f32.partialorder %v935, 0.0
  %vm952 = vcmp.gt.f32.partialorder %v936, 0.0
  %vm953 = vcmp.gt.f32.partialorder %v937, 0.0
  %vm954 = vcmp.gt.f32.partialorder %v938, 0.0
  %vm955 = vcmp.gt.f32.partialorder %v939, 0.0
  %v956 = vmul.f32 %v924, 0.2
  %v957 = vmul.f32 %v925, 0.2
  %v958 = vmul.f32 %v926, 0.2
  %v959 = vmul.f32 %v927, 0.2
  %v960 = vmul.f32 %v928, 0.2
  %v961 = vmul.f32 %v929, 0.2
  %v962 = vmul.f32 %v930, 0.2
  %v963 = vmul.f32 %v931, 0.2
  %v964 = vmul.f32 %v932, 0.2
  %v965 = vmul.f32 %v933, 0.2
  %v966 = vmul.f32 %v934, 0.2
  %v967 = vmul.f32 %v935, 0.2
  %v968 = vmul.f32 %v936, 0.2
  %v969 = vmul.f32 %v937, 0.2
  %v970 = vmul.f32 %v938, 0.2
  %v971 = vmul.f32 %v939, 0.2
  %v972 = vsel %vm940, %v924, %v956
  %v973 = vsel %vm941, %v925, %v957
  %v974 = vsel %vm942, %v926, %v958
  %v975 = vsel %vm943, %v927, %v959
  %v976 = vsel %vm944, %v928, %v960
  %v977 = vsel %vm945, %v929, %v961
  %v978 = vsel %vm946, %v930, %v962
  %v979 = vsel %vm947, %v931, %v963
  %v980 = vsel %vm948, %v932, %v964
  %v981 = vsel %vm949, %v933, %v965
  %v982 = vsel %vm950, %v934, %v966
  %v983 = vsel %vm951, %v935, %v967
  %v984 = vsel %vm952, %v936, %v968
  %v985 = vsel %vm953, %v937, %v969
  %v986 = vsel %vm954, %v938, %v970
  %v987 = vsel %vm955, %v939, %v971
  %vm988 = vcmask 269568
  %v989 = vsel %vm988, %v972, -inf
  %v990 = vsel %vm988, %v973, -inf
  %v991 = vsel %vm988, %v974, -inf
  %v992 = vsel %vm988, %v975, -inf
  %v993 = vsel %vm988, %v976, -inf
  %v994 = vmax.f32 %v989, %v993
  %v995 = vsel %vm988, %v977, -inf
  %v996 = vmax.f32 %v990, %v995
  %v997 = vsel %vm988, %v978, -inf
  %v998 = vmax.f32 %v991, %v997
  %v999 = vsel %vm988, %v979, -inf
  %v1000 = vmax.f32 %v992, %v999
  %v1001 = vsel %vm988, %v980, -inf
  %v1002 = vmax.f32 %v994, %v1001
  %v1003 = vsel %vm988, %v981, -inf
  %v1004 = vmax.f32 %v996, %v1003
  %v1005 = vsel %vm988, %v982, -inf
  %v1006 = vmax.f32 %v998, %v1005
  %v1007 = vsel %vm988, %v983, -inf
  %v1008 = vmax.f32 %v1000, %v1007
  %v1009 = vsel %vm988, %v984, -inf
  %v1010 = vmax.f32 %v1002, %v1009
  %v1011 = vsel %vm988, %v985, -inf
  %v1012 = vmax.f32 %v1004, %v1011
  %v1013 = vsel %vm988, %v986, -inf
  %v1014 = vmax.f32 %v1006, %v1013
  %v1015 = vsel %vm988, %v987, -inf
  %v1016 = vmax.f32 %v1008, %v1015
  %v1017 = vmax.f32 %v1010, %v1012
  %v1018 = vmax.f32 %v1014, %v1016
  %v1019 = vmax.f32 %v1017, %v1018
  %v1020 = vrot.slane %v1019, 4
  %v1021 = vmax.f32 %v1019, %v1020
  %v1022 = vrot.slane %v1021, 2
  %v1023 = vmax.f32 %v1021, %v1022
  %v1024 = vrot.slane %v1023, 1
  %v1025 = vmax.f32 %v1023, %v1024
  %v1026 = vsub.f32 %v972, %v1025
  %v1027 = vsub.f32 %v973, %v1025
  %v1028 = vsub.f32 %v974, %v1025
  %v1029 = vsub.f32 %v975, %v1025
  %v1030 = vsub.f32 %v976, %v1025
  %v1031 = vsub.f32 %v977, %v1025
  %v1032 = vsub.f32 %v978, %v1025
  %v1033 = vsub.f32 %v979, %v1025
  %v1034 = vsub.f32 %v980, %v1025
  %v1035 = vsub.f32 %v981, %v1025
  %v1036 = vsub.f32 %v982, %v1025
  %v1037 = vsub.f32 %v983, %v1025
  %v1038 = vsub.f32 %v984, %v1025
  %v1039 = vsub.f32 %v985, %v1025
  %v1040 = vsub.f32 %v986, %v1025
  %v1041 = vsub.f32 %v987, %v1025
  %v1042 = vmax.f32 %v1026, -60.0
  %v1043 = vmax.f32 %v1027, -60.0
  %v1044 = vmax.f32 %v1028, -60.0
  %v1045 = vmax.f32 %v1029, -60.0
  %v1046 = vmax.f32 %v1030, -60.0
  %v1047 = vmax.f32 %v1031, -60.0
  %v1048 = vmax.f32 %v1032, -60.0
  %v1049 = vmax.f32 %v1033, -60.0
  %v1050 = vmax.f32 %v1034, -60.0
  %v1051 = vmax.f32 %v1035, -60.0
  %v1052 = vmax.f32 %v1036, -60.0
  %v1053 = vmax.f32 %v1037, -60.0
  %v1054 = vmax.f32 %v1038, -60.0
  %v1055 = vmax.f32 %v1039, -60.0
  %v1056 = vmax.f32 %v1040, -60.0
  %v1057 = vmax.f32 %v1041, -60.0
  %v1058 = vmul.f32 %v1042, 1.442695
  %v1059 = vpow.pop %v1058
  %v1060 = vmul.f32 %v1043, 1.442695
  %v1061 = vpow.pop %v1060
  %v1062 = vmul.f32 %v1044, 1.442695
  %v1063 = vpow.pop %v1062
  %v1064 = vmul.f32 %v1045, 1.442695
  %v1065 = vpow.pop %v1064
  %v1066 = vmul.f32 %v1046, 1.442695
  %v1067 = vpow.pop %v1066
  %v1068 = vmul.f32 %v1047, 1.442695
  %v1069 = vpow.pop %v1068
  %v1070 = vmul.f32 %v1048, 1.442695
  %v1071 = vpow.pop %v1070
  %v1072 = vmul.f32 %v1049, 1.442695
  %v1073 = vpow.pop %v1072
  %v1074 = vmul.f32 %v1050, 1.442695
  %v1075 = vpow.pop %v1074
  %v1076 = vmul.f32 %v1051, 1.442695
  %v1077 = vpow.pop %v1076
  %v1078 = vmul.f32 %v1052, 1.442695
  %v1079 = vpow.pop %v1078
  %v1080 = vmul.f32 %v1053, 1.442695
  %v1081 = vpow.pop %v1080
  %v1082 = vmul.f32 %v1054, 1.442695
  %v1083 = vpow.pop %v1082
  %v1084 = vmul.f32 %v1055, 1.442695
  %v1085 = vpow.pop %v1084
  %v1086 = vmul.f32 %v1056, 1.442695
  %v1087 = vpow.pop %v1086
  %v1088 = vmul.f32 %v1057, 1.442695
  %v1089 = vpow.pop %v1088
  %1091 = vset.pattern.permute.xlu0 32
  %1092 = vperm.xlu0 %1091, %v1059
  %v1093 = vpop.permute.xlu0 %1092
  %1096 = vset.pattern.permute.xlu0 32
  %1097 = vperm.xlu0 %1096, %v1061
  %v1098 = vpop.permute.xlu0 %1097
  %1101 = vset.pattern.permute.xlu0 32
  %1102 = vperm.xlu0 %1101, %v1063
  %v1103 = vpop.permute.xlu0 %1102
  %1106 = vset.pattern.permute.xlu0 32
  %1107 = vperm.xlu0 %1106, %v1065
  %v1108 = vpop.permute.xlu0 %1107
  %1111 = vset.pattern.permute.xlu0 32
  %1112 = vperm.xlu0 %1111, %v1067
  %v1113 = vpop.permute.xlu0 %1112
  %1116 = vset.pattern.permute.xlu0 32
  %1117 = vperm.xlu0 %1116, %v1069
  %v1118 = vpop.permute.xlu0 %1117
  %1121 = vset.pattern.permute.xlu0 32
  %1122 = vperm.xlu0 %1121, %v1071
  %v1123 = vpop.permute.xlu0 %1122
  %1126 = vset.pattern.permute.xlu0 32
  %1127 = vperm.xlu0 %1126, %v1073
  %v1128 = vpop.permute.xlu0 %1127
  %1131 = vset.pattern.permute.xlu0 32
  %1132 = vperm.xlu0 %1131, %v1075
  %v1133 = vpop.permute.xlu0 %1132
  %1136 = vset.pattern.permute.xlu0 32
  %1137 = vperm.xlu0 %1136, %v1077
  %v1138 = vpop.permute.xlu0 %1137
  %1141 = vset.pattern.permute.xlu0 32
  %1142 = vperm.xlu0 %1141, %v1079
  %v1143 = vpop.permute.xlu0 %1142
  %1146 = vset.pattern.permute.xlu0 32
  %1147 = vperm.xlu0 %1146, %v1081
  %v1148 = vpop.permute.xlu0 %1147
  %1151 = vset.pattern.permute.xlu0 32
  %1152 = vperm.xlu0 %1151, %v1083
  %v1153 = vpop.permute.xlu0 %1152
  %1156 = vset.pattern.permute.xlu0 32
  %1157 = vperm.xlu0 %1156, %v1085
  %v1158 = vpop.permute.xlu0 %1157
  %1161 = vset.pattern.permute.xlu0 32
  %1162 = vperm.xlu0 %1161, %v1087
  %v1163 = vpop.permute.xlu0 %1162
  %1166 = vset.pattern.permute.xlu0 32
  %1167 = vperm.xlu0 %1166, %v1089
  %v1168 = vpop.permute.xlu0 %1167
  %v1170 = vmul.f32 %v1093, %v660
  %v1171 = vmul.f32 %v1098, %v662
  %v1172 = vmul.f32 %v1103, %v665
  %v1173 = vmul.f32 %v1108, %v667
  %v1174 = vmul.f32 %v1113, %v670
  %v1175 = vmul.f32 %v1118, %v672
  %v1176 = vmul.f32 %v1123, %v675
  %v1177 = vmul.f32 %v1128, %v677
  %v1178 = vmul.f32 %v1133, %v680
  %v1179 = vmul.f32 %v1138, %v682
  %v1180 = vmul.f32 %v1143, %v685
  %v1181 = vmul.f32 %v1148, %v687
  %v1182 = vmul.f32 %v1153, %v690
  %v1183 = vmul.f32 %v1158, %v692
  %v1184 = vmul.f32 %v1163, %v695
  %v1185 = vmul.f32 %v1168, %v697
  %vm1186 = vcmask 261120
  %v1187 = vsel %vm1186, %v1170, %v1059
  %v1188 = vsel %vm1186, %v1171, %v1061
  %v1189 = vsel %vm1186, %v1172, %v1063
  %v1190 = vsel %vm1186, %v1173, %v1065
  %v1191 = vsel %vm1186, %v1174, %v1067
  %v1192 = vsel %vm1186, %v1175, %v1069
  %v1193 = vsel %vm1186, %v1176, %v1071
  %v1194 = vsel %vm1186, %v1177, %v1073
  %v1195 = vsel %vm1186, %v1178, %v1075
  %v1196 = vsel %vm1186, %v1179, %v1077
  %v1197 = vsel %vm1186, %v1180, %v1079
  %v1198 = vsel %vm1186, %v1181, %v1081
  %v1199 = vsel %vm1186, %v1182, %v1083
  %v1200 = vsel %vm1186, %v1183, %v1085
  %v1201 = vsel %vm1186, %v1184, %v1087
  %v1202 = vsel %vm1186, %v1185, %v1089
  %v1203 = vpack.c.bf16 %v1188, %v1187
  %v1204 = vpack.c.bf16 %v1190, %v1189
  %v1205 = vpack.c.bf16 %v1192, %v1191
  %v1206 = vpack.c.bf16 %v1194, %v1193
  %v1207 = vpack.c.bf16 %v1196, %v1195
  %v1208 = vpack.c.bf16 %v1198, %v1197
  %v1209 = vpack.c.bf16 %v1200, %v1199
  %v1210 = vpack.c.bf16 %v1202, %v1201
  %1211 = vmatpush.bf16.msra.mxu0 %v1210
  %1212 = vmatpush.bf16.msra.mxu0 %v1209
  %1213 = vmatpush.bf16.msra.mxu0 %v1208
  %1214 = vmatpush.bf16.msra.mxu0 %v1207
  %1215 = vmatpush.bf16.msra.mxu0 %v1206
  %1216 = vmatpush.bf16.msra.mxu0 %v1205
  %1217 = vmatpush.bf16.msra.mxu0 %v1204
  %1218 = vmatpush.bf16.msra.mxu0 %v1203
  %1219 = vmatmul.bf16.gmra.mxu0 %v367
  %v1220 = vpop.f32.mrf.mxu0
  %v1221 = vadd.f32 0.0, %v1220
  %v1222 = vpop.f32.mrf.mxu0
  %v1223 = vadd.f32 0.0, %v1222
  %1224 = vmatmul.bf16.gmra.mxu0 %v368
  %v1225 = vpop.f32.mrf.mxu0
  %v1226 = vadd.f32 0.0, %v1225
  %v1227 = vpop.f32.mrf.mxu0
  %v1228 = vadd.f32 0.0, %v1227
  %1229 = vmatmul.bf16.gmra.mxu0 %v369
  %v1230 = vpop.f32.mrf.mxu0
  %v1231 = vadd.f32 0.0, %v1230
  %v1232 = vpop.f32.mrf.mxu0
  %v1233 = vadd.f32 0.0, %v1232
  %1234 = vmatmul.bf16.gmra.mxu0 %v370
  %v1235 = vpop.f32.mrf.mxu0
  %v1236 = vadd.f32 0.0, %v1235
  %v1237 = vpop.f32.mrf.mxu0
  %v1238 = vadd.f32 0.0, %v1237
  %1239 = vmatmul.bf16.gmra.mxu0 %v371
  %v1240 = vpop.f32.mrf.mxu0
  %v1241 = vadd.f32 0.0, %v1240
  %v1242 = vpop.f32.mrf.mxu0
  %v1243 = vadd.f32 0.0, %v1242
  %1244 = vmatmul.bf16.gmra.mxu0 %v372
  %v1245 = vpop.f32.mrf.mxu0
  %v1246 = vadd.f32 0.0, %v1245
  %v1247 = vpop.f32.mrf.mxu0
  %v1248 = vadd.f32 0.0, %v1247
  %1249 = vmatmul.bf16.gmra.mxu0 %v373
  %v1250 = vpop.f32.mrf.mxu0
  %v1251 = vadd.f32 0.0, %v1250
  %v1252 = vpop.f32.mrf.mxu0
  %v1253 = vadd.f32 0.0, %v1252
  %1254 = vmatmul.bf16.gmra.mxu0 %v374
  %v1255 = vpop.f32.mrf.mxu0
  %v1256 = vadd.f32 0.0, %v1255
  %v1257 = vpop.f32.mrf.mxu0
  %v1258 = vadd.f32 0.0, %v1257
  %1259 = vdwg.mxu0
  %v1260 = vrcp.pop %v1221
  %v1261 = vrcp.pop %v1223
  %v1262 = vrcp.pop %v1226
  %v1263 = vrcp.pop %v1228
  %v1264 = vrcp.pop %v1231
  %v1265 = vrcp.pop %v1233
  %v1266 = vrcp.pop %v1236
  %v1267 = vrcp.pop %v1238
  %v1268 = vrcp.pop %v1241
  %v1269 = vrcp.pop %v1243
  %v1270 = vrcp.pop %v1246
  %v1271 = vrcp.pop %v1248
  %v1272 = vrcp.pop %v1251
  %v1273 = vrcp.pop %v1253
  %v1274 = vrcp.pop %v1256
  %v1275 = vrcp.pop %v1258
  %vm1276 = vcmp.gt.f32.partialorder %v1221, 0.0
  %vm1277 = vcmp.gt.f32.partialorder %v1223, 0.0
  %vm1278 = vcmp.gt.f32.partialorder %v1226, 0.0
  %vm1279 = vcmp.gt.f32.partialorder %v1228, 0.0
  %vm1280 = vcmp.gt.f32.partialorder %v1231, 0.0
  %vm1281 = vcmp.gt.f32.partialorder %v1233, 0.0
  %vm1282 = vcmp.gt.f32.partialorder %v1236, 0.0
  %vm1283 = vcmp.gt.f32.partialorder %v1238, 0.0
  %vm1284 = vcmp.gt.f32.partialorder %v1241, 0.0
  %vm1285 = vcmp.gt.f32.partialorder %v1243, 0.0
  %vm1286 = vcmp.gt.f32.partialorder %v1246, 0.0
  %vm1287 = vcmp.gt.f32.partialorder %v1248, 0.0
  %vm1288 = vcmp.gt.f32.partialorder %v1251, 0.0
  %vm1289 = vcmp.gt.f32.partialorder %v1253, 0.0
  %vm1290 = vcmp.gt.f32.partialorder %v1256, 0.0
  %vm1291 = vcmp.gt.f32.partialorder %v1258, 0.0
  %v1292 = vsel %vm1276, %v1260, 0.0
  %v1293 = vsel %vm1277, %v1261, 0.0
  %v1294 = vsel %vm1278, %v1262, 0.0
  %v1295 = vsel %vm1279, %v1263, 0.0
  %v1296 = vsel %vm1280, %v1264, 0.0
  %v1297 = vsel %vm1281, %v1265, 0.0
  %v1298 = vsel %vm1282, %v1266, 0.0
  %v1299 = vsel %vm1283, %v1267, 0.0
  %v1300 = vsel %vm1284, %v1268, 0.0
  %v1301 = vsel %vm1285, %v1269, 0.0
  %v1302 = vsel %vm1286, %v1270, 0.0
  %v1303 = vsel %vm1287, %v1271, 0.0
  %v1304 = vsel %vm1288, %v1272, 0.0
  %v1305 = vsel %vm1289, %v1273, 0.0
  %v1306 = vsel %vm1290, %v1274, 0.0
  %v1307 = vsel %vm1291, %v1275, 0.0
  %1309 = vset.pattern.permute.xlu0 32
  %1310 = vperm.xlu0 %1309, %v1292
  %v1311 = vpop.permute.xlu0 %1310
  %1314 = vset.pattern.permute.xlu0 32
  %1315 = vperm.xlu0 %1314, %v1293
  %v1316 = vpop.permute.xlu0 %1315
  %1319 = vset.pattern.permute.xlu0 32
  %1320 = vperm.xlu0 %1319, %v1294
  %v1321 = vpop.permute.xlu0 %1320
  %1324 = vset.pattern.permute.xlu0 32
  %1325 = vperm.xlu0 %1324, %v1295
  %v1326 = vpop.permute.xlu0 %1325
  %1329 = vset.pattern.permute.xlu0 32
  %1330 = vperm.xlu0 %1329, %v1296
  %v1331 = vpop.permute.xlu0 %1330
  %1334 = vset.pattern.permute.xlu0 32
  %1335 = vperm.xlu0 %1334, %v1297
  %v1336 = vpop.permute.xlu0 %1335
  %1339 = vset.pattern.permute.xlu0 32
  %1340 = vperm.xlu0 %1339, %v1298
  %v1341 = vpop.permute.xlu0 %1340
  %1344 = vset.pattern.permute.xlu0 32
  %1345 = vperm.xlu0 %1344, %v1299
  %v1346 = vpop.permute.xlu0 %1345
  %1349 = vset.pattern.permute.xlu0 32
  %1350 = vperm.xlu0 %1349, %v1300
  %v1351 = vpop.permute.xlu0 %1350
  %1354 = vset.pattern.permute.xlu0 32
  %1355 = vperm.xlu0 %1354, %v1301
  %v1356 = vpop.permute.xlu0 %1355
  %1359 = vset.pattern.permute.xlu0 32
  %1360 = vperm.xlu0 %1359, %v1302
  %v1361 = vpop.permute.xlu0 %1360
  %1364 = vset.pattern.permute.xlu0 32
  %1365 = vperm.xlu0 %1364, %v1303
  %v1366 = vpop.permute.xlu0 %1365
  %1369 = vset.pattern.permute.xlu0 32
  %1370 = vperm.xlu0 %1369, %v1304
  %v1371 = vpop.permute.xlu0 %1370
  %1374 = vset.pattern.permute.xlu0 32
  %1375 = vperm.xlu0 %1374, %v1305
  %v1376 = vpop.permute.xlu0 %1375
  %1379 = vset.pattern.permute.xlu0 32
  %1380 = vperm.xlu0 %1379, %v1306
  %v1381 = vpop.permute.xlu0 %1380
  %1384 = vset.pattern.permute.xlu0 32
  %1385 = vperm.xlu0 %1384, %v1307
  %v1386 = vpop.permute.xlu0 %1385
  %v1388 = vmul.f32 %v1221, %v1311
  %v1389 = vmul.f32 %v1223, %v1316
  %v1390 = vmul.f32 %v1226, %v1321
  %v1391 = vmul.f32 %v1228, %v1326
  %v1392 = vmul.f32 %v1231, %v1331
  %v1393 = vmul.f32 %v1233, %v1336
  %v1394 = vmul.f32 %v1236, %v1341
  %v1395 = vmul.f32 %v1238, %v1346
  %v1396 = vmul.f32 %v1241, %v1351
  %v1397 = vmul.f32 %v1243, %v1356
  %v1398 = vmul.f32 %v1246, %v1361
  %v1399 = vmul.f32 %v1248, %v1366
  %v1400 = vmul.f32 %v1251, %v1371
  %v1401 = vmul.f32 %v1253, %v1376
  %v1402 = vmul.f32 %v1256, %v1381
  %v1403 = vmul.f32 %v1258, %v1386
  %v1404 = vld [vmem:[%s8] sm:$0x1]
  %v1406 = vperm.slane %v1404, 0
  %v1408 = vadd.f32 %v1388, %v1406
  %v1409 = vadd.f32 %v1389, %v1406
  %v1410 = vadd.f32 %v1390, %v1406
  %v1411 = vadd.f32 %v1391, %v1406
  %v1412 = vadd.f32 %v1392, %v1406
  %v1413 = vadd.f32 %v1393, %v1406
  %v1414 = vadd.f32 %v1394, %v1406
  %v1415 = vadd.f32 %v1395, %v1406
  %v1416 = vadd.f32 %v1396, %v1406
  %v1417 = vadd.f32 %v1397, %v1406
  %v1418 = vadd.f32 %v1398, %v1406
  %v1419 = vadd.f32 %v1399, %v1406
  %v1420 = vadd.f32 %v1400, %v1406
  %v1421 = vadd.f32 %v1401, %v1406
  %v1422 = vadd.f32 %v1402, %v1406
  %v1423 = vadd.f32 %v1403, %v1406
  %v1424 = vld [vmem:[%s13] sm:$0xff]
  %v1425 = vld [vmem:[%s13 + $0x8] sm:$0xff]
  %v1426 = vld [vmem:[%s13 + $0x10] sm:$0xff]
  %v1427 = vld [vmem:[%s13 + $0x18] sm:$0xff]
  %v1428 = vld [vmem:[%s9] sm:$0xff]
  %v1429 = vld [vmem:[%s9 + $0x8] sm:$0xff]
  %v1430 = vld [vmem:[%s9 + $0x10] sm:$0xff]
  %v1431 = vld [vmem:[%s9 + $0x18] sm:$0xff]
  %v1433 = vsel %vm1186, %v1408, 0
  %v1436 = vsel %vm1186, %v1409, 0
  %v1439 = vsel %vm1186, %v1410, 0
  %v1442 = vsel %vm1186, %v1411, 0
  %v1445 = vsel %vm1186, %v1412, 0
  %v1448 = vsel %vm1186, %v1413, 0
  %v1451 = vsel %vm1186, %v1414, 0
  %v1454 = vsel %vm1186, %v1415, 0
  %v1457 = vsel %vm1186, %v1416, 0
  %v1460 = vsel %vm1186, %v1417, 0
  %v1463 = vsel %vm1186, %v1418, 0
  %v1466 = vsel %vm1186, %v1419, 0
  %v1469 = vsel %vm1186, %v1420, 0
  %v1472 = vsel %vm1186, %v1421, 0
  %v1475 = vsel %vm1186, %v1422, 0
  %v1478 = vsel %vm1186, %v1423, 0
  %1480 = vmatpush.msra.mxu0 0.0
  %1481 = vmatpush.msra.mxu0 0.0
  %1482 = vmatpush.msra.mxu0 0.0
  %1483 = vmatpush.msra.mxu0 0.0
  %1484 = vmatpush.msra.mxu0 0.0
  %1485 = vmatpush.msra.mxu0 0.0
  %1486 = vmatpush.msra.mxu0 0.0
  %1487 = vmatpush.msra.mxu0 0.0
  %1488 = vmatpush.msra.mxu0 0.0
  %1489 = vmatpush.msra.mxu0 0.0
  %1490 = vmatpush.msra.mxu0 0.0
  %1491 = vmatpush.msra.mxu0 0.0
  %1492 = vmatpush.msra.mxu0 %v1431
  %1493 = vmatpush.msra.mxu0 %v1430
  %1494 = vmatpush.msra.mxu0 %v1429
  %1495 = vmatpush.msra.mxu0 %v1428
  %1496 = vmatmul.f32.gmra.mxu0 %v1433
  %v1497 = vpop.f32.mrf.mxu0
  %v1498 = vadd.f32 0.0, %v1497
  %1499 = vmatmul.f32.gmra.mxu0 %v1436
  %v1500 = vpop.f32.mrf.mxu0
  %v1501 = vadd.f32 0.0, %v1500
  %1502 = vmatmul.f32.gmra.mxu0 %v1439
  %v1503 = vpop.f32.mrf.mxu0
  %v1504 = vadd.f32 0.0, %v1503
  %1505 = vmatmul.f32.gmra.mxu0 %v1442
  %v1506 = vpop.f32.mrf.mxu0
  %v1507 = vadd.f32 0.0, %v1506
  %1508 = vmatmul.f32.gmra.mxu0 %v1445
  %v1509 = vpop.f32.mrf.mxu0
  %v1510 = vadd.f32 0.0, %v1509
  %1511 = vmatmul.f32.gmra.mxu0 %v1448
  %v1512 = vpop.f32.mrf.mxu0
  %v1513 = vadd.f32 0.0, %v1512
  %1514 = vmatmul.f32.gmra.mxu0 %v1451
  %v1515 = vpop.f32.mrf.mxu0
  %v1516 = vadd.f32 0.0, %v1515
  %1517 = vmatmul.f32.gmra.mxu0 %v1454
  %v1518 = vpop.f32.mrf.mxu0
  %v1519 = vadd.f32 0.0, %v1518
  %1520 = vmatmul.f32.gmra.mxu0 %v1457
  %v1521 = vpop.f32.mrf.mxu0
  %v1522 = vadd.f32 0.0, %v1521
  %1523 = vmatmul.f32.gmra.mxu0 %v1460
  %v1524 = vpop.f32.mrf.mxu0
  %v1525 = vadd.f32 0.0, %v1524
  %1526 = vmatmul.f32.gmra.mxu0 %v1463
  %v1527 = vpop.f32.mrf.mxu0
  %v1528 = vadd.f32 0.0, %v1527
  %1529 = vmatmul.f32.gmra.mxu0 %v1466
  %v1530 = vpop.f32.mrf.mxu0
  %v1531 = vadd.f32 0.0, %v1530
  %1532 = vmatmul.f32.gmra.mxu0 %v1469
  %v1533 = vpop.f32.mrf.mxu0
  %v1534 = vadd.f32 0.0, %v1533
  %1535 = vmatmul.f32.gmra.mxu0 %v1472
  %v1536 = vpop.f32.mrf.mxu0
  %v1537 = vadd.f32 0.0, %v1536
  %1538 = vmatmul.f32.gmra.mxu0 %v1475
  %v1539 = vpop.f32.mrf.mxu0
  %v1540 = vadd.f32 0.0, %v1539
  %1541 = vmatmul.f32.gmra.mxu0 %v1478
  %v1542 = vpop.f32.mrf.mxu0
  %v1543 = vadd.f32 0.0, %v1542
  %1544 = vdwg.mxu0
  %v1545 = vpack.c.bf16 %v1501, %v1498
  %v1546 = vpack.c.bf16 %v1507, %v1504
  %v1547 = vpack.c.bf16 %v1513, %v1510
  %v1548 = vpack.c.bf16 %v1519, %v1516
  %v1549 = vpack.c.bf16 %v1525, %v1522
  %v1550 = vpack.c.bf16 %v1531, %v1528
  %v1551 = vpack.c.bf16 %v1537, %v1534
  %v1552 = vpack.c.bf16 %v1543, %v1540
  %1553 = vmatpush.bf16.msra.mxu0 %v1552
  %1554 = vmatpush.bf16.msra.mxu0 %v1551
  %1555 = vmatpush.bf16.msra.mxu0 %v1550
  %1556 = vmatpush.bf16.msra.mxu0 %v1549
  %1557 = vmatpush.bf16.msra.mxu0 %v1548
  %1558 = vmatpush.bf16.msra.mxu0 %v1547
  %1559 = vmatpush.bf16.msra.mxu0 %v1546
  %1560 = vmatpush.bf16.msra.mxu0 %v1545
  %1561 = vmatmul.bf16.gmra.mxu0 %v172
  %v1562 = vpop.f32.mrf.mxu0
  %v1563 = vadd.f32 0.0, %v1562
  %v1564 = vpop.f32.mrf.mxu0
  %v1565 = vadd.f32 0.0, %v1564
  %1566 = vmatmul.bf16.gmra.mxu0 %v173
  %v1567 = vpop.f32.mrf.mxu0
  %v1568 = vadd.f32 0.0, %v1567
  %v1569 = vpop.f32.mrf.mxu0
  %v1570 = vadd.f32 0.0, %v1569
  %1571 = vmatmul.bf16.gmra.mxu0 %v174
  %v1572 = vpop.f32.mrf.mxu0
  %v1573 = vadd.f32 0.0, %v1572
  %v1574 = vpop.f32.mrf.mxu0
  %v1575 = vadd.f32 0.0, %v1574
  %1576 = vmatmul.bf16.gmra.mxu0 %v175
  %v1577 = vpop.f32.mrf.mxu0
  %v1578 = vadd.f32 0.0, %v1577
  %v1579 = vpop.f32.mrf.mxu0
  %v1580 = vadd.f32 0.0, %v1579
  %1581 = vmatmul.bf16.gmra.mxu0 %v176
  %v1582 = vpop.f32.mrf.mxu0
  %v1583 = vadd.f32 0.0, %v1582
  %v1584 = vpop.f32.mrf.mxu0
  %v1585 = vadd.f32 0.0, %v1584
  %1586 = vmatmul.bf16.gmra.mxu0 %v177
  %v1587 = vpop.f32.mrf.mxu0
  %v1588 = vadd.f32 0.0, %v1587
  %v1589 = vpop.f32.mrf.mxu0
  %v1590 = vadd.f32 0.0, %v1589
  %1591 = vmatmul.bf16.gmra.mxu0 %v178
  %v1592 = vpop.f32.mrf.mxu0
  %v1593 = vadd.f32 0.0, %v1592
  %v1594 = vpop.f32.mrf.mxu0
  %v1595 = vadd.f32 0.0, %v1594
  %1596 = vmatmul.bf16.gmra.mxu0 %v179
  %v1597 = vpop.f32.mrf.mxu0
  %v1598 = vadd.f32 0.0, %v1597
  %v1599 = vpop.f32.mrf.mxu0
  %v1600 = vadd.f32 0.0, %v1599
  %1601 = vdwg.mxu0
  %1610 = vrot.lane.b32.xlu0 %v1545, 95
  %v1611 = vpop.permute.xlu0 %1610
  %1612 = vrot.lane.b32.xlu0 %v1546, 95
  %v1613 = vpop.permute.xlu0 %1612
  %1614 = vrot.lane.b32.xlu0 %v1547, 95
  %v1615 = vpop.permute.xlu0 %1614
  %1616 = vrot.lane.b32.xlu0 %v1548, 95
  %v1617 = vpop.permute.xlu0 %1616
  %1618 = vrot.lane.b32.xlu0 %v1549, 95
  %v1619 = vpop.permute.xlu0 %1618
  %1620 = vrot.lane.b32.xlu0 %v1550, 95
  %v1621 = vpop.permute.xlu0 %1620
  %1622 = vrot.lane.b32.xlu0 %v1551, 95
  %v1623 = vpop.permute.xlu0 %1622
  %1624 = vrot.lane.b32.xlu0 %v1552, 95
  %v1625 = vpop.permute.xlu0 %1624
  %1634 = vmatpush.bf16.msra.mxu0 %v1625
  %1635 = vmatpush.bf16.msra.mxu0 %v1623
  %1636 = vmatpush.bf16.msra.mxu0 %v1621
  %1637 = vmatpush.bf16.msra.mxu0 %v1619
  %1638 = vmatpush.bf16.msra.mxu0 %v1617
  %1639 = vmatpush.bf16.msra.mxu0 %v1615
  %1640 = vmatpush.bf16.msra.mxu0 %v1613
  %1641 = vmatpush.bf16.msra.mxu0 %v1611
  %1642 = vmatmul.bf16.gmra.mxu0 %v292
  %v1643 = vpop.f32.mrf.mxu0
  %v1644 = vadd.f32 0.0, %v1643
  %v1645 = vpop.f32.mrf.mxu0
  %v1646 = vadd.f32 0.0, %v1645
  %1647 = vmatmul.bf16.gmra.mxu0 %v293
  %v1648 = vpop.f32.mrf.mxu0
  %v1649 = vadd.f32 0.0, %v1648
  %v1650 = vpop.f32.mrf.mxu0
  %v1651 = vadd.f32 0.0, %v1650
  %1652 = vmatmul.bf16.gmra.mxu0 %v294
  %v1653 = vpop.f32.mrf.mxu0
  %v1654 = vadd.f32 0.0, %v1653
  %v1655 = vpop.f32.mrf.mxu0
  %v1656 = vadd.f32 0.0, %v1655
  %1657 = vmatmul.bf16.gmra.mxu0 %v295
  %v1658 = vpop.f32.mrf.mxu0
  %v1659 = vadd.f32 0.0, %v1658
  %v1660 = vpop.f32.mrf.mxu0
  %v1661 = vadd.f32 0.0, %v1660
  %1662 = vmatmul.bf16.gmra.mxu0 %v296
  %v1663 = vpop.f32.mrf.mxu0
  %v1664 = vadd.f32 0.0, %v1663
  %v1665 = vpop.f32.mrf.mxu0
  %v1666 = vadd.f32 0.0, %v1665
  %1667 = vmatmul.bf16.gmra.mxu0 %v297
  %v1668 = vpop.f32.mrf.mxu0
  %v1669 = vadd.f32 0.0, %v1668
  %v1670 = vpop.f32.mrf.mxu0
  %v1671 = vadd.f32 0.0, %v1670
  %1672 = vmatmul.bf16.gmra.mxu0 %v298
  %v1673 = vpop.f32.mrf.mxu0
  %v1674 = vadd.f32 0.0, %v1673
  %v1675 = vpop.f32.mrf.mxu0
  %v1676 = vadd.f32 0.0, %v1675
  %1677 = vmatmul.bf16.gmra.mxu0 %v299
  %v1678 = vpop.f32.mrf.mxu0
  %v1679 = vadd.f32 0.0, %v1678
  %v1680 = vpop.f32.mrf.mxu0
  %v1681 = vadd.f32 0.0, %v1680
  %1682 = vdwg.mxu0
  %1699 = vrot.lane.b32.xlu0 %v1644, 32
  %v1700 = vpop.permute.xlu0 %1699
  %1701 = vrot.lane.b32.xlu0 %v1646, 32
  %v1702 = vpop.permute.xlu0 %1701
  %1703 = vrot.lane.b32.xlu0 %v1649, 32
  %v1704 = vpop.permute.xlu0 %1703
  %1705 = vrot.lane.b32.xlu0 %v1651, 32
  %v1706 = vpop.permute.xlu0 %1705
  %1707 = vrot.lane.b32.xlu0 %v1654, 32
  %v1708 = vpop.permute.xlu0 %1707
  %1709 = vrot.lane.b32.xlu0 %v1656, 32
  %v1710 = vpop.permute.xlu0 %1709
  %1711 = vrot.lane.b32.xlu0 %v1659, 32
  %v1712 = vpop.permute.xlu0 %1711
  %1713 = vrot.lane.b32.xlu0 %v1661, 32
  %v1714 = vpop.permute.xlu0 %1713
  %1715 = vrot.lane.b32.xlu0 %v1664, 32
  %v1716 = vpop.permute.xlu0 %1715
  %1717 = vrot.lane.b32.xlu0 %v1666, 32
  %v1718 = vpop.permute.xlu0 %1717
  %1719 = vrot.lane.b32.xlu0 %v1669, 32
  %v1720 = vpop.permute.xlu0 %1719
  %1721 = vrot.lane.b32.xlu0 %v1671, 32
  %v1722 = vpop.permute.xlu0 %1721
  %1723 = vrot.lane.b32.xlu0 %v1674, 32
  %v1724 = vpop.permute.xlu0 %1723
  %1725 = vrot.lane.b32.xlu0 %v1676, 32
  %v1726 = vpop.permute.xlu0 %1725
  %1727 = vrot.lane.b32.xlu0 %v1679, 32
  %v1728 = vpop.permute.xlu0 %1727
  %1729 = vrot.lane.b32.xlu0 %v1681, 32
  %v1730 = vpop.permute.xlu0 %1729
  %v1747 = vadd.f32 %v1563, %v1700
  %v1748 = vadd.f32 %v1565, %v1702
  %v1749 = vadd.f32 %v1568, %v1704
  %v1750 = vadd.f32 %v1570, %v1706
  %v1751 = vadd.f32 %v1573, %v1708
  %v1752 = vadd.f32 %v1575, %v1710
  %v1753 = vadd.f32 %v1578, %v1712
  %v1754 = vadd.f32 %v1580, %v1714
  %v1755 = vadd.f32 %v1583, %v1716
  %v1756 = vadd.f32 %v1585, %v1718
  %v1757 = vadd.f32 %v1588, %v1720
  %v1758 = vadd.f32 %v1590, %v1722
  %v1759 = vadd.f32 %v1593, %v1724
  %v1760 = vadd.f32 %v1595, %v1726
  %v1761 = vadd.f32 %v1598, %v1728
  %v1762 = vadd.f32 %v1600, %v1730
  %1763 = vrot.lane.b32.xlu0 %v479, 31
  %v1764 = vpop.permute.xlu0 %1763
  %1765 = vrot.lane.b32.xlu0 %v482, 31
  %v1766 = vpop.permute.xlu0 %1765
  %1767 = vrot.lane.b32.xlu0 %v485, 31
  %v1768 = vpop.permute.xlu0 %1767
  %1769 = vrot.lane.b32.xlu0 %v488, 31
  %v1770 = vpop.permute.xlu0 %1769
  %1771 = vrot.lane.b32.xlu0 %v491, 31
  %v1772 = vpop.permute.xlu0 %1771
  %1773 = vrot.lane.b32.xlu0 %v494, 31
  %v1774 = vpop.permute.xlu0 %1773
  %1775 = vrot.lane.b32.xlu0 %v497, 31
  %v1776 = vpop.permute.xlu0 %1775
  %1777 = vrot.lane.b32.xlu0 %v500, 31
  %v1778 = vpop.permute.xlu0 %1777
  %1779 = vrot.lane.b32.xlu0 %v503, 31
  %v1780 = vpop.permute.xlu0 %1779
  %1781 = vrot.lane.b32.xlu0 %v506, 31
  %v1782 = vpop.permute.xlu0 %1781
  %1783 = vrot.lane.b32.xlu0 %v509, 31
  %v1784 = vpop.permute.xlu0 %1783
  %1785 = vrot.lane.b32.xlu0 %v512, 31
  %v1786 = vpop.permute.xlu0 %1785
  %1787 = vrot.lane.b32.xlu0 %v515, 31
  %v1788 = vpop.permute.xlu0 %1787
  %1789 = vrot.lane.b32.xlu0 %v518, 31
  %v1790 = vpop.permute.xlu0 %1789
  %1791 = vrot.lane.b32.xlu0 %v521, 31
  %v1792 = vpop.permute.xlu0 %1791
  %1793 = vrot.lane.b32.xlu0 %v524, 31
  %v1794 = vpop.permute.xlu0 %1793
  %v1811 = vadd.f32 %v1747, %v1764
  %v1812 = vadd.f32 %v1748, %v1766
  %v1813 = vadd.f32 %v1749, %v1768
  %v1814 = vadd.f32 %v1750, %v1770
  %v1815 = vadd.f32 %v1751, %v1772
  %v1816 = vadd.f32 %v1752, %v1774
  %v1817 = vadd.f32 %v1753, %v1776
  %v1818 = vadd.f32 %v1754, %v1778
  %v1819 = vadd.f32 %v1755, %v1780
  %v1820 = vadd.f32 %v1756, %v1782
  %v1821 = vadd.f32 %v1757, %v1784
  %v1822 = vadd.f32 %v1758, %v1786
  %v1823 = vadd.f32 %v1759, %v1788
  %v1824 = vadd.f32 %v1760, %v1790
  %v1825 = vadd.f32 %v1761, %v1792
  %v1826 = vadd.f32 %v1762, %v1794
  %vm1827 = vcmp.gt.f32.partialorder %v1811, 0.0
  %vm1828 = vcmp.gt.f32.partialorder %v1812, 0.0
  %vm1829 = vcmp.gt.f32.partialorder %v1813, 0.0
  %vm1830 = vcmp.gt.f32.partialorder %v1814, 0.0
  %vm1831 = vcmp.gt.f32.partialorder %v1815, 0.0
  %vm1832 = vcmp.gt.f32.partialorder %v1816, 0.0
  %vm1833 = vcmp.gt.f32.partialorder %v1817, 0.0
  %vm1834 = vcmp.gt.f32.partialorder %v1818, 0.0
  %vm1835 = vcmp.gt.f32.partialorder %v1819, 0.0
  %vm1836 = vcmp.gt.f32.partialorder %v1820, 0.0
  %vm1837 = vcmp.gt.f32.partialorder %v1821, 0.0
  %vm1838 = vcmp.gt.f32.partialorder %v1822, 0.0
  %vm1839 = vcmp.gt.f32.partialorder %v1823, 0.0
  %vm1840 = vcmp.gt.f32.partialorder %v1824, 0.0
  %vm1841 = vcmp.gt.f32.partialorder %v1825, 0.0
  %vm1842 = vcmp.gt.f32.partialorder %v1826, 0.0
  %v1843 = vmul.f32 %v1811, 0.2
  %v1844 = vmul.f32 %v1812, 0.2
  %v1845 = vmul.f32 %v1813, 0.2
  %v1846 = vmul.f32 %v1814, 0.2
  %v1847 = vmul.f32 %v1815, 0.2
  %v1848 = vmul.f32 %v1816, 0.2
  %v1849 = vmul.f32 %v1817, 0.2
  %v1850 = vmul.f32 %v1818, 0.2
  %v1851 = vmul.f32 %v1819, 0.2
  %v1852 = vmul.f32 %v1820, 0.2
  %v1853 = vmul.f32 %v1821, 0.2
  %v1854 = vmul.f32 %v1822, 0.2
  %v1855 = vmul.f32 %v1823, 0.2
  %v1856 = vmul.f32 %v1824, 0.2
  %v1857 = vmul.f32 %v1825, 0.2
  %v1858 = vmul.f32 %v1826, 0.2
  %v1859 = vsel %vm1827, %v1811, %v1843
  %v1860 = vsel %vm1828, %v1812, %v1844
  %v1861 = vsel %vm1829, %v1813, %v1845
  %v1862 = vsel %vm1830, %v1814, %v1846
  %v1863 = vsel %vm1831, %v1815, %v1847
  %v1864 = vsel %vm1832, %v1816, %v1848
  %v1865 = vsel %vm1833, %v1817, %v1849
  %v1866 = vsel %vm1834, %v1818, %v1850
  %v1867 = vsel %vm1835, %v1819, %v1851
  %v1868 = vsel %vm1836, %v1820, %v1852
  %v1869 = vsel %vm1837, %v1821, %v1853
  %v1870 = vsel %vm1838, %v1822, %v1854
  %v1871 = vsel %vm1839, %v1823, %v1855
  %v1872 = vsel %vm1840, %v1824, %v1856
  %v1873 = vsel %vm1841, %v1825, %v1857
  %v1874 = vsel %vm1842, %v1826, %v1858
  %v1875 = vsel %vm988, %v1859, -inf
  %v1876 = vsel %vm988, %v1860, -inf
  %v1877 = vsel %vm988, %v1861, -inf
  %v1878 = vsel %vm988, %v1862, -inf
  %v1879 = vsel %vm988, %v1863, -inf
  %v1880 = vmax.f32 %v1875, %v1879
  %v1881 = vsel %vm988, %v1864, -inf
  %v1882 = vmax.f32 %v1876, %v1881
  %v1883 = vsel %vm988, %v1865, -inf
  %v1884 = vmax.f32 %v1877, %v1883
  %v1885 = vsel %vm988, %v1866, -inf
  %v1886 = vmax.f32 %v1878, %v1885
  %v1887 = vsel %vm988, %v1867, -inf
  %v1888 = vmax.f32 %v1880, %v1887
  %v1889 = vsel %vm988, %v1868, -inf
  %v1890 = vmax.f32 %v1882, %v1889
  %v1891 = vsel %vm988, %v1869, -inf
  %v1892 = vmax.f32 %v1884, %v1891
  %v1893 = vsel %vm988, %v1870, -inf
  %v1894 = vmax.f32 %v1886, %v1893
  %v1895 = vsel %vm988, %v1871, -inf
  %v1896 = vmax.f32 %v1888, %v1895
  %v1897 = vsel %vm988, %v1872, -inf
  %v1898 = vmax.f32 %v1890, %v1897
  %v1899 = vsel %vm988, %v1873, -inf
  %v1900 = vmax.f32 %v1892, %v1899
  %v1901 = vsel %vm988, %v1874, -inf
  %v1902 = vmax.f32 %v1894, %v1901
  %v1903 = vmax.f32 %v1896, %v1898
  %v1904 = vmax.f32 %v1900, %v1902
  %v1905 = vmax.f32 %v1903, %v1904
  %v1906 = vrot.slane %v1905, 4
  %v1907 = vmax.f32 %v1905, %v1906
  %v1908 = vrot.slane %v1907, 2
  %v1909 = vmax.f32 %v1907, %v1908
  %v1910 = vrot.slane %v1909, 1
  %v1911 = vmax.f32 %v1909, %v1910
  %v1912 = vsub.f32 %v1859, %v1911
  %v1913 = vsub.f32 %v1860, %v1911
  %v1914 = vsub.f32 %v1861, %v1911
  %v1915 = vsub.f32 %v1862, %v1911
  %v1916 = vsub.f32 %v1863, %v1911
  %v1917 = vsub.f32 %v1864, %v1911
  %v1918 = vsub.f32 %v1865, %v1911
  %v1919 = vsub.f32 %v1866, %v1911
  %v1920 = vsub.f32 %v1867, %v1911
  %v1921 = vsub.f32 %v1868, %v1911
  %v1922 = vsub.f32 %v1869, %v1911
  %v1923 = vsub.f32 %v1870, %v1911
  %v1924 = vsub.f32 %v1871, %v1911
  %v1925 = vsub.f32 %v1872, %v1911
  %v1926 = vsub.f32 %v1873, %v1911
  %v1927 = vsub.f32 %v1874, %v1911
  %v1928 = vmax.f32 %v1912, -60.0
  %v1929 = vmax.f32 %v1913, -60.0
  %v1930 = vmax.f32 %v1914, -60.0
  %v1931 = vmax.f32 %v1915, -60.0
  %v1932 = vmax.f32 %v1916, -60.0
  %v1933 = vmax.f32 %v1917, -60.0
  %v1934 = vmax.f32 %v1918, -60.0
  %v1935 = vmax.f32 %v1919, -60.0
  %v1936 = vmax.f32 %v1920, -60.0
  %v1937 = vmax.f32 %v1921, -60.0
  %v1938 = vmax.f32 %v1922, -60.0
  %v1939 = vmax.f32 %v1923, -60.0
  %v1940 = vmax.f32 %v1924, -60.0
  %v1941 = vmax.f32 %v1925, -60.0
  %v1942 = vmax.f32 %v1926, -60.0
  %v1943 = vmax.f32 %v1927, -60.0
  %v1944 = vmul.f32 %v1928, 1.442695
  %v1945 = vpow.pop %v1944
  %v1946 = vmul.f32 %v1929, 1.442695
  %v1947 = vpow.pop %v1946
  %v1948 = vmul.f32 %v1930, 1.442695
  %v1949 = vpow.pop %v1948
  %v1950 = vmul.f32 %v1931, 1.442695
  %v1951 = vpow.pop %v1950
  %v1952 = vmul.f32 %v1932, 1.442695
  %v1953 = vpow.pop %v1952
  %v1954 = vmul.f32 %v1933, 1.442695
  %v1955 = vpow.pop %v1954
  %v1956 = vmul.f32 %v1934, 1.442695
  %v1957 = vpow.pop %v1956
  %v1958 = vmul.f32 %v1935, 1.442695
  %v1959 = vpow.pop %v1958
  %v1960 = vmul.f32 %v1936, 1.442695
  %v1961 = vpow.pop %v1960
  %v1962 = vmul.f32 %v1937, 1.442695
  %v1963 = vpow.pop %v1962
  %v1964 = vmul.f32 %v1938, 1.442695
  %v1965 = vpow.pop %v1964
  %v1966 = vmul.f32 %v1939, 1.442695
  %v1967 = vpow.pop %v1966
  %v1968 = vmul.f32 %v1940, 1.442695
  %v1969 = vpow.pop %v1968
  %v1970 = vmul.f32 %v1941, 1.442695
  %v1971 = vpow.pop %v1970
  %v1972 = vmul.f32 %v1942, 1.442695
  %v1973 = vpow.pop %v1972
  %v1974 = vmul.f32 %v1943, 1.442695
  %v1975 = vpow.pop %v1974
  %1977 = vset.pattern.permute.xlu0 32
  %1978 = vperm.xlu0 %1977, %v1945
  %v1979 = vpop.permute.xlu0 %1978
  %1982 = vset.pattern.permute.xlu0 32
  %1983 = vperm.xlu0 %1982, %v1947
  %v1984 = vpop.permute.xlu0 %1983
  %1987 = vset.pattern.permute.xlu0 32
  %1988 = vperm.xlu0 %1987, %v1949
  %v1989 = vpop.permute.xlu0 %1988
  %1992 = vset.pattern.permute.xlu0 32
  %1993 = vperm.xlu0 %1992, %v1951
  %v1994 = vpop.permute.xlu0 %1993
  %1997 = vset.pattern.permute.xlu0 32
  %1998 = vperm.xlu0 %1997, %v1953
  %v1999 = vpop.permute.xlu0 %1998
  %2002 = vset.pattern.permute.xlu0 32
  %2003 = vperm.xlu0 %2002, %v1955
  %v2004 = vpop.permute.xlu0 %2003
  %2007 = vset.pattern.permute.xlu0 32
  %2008 = vperm.xlu0 %2007, %v1957
  %v2009 = vpop.permute.xlu0 %2008
  %2012 = vset.pattern.permute.xlu0 32
  %2013 = vperm.xlu0 %2012, %v1959
  %v2014 = vpop.permute.xlu0 %2013
  %2017 = vset.pattern.permute.xlu0 32
  %2018 = vperm.xlu0 %2017, %v1961
  %v2019 = vpop.permute.xlu0 %2018
  %2022 = vset.pattern.permute.xlu0 32
  %2023 = vperm.xlu0 %2022, %v1963
  %v2024 = vpop.permute.xlu0 %2023
  %2027 = vset.pattern.permute.xlu0 32
  %2028 = vperm.xlu0 %2027, %v1965
  %v2029 = vpop.permute.xlu0 %2028
  %2032 = vset.pattern.permute.xlu0 32
  %2033 = vperm.xlu0 %2032, %v1967
  %v2034 = vpop.permute.xlu0 %2033
  %2037 = vset.pattern.permute.xlu0 32
  %2038 = vperm.xlu0 %2037, %v1969
  %v2039 = vpop.permute.xlu0 %2038
  %2042 = vset.pattern.permute.xlu0 32
  %2043 = vperm.xlu0 %2042, %v1971
  %v2044 = vpop.permute.xlu0 %2043
  %2047 = vset.pattern.permute.xlu0 32
  %2048 = vperm.xlu0 %2047, %v1973
  %v2049 = vpop.permute.xlu0 %2048
  %2052 = vset.pattern.permute.xlu0 32
  %2053 = vperm.xlu0 %2052, %v1975
  %v2054 = vpop.permute.xlu0 %2053
  %v2056 = vmul.f32 %v1979, %v1563
  %v2057 = vmul.f32 %v1984, %v1565
  %v2058 = vmul.f32 %v1989, %v1568
  %v2059 = vmul.f32 %v1994, %v1570
  %v2060 = vmul.f32 %v1999, %v1573
  %v2061 = vmul.f32 %v2004, %v1575
  %v2062 = vmul.f32 %v2009, %v1578
  %v2063 = vmul.f32 %v2014, %v1580
  %v2064 = vmul.f32 %v2019, %v1583
  %v2065 = vmul.f32 %v2024, %v1585
  %v2066 = vmul.f32 %v2029, %v1588
  %v2067 = vmul.f32 %v2034, %v1590
  %v2068 = vmul.f32 %v2039, %v1593
  %v2069 = vmul.f32 %v2044, %v1595
  %v2070 = vmul.f32 %v2049, %v1598
  %v2071 = vmul.f32 %v2054, %v1600
  %v2072 = vsel %vm1186, %v2056, %v1945
  %v2073 = vsel %vm1186, %v2057, %v1947
  %v2074 = vsel %vm1186, %v2058, %v1949
  %v2075 = vsel %vm1186, %v2059, %v1951
  %v2076 = vsel %vm1186, %v2060, %v1953
  %v2077 = vsel %vm1186, %v2061, %v1955
  %v2078 = vsel %vm1186, %v2062, %v1957
  %v2079 = vsel %vm1186, %v2063, %v1959
  %v2080 = vsel %vm1186, %v2064, %v1961
  %v2081 = vsel %vm1186, %v2065, %v1963
  %v2082 = vsel %vm1186, %v2066, %v1965
  %v2083 = vsel %vm1186, %v2067, %v1967
  %v2084 = vsel %vm1186, %v2068, %v1969
  %v2085 = vsel %vm1186, %v2069, %v1971
  %v2086 = vsel %vm1186, %v2070, %v1973
  %v2087 = vsel %vm1186, %v2071, %v1975
  %v2088 = vpack.c.bf16 %v2073, %v2072
  %v2089 = vpack.c.bf16 %v2075, %v2074
  %v2090 = vpack.c.bf16 %v2077, %v2076
  %v2091 = vpack.c.bf16 %v2079, %v2078
  %v2092 = vpack.c.bf16 %v2081, %v2080
  %v2093 = vpack.c.bf16 %v2083, %v2082
  %v2094 = vpack.c.bf16 %v2085, %v2084
  %v2095 = vpack.c.bf16 %v2087, %v2086
  %2096 = vmatpush.bf16.msra.mxu0 %v2095
  %2097 = vmatpush.bf16.msra.mxu0 %v2094
  %2098 = vmatpush.bf16.msra.mxu0 %v2093
  %2099 = vmatpush.bf16.msra.mxu0 %v2092
  %2100 = vmatpush.bf16.msra.mxu0 %v2091
  %2101 = vmatpush.bf16.msra.mxu0 %v2090
  %2102 = vmatpush.bf16.msra.mxu0 %v2089
  %2103 = vmatpush.bf16.msra.mxu0 %v2088
  %2104 = vmatmul.bf16.gmra.mxu0 %v367
  %v2105 = vpop.f32.mrf.mxu0
  %v2106 = vadd.f32 0.0, %v2105
  %v2107 = vpop.f32.mrf.mxu0
  %v2108 = vadd.f32 0.0, %v2107
  %2109 = vmatmul.bf16.gmra.mxu0 %v368
  %v2110 = vpop.f32.mrf.mxu0
  %v2111 = vadd.f32 0.0, %v2110
  %v2112 = vpop.f32.mrf.mxu0
  %v2113 = vadd.f32 0.0, %v2112
  %2114 = vmatmul.bf16.gmra.mxu0 %v369
  %v2115 = vpop.f32.mrf.mxu0
  %v2116 = vadd.f32 0.0, %v2115
  %v2117 = vpop.f32.mrf.mxu0
  %v2118 = vadd.f32 0.0, %v2117
  %2119 = vmatmul.bf16.gmra.mxu0 %v370
  %v2120 = vpop.f32.mrf.mxu0
  %v2121 = vadd.f32 0.0, %v2120
  %v2122 = vpop.f32.mrf.mxu0
  %v2123 = vadd.f32 0.0, %v2122
  %2124 = vmatmul.bf16.gmra.mxu0 %v371
  %v2125 = vpop.f32.mrf.mxu0
  %v2126 = vadd.f32 0.0, %v2125
  %v2127 = vpop.f32.mrf.mxu0
  %v2128 = vadd.f32 0.0, %v2127
  %2129 = vmatmul.bf16.gmra.mxu0 %v372
  %v2130 = vpop.f32.mrf.mxu0
  %v2131 = vadd.f32 0.0, %v2130
  %v2132 = vpop.f32.mrf.mxu0
  %v2133 = vadd.f32 0.0, %v2132
  %2134 = vmatmul.bf16.gmra.mxu0 %v373
  %v2135 = vpop.f32.mrf.mxu0
  %v2136 = vadd.f32 0.0, %v2135
  %v2137 = vpop.f32.mrf.mxu0
  %v2138 = vadd.f32 0.0, %v2137
  %2139 = vmatmul.bf16.gmra.mxu0 %v374
  %v2140 = vpop.f32.mrf.mxu0
  %v2141 = vadd.f32 0.0, %v2140
  %v2142 = vpop.f32.mrf.mxu0
  %v2143 = vadd.f32 0.0, %v2142
  %2144 = vdwg.mxu0
  %v2145 = vrcp.pop %v2106
  %v2146 = vrcp.pop %v2108
  %v2147 = vrcp.pop %v2111
  %v2148 = vrcp.pop %v2113
  %v2149 = vrcp.pop %v2116
  %v2150 = vrcp.pop %v2118
  %v2151 = vrcp.pop %v2121
  %v2152 = vrcp.pop %v2123
  %v2153 = vrcp.pop %v2126
  %v2154 = vrcp.pop %v2128
  %v2155 = vrcp.pop %v2131
  %v2156 = vrcp.pop %v2133
  %v2157 = vrcp.pop %v2136
  %v2158 = vrcp.pop %v2138
  %v2159 = vrcp.pop %v2141
  %v2160 = vrcp.pop %v2143
  %vm2161 = vcmp.gt.f32.partialorder %v2106, 0.0
  %vm2162 = vcmp.gt.f32.partialorder %v2108, 0.0
  %vm2163 = vcmp.gt.f32.partialorder %v2111, 0.0
  %vm2164 = vcmp.gt.f32.partialorder %v2113, 0.0
  %vm2165 = vcmp.gt.f32.partialorder %v2116, 0.0
  %vm2166 = vcmp.gt.f32.partialorder %v2118, 0.0
  %vm2167 = vcmp.gt.f32.partialorder %v2121, 0.0
  %vm2168 = vcmp.gt.f32.partialorder %v2123, 0.0
  %vm2169 = vcmp.gt.f32.partialorder %v2126, 0.0
  %vm2170 = vcmp.gt.f32.partialorder %v2128, 0.0
  %vm2171 = vcmp.gt.f32.partialorder %v2131, 0.0
  %vm2172 = vcmp.gt.f32.partialorder %v2133, 0.0
  %vm2173 = vcmp.gt.f32.partialorder %v2136, 0.0
  %vm2174 = vcmp.gt.f32.partialorder %v2138, 0.0
  %vm2175 = vcmp.gt.f32.partialorder %v2141, 0.0
  %vm2176 = vcmp.gt.f32.partialorder %v2143, 0.0
  %v2177 = vsel %vm2161, %v2145, 0.0
  %v2178 = vsel %vm2162, %v2146, 0.0
  %v2179 = vsel %vm2163, %v2147, 0.0
  %v2180 = vsel %vm2164, %v2148, 0.0
  %v2181 = vsel %vm2165, %v2149, 0.0
  %v2182 = vsel %vm2166, %v2150, 0.0
  %v2183 = vsel %vm2167, %v2151, 0.0
  %v2184 = vsel %vm2168, %v2152, 0.0
  %v2185 = vsel %vm2169, %v2153, 0.0
  %v2186 = vsel %vm2170, %v2154, 0.0
  %v2187 = vsel %vm2171, %v2155, 0.0
  %v2188 = vsel %vm2172, %v2156, 0.0
  %v2189 = vsel %vm2173, %v2157, 0.0
  %v2190 = vsel %vm2174, %v2158, 0.0
  %v2191 = vsel %vm2175, %v2159, 0.0
  %v2192 = vsel %vm2176, %v2160, 0.0
  %2194 = vset.pattern.permute.xlu0 32
  %2195 = vperm.xlu0 %2194, %v2177
  %v2196 = vpop.permute.xlu0 %2195
  %2199 = vset.pattern.permute.xlu0 32
  %2200 = vperm.xlu0 %2199, %v2178
  %v2201 = vpop.permute.xlu0 %2200
  %2204 = vset.pattern.permute.xlu0 32
  %2205 = vperm.xlu0 %2204, %v2179
  %v2206 = vpop.permute.xlu0 %2205
  %2209 = vset.pattern.permute.xlu0 32
  %2210 = vperm.xlu0 %2209, %v2180
  %v2211 = vpop.permute.xlu0 %2210
  %2214 = vset.pattern.permute.xlu0 32
  %2215 = vperm.xlu0 %2214, %v2181
  %v2216 = vpop.permute.xlu0 %2215
  %2219 = vset.pattern.permute.xlu0 32
  %2220 = vperm.xlu0 %2219, %v2182
  %v2221 = vpop.permute.xlu0 %2220
  %2224 = vset.pattern.permute.xlu0 32
  %2225 = vperm.xlu0 %2224, %v2183
  %v2226 = vpop.permute.xlu0 %2225
  %2229 = vset.pattern.permute.xlu0 32
  %2230 = vperm.xlu0 %2229, %v2184
  %v2231 = vpop.permute.xlu0 %2230
  %2234 = vset.pattern.permute.xlu0 32
  %2235 = vperm.xlu0 %2234, %v2185
  %v2236 = vpop.permute.xlu0 %2235
  %2239 = vset.pattern.permute.xlu0 32
  %2240 = vperm.xlu0 %2239, %v2186
  %v2241 = vpop.permute.xlu0 %2240
  %2244 = vset.pattern.permute.xlu0 32
  %2245 = vperm.xlu0 %2244, %v2187
  %v2246 = vpop.permute.xlu0 %2245
  %2249 = vset.pattern.permute.xlu0 32
  %2250 = vperm.xlu0 %2249, %v2188
  %v2251 = vpop.permute.xlu0 %2250
  %2254 = vset.pattern.permute.xlu0 32
  %2255 = vperm.xlu0 %2254, %v2189
  %v2256 = vpop.permute.xlu0 %2255
  %2259 = vset.pattern.permute.xlu0 32
  %2260 = vperm.xlu0 %2259, %v2190
  %v2261 = vpop.permute.xlu0 %2260
  %2264 = vset.pattern.permute.xlu0 32
  %2265 = vperm.xlu0 %2264, %v2191
  %v2266 = vpop.permute.xlu0 %2265
  %2269 = vset.pattern.permute.xlu0 32
  %2270 = vperm.xlu0 %2269, %v2192
  %v2271 = vpop.permute.xlu0 %2270
  %v2273 = vmul.f32 %v2106, %v2196
  %v2274 = vmul.f32 %v2108, %v2201
  %v2275 = vmul.f32 %v2111, %v2206
  %v2276 = vmul.f32 %v2113, %v2211
  %v2277 = vmul.f32 %v2116, %v2216
  %v2278 = vmul.f32 %v2118, %v2221
  %v2279 = vmul.f32 %v2121, %v2226
  %v2280 = vmul.f32 %v2123, %v2231
  %v2281 = vmul.f32 %v2126, %v2236
  %v2282 = vmul.f32 %v2128, %v2241
  %v2283 = vmul.f32 %v2131, %v2246
  %v2284 = vmul.f32 %v2133, %v2251
  %v2285 = vmul.f32 %v2136, %v2256
  %v2286 = vmul.f32 %v2138, %v2261
  %v2287 = vmul.f32 %v2141, %v2266
  %v2288 = vmul.f32 %v2143, %v2271
  %v2289 = vld [vmem:[%s10] sm:$0x1]
  %v2291 = vperm.slane %v2289, 0
  %v2293 = vadd.f32 %v2273, %v2291
  %v2294 = vadd.f32 %v2274, %v2291
  %v2295 = vadd.f32 %v2275, %v2291
  %v2296 = vadd.f32 %v2276, %v2291
  %v2297 = vadd.f32 %v2277, %v2291
  %v2298 = vadd.f32 %v2278, %v2291
  %v2299 = vadd.f32 %v2279, %v2291
  %v2300 = vadd.f32 %v2280, %v2291
  %v2301 = vadd.f32 %v2281, %v2291
  %v2302 = vadd.f32 %v2282, %v2291
  %v2303 = vadd.f32 %v2283, %v2291
  %v2304 = vadd.f32 %v2284, %v2291
  %v2305 = vadd.f32 %v2285, %v2291
  %v2306 = vadd.f32 %v2286, %v2291
  %v2307 = vadd.f32 %v2287, %v2291
  %v2308 = vadd.f32 %v2288, %v2291
  %v2309 = vld [vmem:[%s14] sm:$0xff]
  %v2310 = vld [vmem:[%s14 + $0x8] sm:$0xff]
  %v2311 = vld [vmem:[%s14 + $0x10] sm:$0xff]
  %v2312 = vld [vmem:[%s14 + $0x18] sm:$0xff]
  %v2314 = vsel %vm1186, %v2293, 0
  %v2317 = vsel %vm1186, %v2294, 0
  %v2320 = vsel %vm1186, %v2295, 0
  %v2323 = vsel %vm1186, %v2296, 0
  %v2326 = vsel %vm1186, %v2297, 0
  %v2329 = vsel %vm1186, %v2298, 0
  %v2332 = vsel %vm1186, %v2299, 0
  %v2335 = vsel %vm1186, %v2300, 0
  %v2338 = vsel %vm1186, %v2301, 0
  %v2341 = vsel %vm1186, %v2302, 0
  %v2344 = vsel %vm1186, %v2303, 0
  %v2347 = vsel %vm1186, %v2304, 0
  %v2350 = vsel %vm1186, %v2305, 0
  %v2353 = vsel %vm1186, %v2306, 0
  %v2356 = vsel %vm1186, %v2307, 0
  %v2359 = vsel %vm1186, %v2308, 0
  %2361 = vmatpush.msra.mxu0 0.0
  %2362 = vmatpush.msra.mxu0 0.0
  %2363 = vmatpush.msra.mxu0 0.0
  %2364 = vmatpush.msra.mxu0 0.0
  %2365 = vmatpush.msra.mxu0 0.0
  %2366 = vmatpush.msra.mxu0 0.0
  %2367 = vmatpush.msra.mxu0 0.0
  %2368 = vmatpush.msra.mxu0 0.0
  %2369 = vmatpush.msra.mxu0 0.0
  %2370 = vmatpush.msra.mxu0 0.0
  %2371 = vmatpush.msra.mxu0 0.0
  %2372 = vmatpush.msra.mxu0 0.0
  %2373 = vmatpush.msra.mxu0 %v2312
  %2374 = vmatpush.msra.mxu0 %v2311
  %2375 = vmatpush.msra.mxu0 %v2310
  %2376 = vmatpush.msra.mxu0 %v2309
  %2377 = vmatmul.f32.gmra.mxu0 %v2314
  %v2378 = vpop.f32.mrf.mxu0
  %v2379 = vadd.f32 0.0, %v2378
  %2380 = vmatmul.f32.gmra.mxu0 %v2317
  %v2381 = vpop.f32.mrf.mxu0
  %v2382 = vadd.f32 0.0, %v2381
  %2383 = vmatmul.f32.gmra.mxu0 %v2320
  %v2384 = vpop.f32.mrf.mxu0
  %v2385 = vadd.f32 0.0, %v2384
  %2386 = vmatmul.f32.gmra.mxu0 %v2323
  %v2387 = vpop.f32.mrf.mxu0
  %v2388 = vadd.f32 0.0, %v2387
  %2389 = vmatmul.f32.gmra.mxu0 %v2326
  %v2390 = vpop.f32.mrf.mxu0
  %v2391 = vadd.f32 0.0, %v2390
  %2392 = vmatmul.f32.gmra.mxu0 %v2329
  %v2393 = vpop.f32.mrf.mxu0
  %v2394 = vadd.f32 0.0, %v2393
  %2395 = vmatmul.f32.gmra.mxu0 %v2332
  %v2396 = vpop.f32.mrf.mxu0
  %v2397 = vadd.f32 0.0, %v2396
  %2398 = vmatmul.f32.gmra.mxu0 %v2335
  %v2399 = vpop.f32.mrf.mxu0
  %v2400 = vadd.f32 0.0, %v2399
  %2401 = vmatmul.f32.gmra.mxu0 %v2338
  %v2402 = vpop.f32.mrf.mxu0
  %v2403 = vadd.f32 0.0, %v2402
  %2404 = vmatmul.f32.gmra.mxu0 %v2341
  %v2405 = vpop.f32.mrf.mxu0
  %v2406 = vadd.f32 0.0, %v2405
  %2407 = vmatmul.f32.gmra.mxu0 %v2344
  %v2408 = vpop.f32.mrf.mxu0
  %v2409 = vadd.f32 0.0, %v2408
  %2410 = vmatmul.f32.gmra.mxu0 %v2347
  %v2411 = vpop.f32.mrf.mxu0
  %v2412 = vadd.f32 0.0, %v2411
  %2413 = vmatmul.f32.gmra.mxu0 %v2350
  %v2414 = vpop.f32.mrf.mxu0
  %v2415 = vadd.f32 0.0, %v2414
  %2416 = vmatmul.f32.gmra.mxu0 %v2353
  %v2417 = vpop.f32.mrf.mxu0
  %v2418 = vadd.f32 0.0, %v2417
  %2419 = vmatmul.f32.gmra.mxu0 %v2356
  %v2420 = vpop.f32.mrf.mxu0
  %v2421 = vadd.f32 0.0, %v2420
  %2422 = vmatmul.f32.gmra.mxu0 %v2359
  %v2423 = vpop.f32.mrf.mxu0
  %v2424 = vadd.f32 0.0, %v2423
  %2425 = vdwg.mxu0
  %2426 = vmatpush.msra.mxu0 0.0
  %2427 = vmatpush.msra.mxu0 0.0
  %2428 = vmatpush.msra.mxu0 0.0
  %2429 = vmatpush.msra.mxu0 0.0
  %2430 = vmatpush.msra.mxu0 0.0
  %2431 = vmatpush.msra.mxu0 0.0
  %2432 = vmatpush.msra.mxu0 0.0
  %2433 = vmatpush.msra.mxu0 0.0
  %2434 = vmatpush.msra.mxu0 0.0
  %2435 = vmatpush.msra.mxu0 0.0
  %2436 = vmatpush.msra.mxu0 0.0
  %2437 = vmatpush.msra.mxu0 0.0
  %2438 = vmatpush.msra.mxu0 %v1427
  %2439 = vmatpush.msra.mxu0 %v1426
  %2440 = vmatpush.msra.mxu0 %v1425
  %2441 = vmatpush.msra.mxu0 %v1424
  %2442 = vmatmul.f32.gmra.mxu0 %v1433
  %v2443 = vpop.f32.mrf.mxu0
  %v2444 = vadd.f32 %v2379, %v2443
  %2445 = vmatmul.f32.gmra.mxu0 %v1436
  %v2446 = vpop.f32.mrf.mxu0
  %v2447 = vadd.f32 %v2382, %v2446
  %2448 = vmatmul.f32.gmra.mxu0 %v1439
  %v2449 = vpop.f32.mrf.mxu0
  %v2450 = vadd.f32 %v2385, %v2449
  %2451 = vmatmul.f32.gmra.mxu0 %v1442
  %v2452 = vpop.f32.mrf.mxu0
  %v2453 = vadd.f32 %v2388, %v2452
  %2454 = vmatmul.f32.gmra.mxu0 %v1445
  %v2455 = vpop.f32.mrf.mxu0
  %v2456 = vadd.f32 %v2391, %v2455
  %2457 = vmatmul.f32.gmra.mxu0 %v1448
  %v2458 = vpop.f32.mrf.mxu0
  %v2459 = vadd.f32 %v2394, %v2458
  %2460 = vmatmul.f32.gmra.mxu0 %v1451
  %v2461 = vpop.f32.mrf.mxu0
  %v2462 = vadd.f32 %v2397, %v2461
  %2463 = vmatmul.f32.gmra.mxu0 %v1454
  %v2464 = vpop.f32.mrf.mxu0
  %v2465 = vadd.f32 %v2400, %v2464
  %2466 = vmatmul.f32.gmra.mxu0 %v1457
  %v2467 = vpop.f32.mrf.mxu0
  %v2468 = vadd.f32 %v2403, %v2467
  %2469 = vmatmul.f32.gmra.mxu0 %v1460
  %v2470 = vpop.f32.mrf.mxu0
  %v2471 = vadd.f32 %v2406, %v2470
  %2472 = vmatmul.f32.gmra.mxu0 %v1463
  %v2473 = vpop.f32.mrf.mxu0
  %v2474 = vadd.f32 %v2409, %v2473
  %2475 = vmatmul.f32.gmra.mxu0 %v1466
  %v2476 = vpop.f32.mrf.mxu0
  %v2477 = vadd.f32 %v2412, %v2476
  %2478 = vmatmul.f32.gmra.mxu0 %v1469
  %v2479 = vpop.f32.mrf.mxu0
  %v2480 = vadd.f32 %v2415, %v2479
  %2481 = vmatmul.f32.gmra.mxu0 %v1472
  %v2482 = vpop.f32.mrf.mxu0
  %v2483 = vadd.f32 %v2418, %v2482
  %2484 = vmatmul.f32.gmra.mxu0 %v1475
  %v2485 = vpop.f32.mrf.mxu0
  %v2486 = vadd.f32 %v2421, %v2485
  %2487 = vmatmul.f32.gmra.mxu0 %v1478
  %v2488 = vpop.f32.mrf.mxu0
  %v2489 = vadd.f32 %v2424, %v2488
  %2490 = vdwg.mxu0
  %v2491 = vld [vmem:[%s11] sm:$0xff]
  %v2492 = vld [vmem:[%s11 + $0x8] sm:$0xff]
  %v2493 = vld [vmem:[%s11 + $0x10] sm:$0xff]
  %v2494 = vld [vmem:[%s11 + $0x18] sm:$0xff]
  %2495 = vmatpush.msra.mxu0 0.0
  %2496 = vmatpush.msra.mxu0 0.0
  %2497 = vmatpush.msra.mxu0 0.0
  %2498 = vmatpush.msra.mxu0 0.0
  %2499 = vmatpush.msra.mxu0 0.0
  %2500 = vmatpush.msra.mxu0 0.0
  %2501 = vmatpush.msra.mxu0 0.0
  %2502 = vmatpush.msra.mxu0 0.0
  %2503 = vmatpush.msra.mxu0 0.0
  %2504 = vmatpush.msra.mxu0 0.0
  %2505 = vmatpush.msra.mxu0 0.0
  %2506 = vmatpush.msra.mxu0 0.0
  %2507 = vmatpush.msra.mxu0 %v2494
  %2508 = vmatpush.msra.mxu0 %v2493
  %2509 = vmatpush.msra.mxu0 %v2492
  %2510 = vmatpush.msra.mxu0 %v2491
  %2511 = vmatmul.f32.gmra.mxu0 %v2314
  %v2512 = vpop.f32.mrf.mxu0
  %v2513 = vadd.f32 0.0, %v2512
  %2514 = vmatmul.f32.gmra.mxu0 %v2317
  %v2515 = vpop.f32.mrf.mxu0
  %v2516 = vadd.f32 0.0, %v2515
  %2517 = vmatmul.f32.gmra.mxu0 %v2320
  %v2518 = vpop.f32.mrf.mxu0
  %v2519 = vadd.f32 0.0, %v2518
  %2520 = vmatmul.f32.gmra.mxu0 %v2323
  %v2521 = vpop.f32.mrf.mxu0
  %v2522 = vadd.f32 0.0, %v2521
  %2523 = vmatmul.f32.gmra.mxu0 %v2326
  %v2524 = vpop.f32.mrf.mxu0
  %v2525 = vadd.f32 0.0, %v2524
  %2526 = vmatmul.f32.gmra.mxu0 %v2329
  %v2527 = vpop.f32.mrf.mxu0
  %v2528 = vadd.f32 0.0, %v2527
  %2529 = vmatmul.f32.gmra.mxu0 %v2332
  %v2530 = vpop.f32.mrf.mxu0
  %v2531 = vadd.f32 0.0, %v2530
  %2532 = vmatmul.f32.gmra.mxu0 %v2335
  %v2533 = vpop.f32.mrf.mxu0
  %v2534 = vadd.f32 0.0, %v2533
  %2535 = vmatmul.f32.gmra.mxu0 %v2338
  %v2536 = vpop.f32.mrf.mxu0
  %v2537 = vadd.f32 0.0, %v2536
  %2538 = vmatmul.f32.gmra.mxu0 %v2341
  %v2539 = vpop.f32.mrf.mxu0
  %v2540 = vadd.f32 0.0, %v2539
  %2541 = vmatmul.f32.gmra.mxu0 %v2344
  %v2542 = vpop.f32.mrf.mxu0
  %v2543 = vadd.f32 0.0, %v2542
  %2544 = vmatmul.f32.gmra.mxu0 %v2347
  %v2545 = vpop.f32.mrf.mxu0
  %v2546 = vadd.f32 0.0, %v2545
  %2547 = vmatmul.f32.gmra.mxu0 %v2350
  %v2548 = vpop.f32.mrf.mxu0
  %v2549 = vadd.f32 0.0, %v2548
  %2550 = vmatmul.f32.gmra.mxu0 %v2353
  %v2551 = vpop.f32.mrf.mxu0
  %v2552 = vadd.f32 0.0, %v2551
  %2553 = vmatmul.f32.gmra.mxu0 %v2356
  %v2554 = vpop.f32.mrf.mxu0
  %v2555 = vadd.f32 0.0, %v2554
  %2556 = vmatmul.f32.gmra.mxu0 %v2359
  %v2557 = vpop.f32.mrf.mxu0
  %v2558 = vadd.f32 0.0, %v2557
  %2559 = vdwg.mxu0
  %v2560 = vpack.c.bf16 %v2516, %v2513
  %v2561 = vpack.c.bf16 %v2522, %v2519
  %v2562 = vpack.c.bf16 %v2528, %v2525
  %v2563 = vpack.c.bf16 %v2534, %v2531
  %v2564 = vpack.c.bf16 %v2540, %v2537
  %v2565 = vpack.c.bf16 %v2546, %v2543
  %v2566 = vpack.c.bf16 %v2552, %v2549
  %v2567 = vpack.c.bf16 %v2558, %v2555
  %2568 = vmatpush.bf16.msra.mxu0 %v2567
  %2569 = vmatpush.bf16.msra.mxu0 %v2566
  %2570 = vmatpush.bf16.msra.mxu0 %v2565
  %2571 = vmatpush.bf16.msra.mxu0 %v2564
  %2572 = vmatpush.bf16.msra.mxu0 %v2563
  %2573 = vmatpush.bf16.msra.mxu0 %v2562
  %2574 = vmatpush.bf16.msra.mxu0 %v2561
  %2575 = vmatpush.bf16.msra.mxu0 %v2560
  %2576 = vmatmul.bf16.gmra.mxu0 %v172
  %v2577 = vpop.f32.mrf.mxu0
  %v2578 = vadd.f32 0.0, %v2577
  %v2579 = vpop.f32.mrf.mxu0
  %v2580 = vadd.f32 0.0, %v2579
  %2581 = vmatmul.bf16.gmra.mxu0 %v173
  %v2582 = vpop.f32.mrf.mxu0
  %v2583 = vadd.f32 0.0, %v2582
  %v2584 = vpop.f32.mrf.mxu0
  %v2585 = vadd.f32 0.0, %v2584
  %2586 = vmatmul.bf16.gmra.mxu0 %v174
  %v2587 = vpop.f32.mrf.mxu0
  %v2588 = vadd.f32 0.0, %v2587
  %v2589 = vpop.f32.mrf.mxu0
  %v2590 = vadd.f32 0.0, %v2589
  %2591 = vmatmul.bf16.gmra.mxu0 %v175
  %v2592 = vpop.f32.mrf.mxu0
  %v2593 = vadd.f32 0.0, %v2592
  %v2594 = vpop.f32.mrf.mxu0
  %v2595 = vadd.f32 0.0, %v2594
  %2596 = vmatmul.bf16.gmra.mxu0 %v176
  %v2597 = vpop.f32.mrf.mxu0
  %v2598 = vadd.f32 0.0, %v2597
  %v2599 = vpop.f32.mrf.mxu0
  %v2600 = vadd.f32 0.0, %v2599
  %2601 = vmatmul.bf16.gmra.mxu0 %v177
  %v2602 = vpop.f32.mrf.mxu0
  %v2603 = vadd.f32 0.0, %v2602
  %v2604 = vpop.f32.mrf.mxu0
  %v2605 = vadd.f32 0.0, %v2604
  %2606 = vmatmul.bf16.gmra.mxu0 %v178
  %v2607 = vpop.f32.mrf.mxu0
  %v2608 = vadd.f32 0.0, %v2607
  %v2609 = vpop.f32.mrf.mxu0
  %v2610 = vadd.f32 0.0, %v2609
  %2611 = vmatmul.bf16.gmra.mxu0 %v179
  %v2612 = vpop.f32.mrf.mxu0
  %v2613 = vadd.f32 0.0, %v2612
  %v2614 = vpop.f32.mrf.mxu0
  %v2615 = vadd.f32 0.0, %v2614
  %2616 = vdwg.mxu0
  %2625 = vrot.lane.b32.xlu0 %v2560, 95
  %v2626 = vpop.permute.xlu0 %2625
  %2627 = vrot.lane.b32.xlu0 %v2561, 95
  %v2628 = vpop.permute.xlu0 %2627
  %2629 = vrot.lane.b32.xlu0 %v2562, 95
  %v2630 = vpop.permute.xlu0 %2629
  %2631 = vrot.lane.b32.xlu0 %v2563, 95
  %v2632 = vpop.permute.xlu0 %2631
  %2633 = vrot.lane.b32.xlu0 %v2564, 95
  %v2634 = vpop.permute.xlu0 %2633
  %2635 = vrot.lane.b32.xlu0 %v2565, 95
  %v2636 = vpop.permute.xlu0 %2635
  %2637 = vrot.lane.b32.xlu0 %v2566, 95
  %v2638 = vpop.permute.xlu0 %2637
  %2639 = vrot.lane.b32.xlu0 %v2567, 95
  %v2640 = vpop.permute.xlu0 %2639
  %2649 = vmatpush.bf16.msra.mxu0 %v2640
  %2650 = vmatpush.bf16.msra.mxu0 %v2638
  %2651 = vmatpush.bf16.msra.mxu0 %v2636
  %2652 = vmatpush.bf16.msra.mxu0 %v2634
  %2653 = vmatpush.bf16.msra.mxu0 %v2632
  %2654 = vmatpush.bf16.msra.mxu0 %v2630
  %2655 = vmatpush.bf16.msra.mxu0 %v2628
  %2656 = vmatpush.bf16.msra.mxu0 %v2626
  %2657 = vmatmul.bf16.gmra.mxu0 %v292
  %v2658 = vpop.f32.mrf.mxu0
  %v2659 = vadd.f32 0.0, %v2658
  %v2660 = vpop.f32.mrf.mxu0
  %v2661 = vadd.f32 0.0, %v2660
  %2662 = vmatmul.bf16.gmra.mxu0 %v293
  %v2663 = vpop.f32.mrf.mxu0
  %v2664 = vadd.f32 0.0, %v2663
  %v2665 = vpop.f32.mrf.mxu0
  %v2666 = vadd.f32 0.0, %v2665
  %2667 = vmatmul.bf16.gmra.mxu0 %v294
  %v2668 = vpop.f32.mrf.mxu0
  %v2669 = vadd.f32 0.0, %v2668
  %v2670 = vpop.f32.mrf.mxu0
  %v2671 = vadd.f32 0.0, %v2670
  %2672 = vmatmul.bf16.gmra.mxu0 %v295
  %v2673 = vpop.f32.mrf.mxu0
  %v2674 = vadd.f32 0.0, %v2673
  %v2675 = vpop.f32.mrf.mxu0
  %v2676 = vadd.f32 0.0, %v2675
  %2677 = vmatmul.bf16.gmra.mxu0 %v296
  %v2678 = vpop.f32.mrf.mxu0
  %v2679 = vadd.f32 0.0, %v2678
  %v2680 = vpop.f32.mrf.mxu0
  %v2681 = vadd.f32 0.0, %v2680
  %2682 = vmatmul.bf16.gmra.mxu0 %v297
  %v2683 = vpop.f32.mrf.mxu0
  %v2684 = vadd.f32 0.0, %v2683
  %v2685 = vpop.f32.mrf.mxu0
  %v2686 = vadd.f32 0.0, %v2685
  %2687 = vmatmul.bf16.gmra.mxu0 %v298
  %v2688 = vpop.f32.mrf.mxu0
  %v2689 = vadd.f32 0.0, %v2688
  %v2690 = vpop.f32.mrf.mxu0
  %v2691 = vadd.f32 0.0, %v2690
  %2692 = vmatmul.bf16.gmra.mxu0 %v299
  %v2693 = vpop.f32.mrf.mxu0
  %v2694 = vadd.f32 0.0, %v2693
  %v2695 = vpop.f32.mrf.mxu0
  %v2696 = vadd.f32 0.0, %v2695
  %2697 = vdwg.mxu0
  %2714 = vrot.lane.b32.xlu0 %v2659, 32
  %v2715 = vpop.permute.xlu0 %2714
  %2716 = vrot.lane.b32.xlu0 %v2661, 32
  %v2717 = vpop.permute.xlu0 %2716
  %2718 = vrot.lane.b32.xlu0 %v2664, 32
  %v2719 = vpop.permute.xlu0 %2718
  %2720 = vrot.lane.b32.xlu0 %v2666, 32
  %v2721 = vpop.permute.xlu0 %2720
  %2722 = vrot.lane.b32.xlu0 %v2669, 32
  %v2723 = vpop.permute.xlu0 %2722
  %2724 = vrot.lane.b32.xlu0 %v2671, 32
  %v2725 = vpop.permute.xlu0 %2724
  %2726 = vrot.lane.b32.xlu0 %v2674, 32
  %v2727 = vpop.permute.xlu0 %2726
  %2728 = vrot.lane.b32.xlu0 %v2676, 32
  %v2729 = vpop.permute.xlu0 %2728
  %2730 = vrot.lane.b32.xlu0 %v2679, 32
  %v2731 = vpop.permute.xlu0 %2730
  %2732 = vrot.lane.b32.xlu0 %v2681, 32
  %v2733 = vpop.permute.xlu0 %2732
  %2734 = vrot.lane.b32.xlu0 %v2684, 32
  %v2735 = vpop.permute.xlu0 %2734
  %2736 = vrot.lane.b32.xlu0 %v2686, 32
  %v2737 = vpop.permute.xlu0 %2736
  %2738 = vrot.lane.b32.xlu0 %v2689, 32
  %v2739 = vpop.permute.xlu0 %2738
  %2740 = vrot.lane.b32.xlu0 %v2691, 32
  %v2741 = vpop.permute.xlu0 %2740
  %2742 = vrot.lane.b32.xlu0 %v2694, 32
  %v2743 = vpop.permute.xlu0 %2742
  %2744 = vrot.lane.b32.xlu0 %v2696, 32
  %v2745 = vpop.permute.xlu0 %2744
  %v2762 = vadd.f32 %v2578, %v2715
  %v2763 = vadd.f32 %v2580, %v2717
  %v2764 = vadd.f32 %v2583, %v2719
  %v2765 = vadd.f32 %v2585, %v2721
  %v2766 = vadd.f32 %v2588, %v2723
  %v2767 = vadd.f32 %v2590, %v2725
  %v2768 = vadd.f32 %v2593, %v2727
  %v2769 = vadd.f32 %v2595, %v2729
  %v2770 = vadd.f32 %v2598, %v2731
  %v2771 = vadd.f32 %v2600, %v2733
  %v2772 = vadd.f32 %v2603, %v2735
  %v2773 = vadd.f32 %v2605, %v2737
  %v2774 = vadd.f32 %v2608, %v2739
  %v2775 = vadd.f32 %v2610, %v2741
  %v2776 = vadd.f32 %v2613, %v2743
  %v2777 = vadd.f32 %v2615, %v2745
  %2778 = vrot.lane.b32.xlu0 %v479, 30
  %v2779 = vpop.permute.xlu0 %2778
  %2780 = vrot.lane.b32.xlu0 %v482, 30
  %v2781 = vpop.permute.xlu0 %2780
  %2782 = vrot.lane.b32.xlu0 %v485, 30
  %v2783 = vpop.permute.xlu0 %2782
  %2784 = vrot.lane.b32.xlu0 %v488, 30
  %v2785 = vpop.permute.xlu0 %2784
  %2786 = vrot.lane.b32.xlu0 %v491, 30
  %v2787 = vpop.permute.xlu0 %2786
  %2788 = vrot.lane.b32.xlu0 %v494, 30
  %v2789 = vpop.permute.xlu0 %2788
  %2790 = vrot.lane.b32.xlu0 %v497, 30
  %v2791 = vpop.permute.xlu0 %2790
  %2792 = vrot.lane.b32.xlu0 %v500, 30
  %v2793 = vpop.permute.xlu0 %2792
  %2794 = vrot.lane.b32.xlu0 %v503, 30
  %v2795 = vpop.permute.xlu0 %2794
  %2796 = vrot.lane.b32.xlu0 %v506, 30
  %v2797 = vpop.permute.xlu0 %2796
  %2798 = vrot.lane.b32.xlu0 %v509, 30
  %v2799 = vpop.permute.xlu0 %2798
  %2800 = vrot.lane.b32.xlu0 %v512, 30
  %v2801 = vpop.permute.xlu0 %2800
  %2802 = vrot.lane.b32.xlu0 %v515, 30
  %v2803 = vpop.permute.xlu0 %2802
  %2804 = vrot.lane.b32.xlu0 %v518, 30
  %v2805 = vpop.permute.xlu0 %2804
  %2806 = vrot.lane.b32.xlu0 %v521, 30
  %v2807 = vpop.permute.xlu0 %2806
  %2808 = vrot.lane.b32.xlu0 %v524, 30
  %v2809 = vpop.permute.xlu0 %2808
  %v2826 = vadd.f32 %v2762, %v2779
  %v2827 = vadd.f32 %v2763, %v2781
  %v2828 = vadd.f32 %v2764, %v2783
  %v2829 = vadd.f32 %v2765, %v2785
  %v2830 = vadd.f32 %v2766, %v2787
  %v2831 = vadd.f32 %v2767, %v2789
  %v2832 = vadd.f32 %v2768, %v2791
  %v2833 = vadd.f32 %v2769, %v2793
  %v2834 = vadd.f32 %v2770, %v2795
  %v2835 = vadd.f32 %v2771, %v2797
  %v2836 = vadd.f32 %v2772, %v2799
  %v2837 = vadd.f32 %v2773, %v2801
  %v2838 = vadd.f32 %v2774, %v2803
  %v2839 = vadd.f32 %v2775, %v2805
  %v2840 = vadd.f32 %v2776, %v2807
  %v2841 = vadd.f32 %v2777, %v2809
  %vm2842 = vcmp.gt.f32.partialorder %v2826, 0.0
  %vm2843 = vcmp.gt.f32.partialorder %v2827, 0.0
  %vm2844 = vcmp.gt.f32.partialorder %v2828, 0.0
  %vm2845 = vcmp.gt.f32.partialorder %v2829, 0.0
  %vm2846 = vcmp.gt.f32.partialorder %v2830, 0.0
  %vm2847 = vcmp.gt.f32.partialorder %v2831, 0.0
  %vm2848 = vcmp.gt.f32.partialorder %v2832, 0.0
  %vm2849 = vcmp.gt.f32.partialorder %v2833, 0.0
  %vm2850 = vcmp.gt.f32.partialorder %v2834, 0.0
  %vm2851 = vcmp.gt.f32.partialorder %v2835, 0.0
  %vm2852 = vcmp.gt.f32.partialorder %v2836, 0.0
  %vm2853 = vcmp.gt.f32.partialorder %v2837, 0.0
  %vm2854 = vcmp.gt.f32.partialorder %v2838, 0.0
  %vm2855 = vcmp.gt.f32.partialorder %v2839, 0.0
  %vm2856 = vcmp.gt.f32.partialorder %v2840, 0.0
  %vm2857 = vcmp.gt.f32.partialorder %v2841, 0.0
  %v2858 = vmul.f32 %v2826, 0.2
  %v2859 = vmul.f32 %v2827, 0.2
  %v2860 = vmul.f32 %v2828, 0.2
  %v2861 = vmul.f32 %v2829, 0.2
  %v2862 = vmul.f32 %v2830, 0.2
  %v2863 = vmul.f32 %v2831, 0.2
  %v2864 = vmul.f32 %v2832, 0.2
  %v2865 = vmul.f32 %v2833, 0.2
  %v2866 = vmul.f32 %v2834, 0.2
  %v2867 = vmul.f32 %v2835, 0.2
  %v2868 = vmul.f32 %v2836, 0.2
  %v2869 = vmul.f32 %v2837, 0.2
  %v2870 = vmul.f32 %v2838, 0.2
  %v2871 = vmul.f32 %v2839, 0.2
  %v2872 = vmul.f32 %v2840, 0.2
  %v2873 = vmul.f32 %v2841, 0.2
  %v2874 = vsel %vm2842, %v2826, %v2858
  %v2875 = vsel %vm2843, %v2827, %v2859
  %v2876 = vsel %vm2844, %v2828, %v2860
  %v2877 = vsel %vm2845, %v2829, %v2861
  %v2878 = vsel %vm2846, %v2830, %v2862
  %v2879 = vsel %vm2847, %v2831, %v2863
  %v2880 = vsel %vm2848, %v2832, %v2864
  %v2881 = vsel %vm2849, %v2833, %v2865
  %v2882 = vsel %vm2850, %v2834, %v2866
  %v2883 = vsel %vm2851, %v2835, %v2867
  %v2884 = vsel %vm2852, %v2836, %v2868
  %v2885 = vsel %vm2853, %v2837, %v2869
  %v2886 = vsel %vm2854, %v2838, %v2870
  %v2887 = vsel %vm2855, %v2839, %v2871
  %v2888 = vsel %vm2856, %v2840, %v2872
  %v2889 = vsel %vm2857, %v2841, %v2873
  %v2890 = vsel %vm988, %v2874, -inf
  %v2891 = vsel %vm988, %v2875, -inf
  %v2892 = vsel %vm988, %v2876, -inf
  %v2893 = vsel %vm988, %v2877, -inf
  %v2894 = vsel %vm988, %v2878, -inf
  %v2895 = vmax.f32 %v2890, %v2894
  %v2896 = vsel %vm988, %v2879, -inf
  %v2897 = vmax.f32 %v2891, %v2896
  %v2898 = vsel %vm988, %v2880, -inf
  %v2899 = vmax.f32 %v2892, %v2898
  %v2900 = vsel %vm988, %v2881, -inf
  %v2901 = vmax.f32 %v2893, %v2900
  %v2902 = vsel %vm988, %v2882, -inf
  %v2903 = vmax.f32 %v2895, %v2902
  %v2904 = vsel %vm988, %v2883, -inf
  %v2905 = vmax.f32 %v2897, %v2904
  %v2906 = vsel %vm988, %v2884, -inf
  %v2907 = vmax.f32 %v2899, %v2906
  %v2908 = vsel %vm988, %v2885, -inf
  %v2909 = vmax.f32 %v2901, %v2908
  %v2910 = vsel %vm988, %v2886, -inf
  %v2911 = vmax.f32 %v2903, %v2910
  %v2912 = vsel %vm988, %v2887, -inf
  %v2913 = vmax.f32 %v2905, %v2912
  %v2914 = vsel %vm988, %v2888, -inf
  %v2915 = vmax.f32 %v2907, %v2914
  %v2916 = vsel %vm988, %v2889, -inf
  %v2917 = vmax.f32 %v2909, %v2916
  %v2918 = vmax.f32 %v2911, %v2913
  %v2919 = vmax.f32 %v2915, %v2917
  %v2920 = vmax.f32 %v2918, %v2919
  %v2921 = vrot.slane %v2920, 4
  %v2922 = vmax.f32 %v2920, %v2921
  %v2923 = vrot.slane %v2922, 2
  %v2924 = vmax.f32 %v2922, %v2923
  %v2925 = vrot.slane %v2924, 1
  %v2926 = vmax.f32 %v2924, %v2925
  %v2927 = vsub.f32 %v2874, %v2926
  %v2928 = vsub.f32 %v2875, %v2926
  %v2929 = vsub.f32 %v2876, %v2926
  %v2930 = vsub.f32 %v2877, %v2926
  %v2931 = vsub.f32 %v2878, %v2926
  %v2932 = vsub.f32 %v2879, %v2926
  %v2933 = vsub.f32 %v2880, %v2926
  %v2934 = vsub.f32 %v2881, %v2926
  %v2935 = vsub.f32 %v2882, %v2926
  %v2936 = vsub.f32 %v2883, %v2926
  %v2937 = vsub.f32 %v2884, %v2926
  %v2938 = vsub.f32 %v2885, %v2926
  %v2939 = vsub.f32 %v2886, %v2926
  %v2940 = vsub.f32 %v2887, %v2926
  %v2941 = vsub.f32 %v2888, %v2926
  %v2942 = vsub.f32 %v2889, %v2926
  %v2943 = vmax.f32 %v2927, -60.0
  %v2944 = vmax.f32 %v2928, -60.0
  %v2945 = vmax.f32 %v2929, -60.0
  %v2946 = vmax.f32 %v2930, -60.0
  %v2947 = vmax.f32 %v2931, -60.0
  %v2948 = vmax.f32 %v2932, -60.0
  %v2949 = vmax.f32 %v2933, -60.0
  %v2950 = vmax.f32 %v2934, -60.0
  %v2951 = vmax.f32 %v2935, -60.0
  %v2952 = vmax.f32 %v2936, -60.0
  %v2953 = vmax.f32 %v2937, -60.0
  %v2954 = vmax.f32 %v2938, -60.0
  %v2955 = vmax.f32 %v2939, -60.0
  %v2956 = vmax.f32 %v2940, -60.0
  %v2957 = vmax.f32 %v2941, -60.0
  %v2958 = vmax.f32 %v2942, -60.0
  %v2959 = vmul.f32 %v2943, 1.442695
  %v2960 = vpow.pop %v2959
  %v2961 = vmul.f32 %v2944, 1.442695
  %v2962 = vpow.pop %v2961
  %v2963 = vmul.f32 %v2945, 1.442695
  %v2964 = vpow.pop %v2963
  %v2965 = vmul.f32 %v2946, 1.442695
  %v2966 = vpow.pop %v2965
  %v2967 = vmul.f32 %v2947, 1.442695
  %v2968 = vpow.pop %v2967
  %v2969 = vmul.f32 %v2948, 1.442695
  %v2970 = vpow.pop %v2969
  %v2971 = vmul.f32 %v2949, 1.442695
  %v2972 = vpow.pop %v2971
  %v2973 = vmul.f32 %v2950, 1.442695
  %v2974 = vpow.pop %v2973
  %v2975 = vmul.f32 %v2951, 1.442695
  %v2976 = vpow.pop %v2975
  %v2977 = vmul.f32 %v2952, 1.442695
  %v2978 = vpow.pop %v2977
  %v2979 = vmul.f32 %v2953, 1.442695
  %v2980 = vpow.pop %v2979
  %v2981 = vmul.f32 %v2954, 1.442695
  %v2982 = vpow.pop %v2981
  %v2983 = vmul.f32 %v2955, 1.442695
  %v2984 = vpow.pop %v2983
  %v2985 = vmul.f32 %v2956, 1.442695
  %v2986 = vpow.pop %v2985
  %v2987 = vmul.f32 %v2957, 1.442695
  %v2988 = vpow.pop %v2987
  %v2989 = vmul.f32 %v2958, 1.442695
  %v2990 = vpow.pop %v2989
  %2992 = vset.pattern.permute.xlu0 32
  %2993 = vperm.xlu0 %2992, %v2960
  %v2994 = vpop.permute.xlu0 %2993
  %2997 = vset.pattern.permute.xlu0 32
  %2998 = vperm.xlu0 %2997, %v2962
  %v2999 = vpop.permute.xlu0 %2998
  %3002 = vset.pattern.permute.xlu0 32
  %3003 = vperm.xlu0 %3002, %v2964
  %v3004 = vpop.permute.xlu0 %3003
  %3007 = vset.pattern.permute.xlu0 32
  %3008 = vperm.xlu0 %3007, %v2966
  %v3009 = vpop.permute.xlu0 %3008
  %3012 = vset.pattern.permute.xlu0 32
  %3013 = vperm.xlu0 %3012, %v2968
  %v3014 = vpop.permute.xlu0 %3013
  %3017 = vset.pattern.permute.xlu0 32
  %3018 = vperm.xlu0 %3017, %v2970
  %v3019 = vpop.permute.xlu0 %3018
  %3022 = vset.pattern.permute.xlu0 32
  %3023 = vperm.xlu0 %3022, %v2972
  %v3024 = vpop.permute.xlu0 %3023
  %3027 = vset.pattern.permute.xlu0 32
  %3028 = vperm.xlu0 %3027, %v2974
  %v3029 = vpop.permute.xlu0 %3028
  %3032 = vset.pattern.permute.xlu0 32
  %3033 = vperm.xlu0 %3032, %v2976
  %v3034 = vpop.permute.xlu0 %3033
  %3037 = vset.pattern.permute.xlu0 32
  %3038 = vperm.xlu0 %3037, %v2978
  %v3039 = vpop.permute.xlu0 %3038
  %3042 = vset.pattern.permute.xlu0 32
  %3043 = vperm.xlu0 %3042, %v2980
  %v3044 = vpop.permute.xlu0 %3043
  %3047 = vset.pattern.permute.xlu0 32
  %3048 = vperm.xlu0 %3047, %v2982
  %v3049 = vpop.permute.xlu0 %3048
  %3052 = vset.pattern.permute.xlu0 32
  %3053 = vperm.xlu0 %3052, %v2984
  %v3054 = vpop.permute.xlu0 %3053
  %3057 = vset.pattern.permute.xlu0 32
  %3058 = vperm.xlu0 %3057, %v2986
  %v3059 = vpop.permute.xlu0 %3058
  %3062 = vset.pattern.permute.xlu0 32
  %3063 = vperm.xlu0 %3062, %v2988
  %v3064 = vpop.permute.xlu0 %3063
  %3067 = vset.pattern.permute.xlu0 32
  %3068 = vperm.xlu0 %3067, %v2990
  %v3069 = vpop.permute.xlu0 %3068
  %v3071 = vmul.f32 %v2994, %v2578
  %v3072 = vmul.f32 %v2999, %v2580
  %v3073 = vmul.f32 %v3004, %v2583
  %v3074 = vmul.f32 %v3009, %v2585
  %v3075 = vmul.f32 %v3014, %v2588
  %v3076 = vmul.f32 %v3019, %v2590
  %v3077 = vmul.f32 %v3024, %v2593
  %v3078 = vmul.f32 %v3029, %v2595
  %v3079 = vmul.f32 %v3034, %v2598
  %v3080 = vmul.f32 %v3039, %v2600
  %v3081 = vmul.f32 %v3044, %v2603
  %v3082 = vmul.f32 %v3049, %v2605
  %v3083 = vmul.f32 %v3054, %v2608
  %v3084 = vmul.f32 %v3059, %v2610
  %v3085 = vmul.f32 %v3064, %v2613
  %v3086 = vmul.f32 %v3069, %v2615
  %v3087 = vsel %vm1186, %v3071, %v2960
  %v3088 = vsel %vm1186, %v3072, %v2962
  %v3089 = vsel %vm1186, %v3073, %v2964
  %v3090 = vsel %vm1186, %v3074, %v2966
  %v3091 = vsel %vm1186, %v3075, %v2968
  %v3092 = vsel %vm1186, %v3076, %v2970
  %v3093 = vsel %vm1186, %v3077, %v2972
  %v3094 = vsel %vm1186, %v3078, %v2974
  %v3095 = vsel %vm1186, %v3079, %v2976
  %v3096 = vsel %vm1186, %v3080, %v2978
  %v3097 = vsel %vm1186, %v3081, %v2980
  %v3098 = vsel %vm1186, %v3082, %v2982
  %v3099 = vsel %vm1186, %v3083, %v2984
  %v3100 = vsel %vm1186, %v3084, %v2986
  %v3101 = vsel %vm1186, %v3085, %v2988
  %v3102 = vsel %vm1186, %v3086, %v2990
  %v3103 = vpack.c.bf16 %v3088, %v3087
  %v3104 = vpack.c.bf16 %v3090, %v3089
  %v3105 = vpack.c.bf16 %v3092, %v3091
  %v3106 = vpack.c.bf16 %v3094, %v3093
  %v3107 = vpack.c.bf16 %v3096, %v3095
  %v3108 = vpack.c.bf16 %v3098, %v3097
  %v3109 = vpack.c.bf16 %v3100, %v3099
  %v3110 = vpack.c.bf16 %v3102, %v3101
  %3111 = vmatpush.bf16.msra.mxu0 %v3110
  %3112 = vmatpush.bf16.msra.mxu0 %v3109
  %3113 = vmatpush.bf16.msra.mxu0 %v3108
  %3114 = vmatpush.bf16.msra.mxu0 %v3107
  %3115 = vmatpush.bf16.msra.mxu0 %v3106
  %3116 = vmatpush.bf16.msra.mxu0 %v3105
  %3117 = vmatpush.bf16.msra.mxu0 %v3104
  %3118 = vmatpush.bf16.msra.mxu0 %v3103
  %3119 = vmatmul.bf16.gmra.mxu0 %v367
  %v3120 = vpop.f32.mrf.mxu0
  %v3121 = vadd.f32 0.0, %v3120
  %v3122 = vpop.f32.mrf.mxu0
  %v3123 = vadd.f32 0.0, %v3122
  %3124 = vmatmul.bf16.gmra.mxu0 %v368
  %v3125 = vpop.f32.mrf.mxu0
  %v3126 = vadd.f32 0.0, %v3125
  %v3127 = vpop.f32.mrf.mxu0
  %v3128 = vadd.f32 0.0, %v3127
  %3129 = vmatmul.bf16.gmra.mxu0 %v369
  %v3130 = vpop.f32.mrf.mxu0
  %v3131 = vadd.f32 0.0, %v3130
  %v3132 = vpop.f32.mrf.mxu0
  %v3133 = vadd.f32 0.0, %v3132
  %3134 = vmatmul.bf16.gmra.mxu0 %v370
  %v3135 = vpop.f32.mrf.mxu0
  %v3136 = vadd.f32 0.0, %v3135
  %v3137 = vpop.f32.mrf.mxu0
  %v3138 = vadd.f32 0.0, %v3137
  %3139 = vmatmul.bf16.gmra.mxu0 %v371
  %v3140 = vpop.f32.mrf.mxu0
  %v3141 = vadd.f32 0.0, %v3140
  %v3142 = vpop.f32.mrf.mxu0
  %v3143 = vadd.f32 0.0, %v3142
  %3144 = vmatmul.bf16.gmra.mxu0 %v372
  %v3145 = vpop.f32.mrf.mxu0
  %v3146 = vadd.f32 0.0, %v3145
  %v3147 = vpop.f32.mrf.mxu0
  %v3148 = vadd.f32 0.0, %v3147
  %3149 = vmatmul.bf16.gmra.mxu0 %v373
  %v3150 = vpop.f32.mrf.mxu0
  %v3151 = vadd.f32 0.0, %v3150
  %v3152 = vpop.f32.mrf.mxu0
  %v3153 = vadd.f32 0.0, %v3152
  %3154 = vmatmul.bf16.gmra.mxu0 %v374
  %v3155 = vpop.f32.mrf.mxu0
  %v3156 = vadd.f32 0.0, %v3155
  %v3157 = vpop.f32.mrf.mxu0
  %v3158 = vadd.f32 0.0, %v3157
  %3159 = vdwg.mxu0
  %v3160 = vrcp.pop %v3121
  %v3161 = vrcp.pop %v3123
  %v3162 = vrcp.pop %v3126
  %v3163 = vrcp.pop %v3128
  %v3164 = vrcp.pop %v3131
  %v3165 = vrcp.pop %v3133
  %v3166 = vrcp.pop %v3136
  %v3167 = vrcp.pop %v3138
  %v3168 = vrcp.pop %v3141
  %v3169 = vrcp.pop %v3143
  %v3170 = vrcp.pop %v3146
  %v3171 = vrcp.pop %v3148
  %v3172 = vrcp.pop %v3151
  %v3173 = vrcp.pop %v3153
  %v3174 = vrcp.pop %v3156
  %v3175 = vrcp.pop %v3158
  %vm3176 = vcmp.gt.f32.partialorder %v3121, 0.0
  %vm3177 = vcmp.gt.f32.partialorder %v3123, 0.0
  %vm3178 = vcmp.gt.f32.partialorder %v3126, 0.0
  %vm3179 = vcmp.gt.f32.partialorder %v3128, 0.0
  %vm3180 = vcmp.gt.f32.partialorder %v3131, 0.0
  %vm3181 = vcmp.gt.f32.partialorder %v3133, 0.0
  %vm3182 = vcmp.gt.f32.partialorder %v3136, 0.0
  %vm3183 = vcmp.gt.f32.partialorder %v3138, 0.0
  %vm3184 = vcmp.gt.f32.partialorder %v3141, 0.0
  %vm3185 = vcmp.gt.f32.partialorder %v3143, 0.0
  %vm3186 = vcmp.gt.f32.partialorder %v3146, 0.0
  %vm3187 = vcmp.gt.f32.partialorder %v3148, 0.0
  %vm3188 = vcmp.gt.f32.partialorder %v3151, 0.0
  %vm3189 = vcmp.gt.f32.partialorder %v3153, 0.0
  %vm3190 = vcmp.gt.f32.partialorder %v3156, 0.0
  %vm3191 = vcmp.gt.f32.partialorder %v3158, 0.0
  %v3192 = vsel %vm3176, %v3160, 0.0
  %v3193 = vsel %vm3177, %v3161, 0.0
  %v3194 = vsel %vm3178, %v3162, 0.0
  %v3195 = vsel %vm3179, %v3163, 0.0
  %v3196 = vsel %vm3180, %v3164, 0.0
  %v3197 = vsel %vm3181, %v3165, 0.0
  %v3198 = vsel %vm3182, %v3166, 0.0
  %v3199 = vsel %vm3183, %v3167, 0.0
  %v3200 = vsel %vm3184, %v3168, 0.0
  %v3201 = vsel %vm3185, %v3169, 0.0
  %v3202 = vsel %vm3186, %v3170, 0.0
  %v3203 = vsel %vm3187, %v3171, 0.0
  %v3204 = vsel %vm3188, %v3172, 0.0
  %v3205 = vsel %vm3189, %v3173, 0.0
  %v3206 = vsel %vm3190, %v3174, 0.0
  %v3207 = vsel %vm3191, %v3175, 0.0
  %3209 = vset.pattern.permute.xlu0 32
  %3210 = vperm.xlu0 %3209, %v3192
  %v3211 = vpop.permute.xlu0 %3210
  %3214 = vset.pattern.permute.xlu0 32
  %3215 = vperm.xlu0 %3214, %v3193
  %v3216 = vpop.permute.xlu0 %3215
  %3219 = vset.pattern.permute.xlu0 32
  %3220 = vperm.xlu0 %3219, %v3194
  %v3221 = vpop.permute.xlu0 %3220
  %3224 = vset.pattern.permute.xlu0 32
  %3225 = vperm.xlu0 %3224, %v3195
  %v3226 = vpop.permute.xlu0 %3225
  %3229 = vset.pattern.permute.xlu0 32
  %3230 = vperm.xlu0 %3229, %v3196
  %v3231 = vpop.permute.xlu0 %3230
  %3234 = vset.pattern.permute.xlu0 32
  %3235 = vperm.xlu0 %3234, %v3197
  %v3236 = vpop.permute.xlu0 %3235
  %3239 = vset.pattern.permute.xlu0 32
  %3240 = vperm.xlu0 %3239, %v3198
  %v3241 = vpop.permute.xlu0 %3240
  %3244 = vset.pattern.permute.xlu0 32
  %3245 = vperm.xlu0 %3244, %v3199
  %v3246 = vpop.permute.xlu0 %3245
  %3249 = vset.pattern.permute.xlu0 32
  %3250 = vperm.xlu0 %3249, %v3200
  %v3251 = vpop.permute.xlu0 %3250
  %3254 = vset.pattern.permute.xlu0 32
  %3255 = vperm.xlu0 %3254, %v3201
  %v3256 = vpop.permute.xlu0 %3255
  %3259 = vset.pattern.permute.xlu0 32
  %3260 = vperm.xlu0 %3259, %v3202
  %v3261 = vpop.permute.xlu0 %3260
  %3264 = vset.pattern.permute.xlu0 32
  %3265 = vperm.xlu0 %3264, %v3203
  %v3266 = vpop.permute.xlu0 %3265
  %3269 = vset.pattern.permute.xlu0 32
  %3270 = vperm.xlu0 %3269, %v3204
  %v3271 = vpop.permute.xlu0 %3270
  %3274 = vset.pattern.permute.xlu0 32
  %3275 = vperm.xlu0 %3274, %v3205
  %v3276 = vpop.permute.xlu0 %3275
  %3279 = vset.pattern.permute.xlu0 32
  %3280 = vperm.xlu0 %3279, %v3206
  %v3281 = vpop.permute.xlu0 %3280
  %3284 = vset.pattern.permute.xlu0 32
  %3285 = vperm.xlu0 %3284, %v3207
  %v3286 = vpop.permute.xlu0 %3285
  %v3288 = vmul.f32 %v3121, %v3211
  %v3289 = vmul.f32 %v3123, %v3216
  %v3290 = vmul.f32 %v3126, %v3221
  %v3291 = vmul.f32 %v3128, %v3226
  %v3292 = vmul.f32 %v3131, %v3231
  %v3293 = vmul.f32 %v3133, %v3236
  %v3294 = vmul.f32 %v3136, %v3241
  %v3295 = vmul.f32 %v3138, %v3246
  %v3296 = vmul.f32 %v3141, %v3251
  %v3297 = vmul.f32 %v3143, %v3256
  %v3298 = vmul.f32 %v3146, %v3261
  %v3299 = vmul.f32 %v3148, %v3266
  %v3300 = vmul.f32 %v3151, %v3271
  %v3301 = vmul.f32 %v3153, %v3276
  %v3302 = vmul.f32 %v3156, %v3281
  %v3303 = vmul.f32 %v3158, %v3286
  %v3304 = vld [vmem:[%s12] sm:$0x1]
  %v3306 = vperm.slane %v3304, 0
  %v3308 = vadd.f32 %v3288, %v3306
  %v3309 = vadd.f32 %v3289, %v3306
  %v3310 = vadd.f32 %v3290, %v3306
  %v3311 = vadd.f32 %v3291, %v3306
  %v3312 = vadd.f32 %v3292, %v3306
  %v3313 = vadd.f32 %v3293, %v3306
  %v3314 = vadd.f32 %v3294, %v3306
  %v3315 = vadd.f32 %v3295, %v3306
  %v3316 = vadd.f32 %v3296, %v3306
  %v3317 = vadd.f32 %v3297, %v3306
  %v3318 = vadd.f32 %v3298, %v3306
  %v3319 = vadd.f32 %v3299, %v3306
  %v3320 = vadd.f32 %v3300, %v3306
  %v3321 = vadd.f32 %v3301, %v3306
  %v3322 = vadd.f32 %v3302, %v3306
  %v3323 = vadd.f32 %v3303, %v3306
  %v3324 = vld [vmem:[%s15] sm:$0xff]
  %v3325 = vld [vmem:[%s15 + $0x8] sm:$0xff]
  %v3326 = vld [vmem:[%s15 + $0x10] sm:$0xff]
  %v3327 = vld [vmem:[%s15 + $0x18] sm:$0xff]
  %v3329 = vsel %vm1186, %v3308, 0
  %v3332 = vsel %vm1186, %v3309, 0
  %v3335 = vsel %vm1186, %v3310, 0
  %v3338 = vsel %vm1186, %v3311, 0
  %v3341 = vsel %vm1186, %v3312, 0
  %v3344 = vsel %vm1186, %v3313, 0
  %v3347 = vsel %vm1186, %v3314, 0
  %v3350 = vsel %vm1186, %v3315, 0
  %v3353 = vsel %vm1186, %v3316, 0
  %v3356 = vsel %vm1186, %v3317, 0
  %v3359 = vsel %vm1186, %v3318, 0
  %v3362 = vsel %vm1186, %v3319, 0
  %v3365 = vsel %vm1186, %v3320, 0
  %v3368 = vsel %vm1186, %v3321, 0
  %v3371 = vsel %vm1186, %v3322, 0
  %v3374 = vsel %vm1186, %v3323, 0
  %3376 = vmatpush.msra.mxu0 0.0
  %3377 = vmatpush.msra.mxu0 0.0
  %3378 = vmatpush.msra.mxu0 0.0
  %3379 = vmatpush.msra.mxu0 0.0
  %3380 = vmatpush.msra.mxu0 0.0
  %3381 = vmatpush.msra.mxu0 0.0
  %3382 = vmatpush.msra.mxu0 0.0
  %3383 = vmatpush.msra.mxu0 0.0
  %3384 = vmatpush.msra.mxu0 0.0
  %3385 = vmatpush.msra.mxu0 0.0
  %3386 = vmatpush.msra.mxu0 0.0
  %3387 = vmatpush.msra.mxu0 0.0
  %3388 = vmatpush.msra.mxu0 %v3327
  %3389 = vmatpush.msra.mxu0 %v3326
  %3390 = vmatpush.msra.mxu0 %v3325
  %3391 = vmatpush.msra.mxu0 %v3324
  %3392 = vmatmul.f32.gmra.mxu0 %v3329
  %v3393 = vpop.f32.mrf.mxu0
  %v3394 = vadd.f32 0.0, %v3393
  %3395 = vmatmul.f32.gmra.mxu0 %v3332
  %v3396 = vpop.f32.mrf.mxu0
  %v3397 = vadd.f32 0.0, %v3396
  %3398 = vmatmul.f32.gmra.mxu0 %v3335
  %v3399 = vpop.f32.mrf.mxu0
  %v3400 = vadd.f32 0.0, %v3399
  %3401 = vmatmul.f32.gmra.mxu0 %v3338
  %v3402 = vpop.f32.mrf.mxu0
  %v3403 = vadd.f32 0.0, %v3402
  %3404 = vmatmul.f32.gmra.mxu0 %v3341
  %v3405 = vpop.f32.mrf.mxu0
  %v3406 = vadd.f32 0.0, %v3405
  %3407 = vmatmul.f32.gmra.mxu0 %v3344
  %v3408 = vpop.f32.mrf.mxu0
  %v3409 = vadd.f32 0.0, %v3408
  %3410 = vmatmul.f32.gmra.mxu0 %v3347
  %v3411 = vpop.f32.mrf.mxu0
  %v3412 = vadd.f32 0.0, %v3411
  %3413 = vmatmul.f32.gmra.mxu0 %v3350
  %v3414 = vpop.f32.mrf.mxu0
  %v3415 = vadd.f32 0.0, %v3414
  %3416 = vmatmul.f32.gmra.mxu0 %v3353
  %v3417 = vpop.f32.mrf.mxu0
  %v3418 = vadd.f32 0.0, %v3417
  %3419 = vmatmul.f32.gmra.mxu0 %v3356
  %v3420 = vpop.f32.mrf.mxu0
  %v3421 = vadd.f32 0.0, %v3420
  %3422 = vmatmul.f32.gmra.mxu0 %v3359
  %v3423 = vpop.f32.mrf.mxu0
  %v3424 = vadd.f32 0.0, %v3423
  %3425 = vmatmul.f32.gmra.mxu0 %v3362
  %v3426 = vpop.f32.mrf.mxu0
  %v3427 = vadd.f32 0.0, %v3426
  %3428 = vmatmul.f32.gmra.mxu0 %v3365
  %v3429 = vpop.f32.mrf.mxu0
  %v3430 = vadd.f32 0.0, %v3429
  %3431 = vmatmul.f32.gmra.mxu0 %v3368
  %v3432 = vpop.f32.mrf.mxu0
  %v3433 = vadd.f32 0.0, %v3432
  %3434 = vmatmul.f32.gmra.mxu0 %v3371
  %v3435 = vpop.f32.mrf.mxu0
  %v3436 = vadd.f32 0.0, %v3435
  %3437 = vmatmul.f32.gmra.mxu0 %v3374
  %v3438 = vpop.f32.mrf.mxu0
  %v3439 = vadd.f32 0.0, %v3438
  %3440 = vdwg.mxu0
  %v3441 = vadd.f32 %v2444, %v3394
  %v3442 = vadd.f32 %v2447, %v3397
  %v3443 = vadd.f32 %v2450, %v3400
  %v3444 = vadd.f32 %v2453, %v3403
  %v3445 = vadd.f32 %v2456, %v3406
  %v3446 = vadd.f32 %v2459, %v3409
  %v3447 = vadd.f32 %v2462, %v3412
  %v3448 = vadd.f32 %v2465, %v3415
  %v3449 = vadd.f32 %v2468, %v3418
  %v3450 = vadd.f32 %v2471, %v3421
  %v3451 = vadd.f32 %v2474, %v3424
  %v3452 = vadd.f32 %v2477, %v3427
  %v3453 = vadd.f32 %v2480, %v3430
  %v3454 = vadd.f32 %v2483, %v3433
  %v3455 = vadd.f32 %v2486, %v3436
  %v3456 = vadd.f32 %v2489, %v3439
  %v3457 = vld [vmem:[%s5] sm:$0x3]
  %v3458 = vld [vmem:[#allocation2] sm:$0x1]
  %v3460 = vperm.slane %v3458, 0
  %3462 = vmatpush.msra.mxu0 %v3456
  %3463 = vmatpush.msra.mxu0 %v3455
  %3464 = vmatpush.msra.mxu0 %v3454
  %3465 = vmatpush.msra.mxu0 %v3453
  %3466 = vmatpush.msra.mxu0 %v3452
  %3467 = vmatpush.msra.mxu0 %v3451
  %3468 = vmatpush.msra.mxu0 %v3450
  %3469 = vmatpush.msra.mxu0 %v3449
  %3470 = vmatpush.msra.mxu0 %v3448
  %3471 = vmatpush.msra.mxu0 %v3447
  %3472 = vmatpush.msra.mxu0 %v3446
  %3473 = vmatpush.msra.mxu0 %v3445
  %3474 = vmatpush.msra.mxu0 %v3444
  %3475 = vmatpush.msra.mxu0 %v3443
  %3476 = vmatpush.msra.mxu0 %v3442
  %3477 = vmatpush.msra.mxu0 %v3441
  %3478 = vmatmul.f32.gmra.mxu0 %v3457
  %v3479 = vpop.f32.mrf.mxu0
  %v3480 = vadd.f32 %v3460, %v3479
  %3481 = vdwg.mxu0
  %vm3482 = vcmask 1024
  %3483 = vst.msk [vmem:[%s17] sm:$0x3] %vm3482, %v3480
  // Predicated region
  $region70: #{tpu_custom_call.1} parent=0 // pred_check
    _
  $region71: #{tpu_custom_call.1} parent=0 // pred_check_branch
    %3485 = sbr.rel (0) target = $region73
  $region72: #{tpu_custom_call.1} parent=0 // pred_region
    _
  $region73: #{tpu_custom_call.1} parent=0 // pred_fallthru
    _
  // Predicated region
  $region74: #{tpu_custom_call.1} parent=0 // pred_check
    _
  $region75: #{tpu_custom_call.1} parent=0 // pred_check_branch
    %3487 = sbr.rel (0) target = $region77
  $region76: #{tpu_custom_call.1} parent=0 // pred_region
    _
  $region77: #{tpu_custom_call.1} parent=0 // pred_fallthru
    _

</llo_original>
